<compile_context>
chip_gen: v6e
topology: v6e:2x2x1
jax: 0.10.0
libtpu: 0.0.40
codegen_flags: <defaults>
</compile_context>

<pallas_src>
import functools

import numpy as np
import jax
import jax.numpy as jnp
from jax import lax
from jax.experimental import pallas as pl
from jax.experimental.pallas import tpu as pltpu


def _round_up(a: int, b: int) -> int:
    return (a + b - 1) // b * b


def _wrap_mod(v, n: int):
    """torch.remainder (floor-mod) semantics; power-of-two -> single VALU AND."""
    if n & (n - 1) == 0:
        return v & (n - 1)
    return v % n


def _coords_prep(xy_ref, H: int, W: int):
    """Shared coordinate prep.  xy_ref: [2, F, TN] (row 0 = x, row 1 = y)."""
    x = xy_ref[0] - 0.5                      # [F, TN]
    y = xy_ref[1] - 0.5
    x0f = jnp.floor(x)
    y0f = jnp.floor(y)
    xw = x - x0f                             # fractional weights (pre-mod)
    yw = y - y0f
    x0i = x0f.astype(jnp.int32)
    y0i = y0f.astype(jnp.int32)
    x0 = _wrap_mod(x0i, W)
    x1 = _wrap_mod(x0i + 1, W)
    y0 = _wrap_mod(y0i, H)
    y1 = _wrap_mod(y0i + 1, H)
    return x0, x1, y0, y1, xw, yw


# ---------------------------------------------------------------------------
# Primary kernel: separable masks + MXU contraction (O(H+W) per sample).
# ---------------------------------------------------------------------------
def noise_kernel_separable(image_ref, xy_ref, out_ref, *, H, W):
    """
    image_ref : [F, H, W]   full noise image (resident across grid steps)
    xy_ref    : [2, F, TN]  stacked coords (xy[0] = x, xy[1] = y)
    out_ref   : [F, TN]     interpolated values (lane-dense sample axis)
    """
    img = image_ref[...]                                             # [F, H, W]
    x0, x1, y0, y1, xw, yw = _coords_prep(xy_ref, H, W)              # each [F, TN]

    # Column mask: cx[f, w, n] = (w==x0)*(1-xw) + (w==x1)*xw
    w_iota = lax.broadcasted_iota(jnp.int32, (1, W, 1), 1)
    cx = jnp.where(x0[:, None, :] == w_iota, 1.0 - xw[:, None, :], 0.0)
    cx = cx + jnp.where(x1[:, None, :] == w_iota, xw[:, None, :], 0.0)   # [F, W, TN]

    # Row mask: ry[f, h, n] = (h==y0)*(1-yw) + (h==y1)*yw
    h_iota = lax.broadcasted_iota(jnp.int32, (1, H, 1), 1)
    ry = jnp.where(y0[:, None, :] == h_iota, 1.0 - yw[:, None, :], 0.0)
    ry = ry + jnp.where(y1[:, None, :] == h_iota, yw[:, None, :], 0.0)   # [F, H, TN]

    # MXU: tmp[f, h, n] = sum_w img[f, h, w] * cx[f, w, n]   (batched over F)
    tmp = lax.dot_general(
        img, cx,
        dimension_numbers=(((2,), (1,)), ((0,), (0,))),
        preferred_element_type=jnp.float32,
        precision=lax.Precision.HIGHEST,
    )                                                                # [F, H, TN]

    # Final row blend: small sublane reduction over H.
    out_ref[...] = jnp.sum(ry * tmp, axis=1).astype(out_ref.dtype)


# ---------------------------------------------------------------------------
# Fallback kernel: dense one-hot (known-good, exact f32, VPU/XLU only).
# ---------------------------------------------------------------------------
def noise_kernel_dense(image_ref, xy_ref, out_ref, *, H, W):
    """
    image_ref : [F, H*W]
    xy_ref    : [2, F, TN]
    out_ref   : [F, TN]
    """
    img = image_ref[...]                                             # [F, HW]
    x0, x1, y0, y1, xw, yw = _coords_prep(xy_ref, H, W)

    idx00 = y0 * W + x0
    idx01 = y0 * W + x1
    idx10 = y1 * W + x0
    idx11 = y1 * W + x1

    w00 = (1.0 - xw) * (1.0 - yw)
    w01 = xw * (1.0 - yw)
    w10 = (1.0 - xw) * yw
    w11 = xw * yw

    hw = H * W
    k = lax.broadcasted_iota(jnp.int32, (1, 1, hw), 2)
    wm = jnp.where(idx00[:, :, None] == k, w00[:, :, None], 0.0)
    wm = wm + jnp.where(idx01[:, :, None] == k, w01[:, :, None], 0.0)
    wm = wm + jnp.where(idx10[:, :, None] == k, w10[:, :, None], 0.0)
    wm = wm + jnp.where(idx11[:, :, None] == k, w11[:, :, None], 0.0)   # [F, TN, HW]

    out_ref[...] = jnp.sum(wm * img[:, None, :], axis=2).astype(out_ref.dtype)


# ---------------------------------------------------------------------------
# Wrapper
# ---------------------------------------------------------------------------
def _vmem_limit_bytes(F_, H, W, TN, separable):
    """Right-sized VMEM request from the actual per-step footprint."""
    Fp = _round_up(F_, 8)
    if separable:
        img = Fp * _round_up(H, 8) * _round_up(W, 128) * 4
        interm = Fp * (2 * H + W + 16) * TN * 4       # cx + ry + tmp + temps
    else:
        img = Fp * _round_up(H * W, 128) * 4
        interm = 2 * Fp * H * W * TN * 4 + 16 * Fp * TN * 4
    xy = 2 * Fp * TN * 4
    out = Fp * TN * 4
    total = img + 2 * (xy + out) + interm             # 2x: double-buffered I/O
    total = 2 * total + (1 << 20)                     # 2x headroom + 1 MiB slack
    return int(min(max(total, 4 << 20), 64 << 20))


def _noise_forward_impl(image, coords, *, separable):
    F_, H, W = image.shape
    lead = coords.shape[:-2]
    N = int(np.prod(lead)) if lead else 1

    # Stacked lane-dense coords: one input DMA stream, samples on the lane axis.
    xy = jnp.transpose(coords.reshape(N, F_, 2).astype(jnp.float32), (2, 1, 0))  # [2,F,N]

    # --- sample-tile sizing (lane-dense, multiple of 128) --------------------
    if separable:
        per_sample = F_ * (2 * H + W) * 4              # cx + ry + tmp (f32)
        budget = 4 << 20
    else:
        per_sample = 2 * F_ * H * W * 4                # dense mask + fused temp
        budget = 2 << 20
    tn_cap = (budget // max(per_sample, 1)) // 128 * 128
    tn_cap = max(128, min(2048, tn_cap))               # >=128 (limit covers footprint)
    n128 = _round_up(max(N, 1), 128)
    if n128 >= 256:
        # Ensure >= 2 grid steps so the "parallel" axis feeds both v7x TCs.
        tn_cap = min(tn_cap, max(128, (n128 // 2) // 128 * 128))
    TN = min(tn_cap, n128)
    N_pad = _round_up(max(N, 1), TN)
    if N_pad != N:
        xy = jnp.pad(xy, ((0, 0), (0, 0), (0, N_pad - N)))

    if separable:
        img_arg = image                                              # [F, H, W]
        img_spec = pl.BlockSpec((F_, H, W), lambda i: (0, 0, 0))
        kernel = functools.partial(noise_kernel_separable, H=H, W=W)
    else:
        img_arg = image.reshape(F_, H * W)                           # [F, HW]
        img_spec = pl.BlockSpec((F_, H * W), lambda i: (0, 0))
        kernel = functools.partial(noise_kernel_dense, H=H, W=W)

    out = pl.pallas_call(
        kernel,
        out_shape=jax.ShapeDtypeStruct((F_, N_pad), image.dtype),
        grid=(N_pad // TN,),
        in_specs=[
            img_spec,                                                # image: resident
            pl.BlockSpec((2, F_, TN), lambda i: (0, 0, i)),          # stacked coords
        ],
        out_specs=pl.BlockSpec((F_, TN), lambda i: (0, i)),
        compiler_params=pltpu.CompilerParams(
            dimension_semantics=("parallel",),
            vmem_limit_bytes=_vmem_limit_bytes(F_, H, W, TN, separable),
        ),
    )(img_arg, xy)

    out = out[:, :N].T                                               # [N, F]
    return out.reshape(*lead, F_)


_noise_forward_mxu = jax.jit(functools.partial(_noise_forward_impl, separable=True))
_noise_forward_dense = jax.jit(functools.partial(_noise_forward_impl, separable=False))


def noise_forward(image, coords):
    """Equivalent of Noise.forward: sample_bilinear(image, coords)."""
    try:
        return jax.block_until_ready(_noise_forward_mxu(image, coords))
    except Exception:
        # Lowering/compile fallback: exact dense one-hot path (VPU/XLU only).
        return jax.block_until_ready(_noise_forward_dense(image, coords))


# ---------------------------------------------------------------------------
# Pure-JAX reference (mirrors the PyTorch sample_bilinear)
# ---------------------------------------------------------------------------
def sample_bilinear_ref(image, coords):
    F_, H, W = image.shape
    x = coords[..., 0] - 0.5
    y = coords[..., 1] - 0.5
    x0 = jnp.floor(x).astype(jnp.int32)
    x1 = x0 + 1
    y0 = jnp.floor(y).astype(jnp.int32)
    y1 = y0 + 1
    xw = x - x0
    yw = y - y0
    x0 = x0 % W
    x1 = x1 % W
    y0 = y0 % H
    y1 = y1 % H
    f = jnp.arange(F_).reshape((1,) * (coords.ndim - 2) + (-1,))
    i00 = image[f, y0, x0]
    i01 = image[f, y0, x1]
    i10 = image[f, y1, x0]
    i11 = image[f, y1, x1]
    i0 = i00 + xw * (i01 - i00)
    i1 = i10 + xw * (i11 - i10)
    return i0 + yw * (i1 - i0)


if __name__ == "__main__":
    features = 4
    resolution = 16
    batch, n_pts = 2, 8

    key = jax.random.PRNGKey(0)
    k_img, k_coords = jax.random.split(key)

    # Deterministic "parameter": the noise image (torch.randn equivalent).
    image = jax.random.normal(k_img, (features, resolution, resolution),
                              dtype=jnp.float32)
    # Coordinates in [-2, resolution + 2) to exercise the wrap-around modulo.
    coords = jax.random.uniform(
        k_coords, (batch, n_pts, features, 2),
        minval=-2.0, maxval=float(resolution) + 2.0, dtype=jnp.float32)

    out = noise_forward(image, coords)
    out = jax.block_until_ready(out)

    ref = sample_bilinear_ref(image, coords)
    np.testing.assert_allclose(np.asarray(out), np.asarray(ref),
                               rtol=1e-4, atol=1e-4)
    assert out.shape == (batch, n_pts, features)

    print("KERNEL_OK")
</pallas_src>

<mosaic_0001>
module attributes {stable_mosaic.version = 11 : i64} {
  func.func @noise_kernel_separable(%arg0: i32, %arg1: memref<4x16x16xf32, #tpu.memory_space<vmem>>, %arg2: memref<2x4x128xf32, #tpu.memory_space<vmem>>, %arg3: memref<4x128xf32, #tpu.memory_space<vmem>>) attributes {dimension_semantics = [#tpu.dimension_semantics<parallel>], iteration_bounds = array<i64: 1>, scalar_prefetch = 0 : i64, scratch_operands = 0 : i64, tpu.core_type = #tpu.core_type<tc>, window_params = [{pipeline_mode = #tpu.pipeline_mode<synchronous>, transform_indices = @transform_0, window_bounds = array<i64: 4, 16, 16>}, {transform_indices = @transform_1, window_bounds = array<i64: 2, 4, 128>}, {transform_indices = @transform_2, window_bounds = array<i64: 4, 128>}]} {
    %c0 = arith.constant 0 : index
    %c0_0 = arith.constant 0 : index
    %c0_1 = arith.constant 0 : index
    %0 = vector.load %arg1[%c0, %c0_0, %c0_1] : memref<4x16x16xf32, #tpu.memory_space<vmem>>, vector<4x16x16xf32>
    %c0_2 = arith.constant 0 : index
    %c0_3 = arith.constant 0 : index
    %c0_4 = arith.constant 0 : index
    %1 = vector.load %arg2[%c0_2, %c0_3, %c0_4] : memref<2x4x128xf32, #tpu.memory_space<vmem>>, vector<1x4x128xf32>
    %2 = vector.shape_cast %1 : vector<1x4x128xf32> to vector<4x128xf32>
    %cst = arith.constant 5.000000e-01 : f32
    %3 = vector.broadcast %cst : f32 to vector<4x128xf32>
    %4 = arith.subf %2, %3 : vector<4x128xf32>
    %c1 = arith.constant 1 : index
    %c0_5 = arith.constant 0 : index
    %c0_6 = arith.constant 0 : index
    %5 = vector.load %arg2[%c1, %c0_5, %c0_6] : memref<2x4x128xf32, #tpu.memory_space<vmem>>, vector<1x4x128xf32>
    %6 = vector.shape_cast %5 : vector<1x4x128xf32> to vector<4x128xf32>
    %cst_7 = arith.constant 5.000000e-01 : f32
    %7 = vector.broadcast %cst_7 : f32 to vector<4x128xf32>
    %8 = arith.subf %6, %7 : vector<4x128xf32>
    %9 = math.floor %4 : vector<4x128xf32>
    %10 = math.floor %8 : vector<4x128xf32>
    %11 = arith.subf %4, %9 : vector<4x128xf32>
    %12 = arith.subf %8, %10 : vector<4x128xf32>
    %13 = arith.fptosi %9 : vector<4x128xf32> to vector<4x128xi32>
    %14 = arith.fptosi %10 : vector<4x128xf32> to vector<4x128xi32>
    %c15_i32 = arith.constant 15 : i32
    %15 = vector.broadcast %c15_i32 : i32 to vector<4x128xi32>
    %16 = arith.andi %13, %15 : vector<4x128xi32>
    %c1_i32 = arith.constant 1 : i32
    %17 = vector.broadcast %c1_i32 : i32 to vector<4x128xi32>
    %18 = arith.addi %13, %17 : vector<4x128xi32>
    %c15_i32_8 = arith.constant 15 : i32
    %19 = vector.broadcast %c15_i32_8 : i32 to vector<4x128xi32>
    %20 = arith.andi %18, %19 : vector<4x128xi32>
    %c15_i32_9 = arith.constant 15 : i32
    %21 = vector.broadcast %c15_i32_9 : i32 to vector<4x128xi32>
    %22 = arith.andi %14, %21 : vector<4x128xi32>
    %c1_i32_10 = arith.constant 1 : i32
    %23 = vector.broadcast %c1_i32_10 : i32 to vector<4x128xi32>
    %24 = arith.addi %14, %23 : vector<4x128xi32>
    %c15_i32_11 = arith.constant 15 : i32
    %25 = vector.broadcast %c15_i32_11 : i32 to vector<4x128xi32>
    %26 = arith.andi %24, %25 : vector<4x128xi32>
    %27 = tpu.iota {dimensions = array<i32: 1>} : vector<1x16x1xi32>
    %28 = vector.shape_cast %16 : vector<4x128xi32> to vector<4x1x128xi32>
    %29 = vector.broadcast %28 : vector<4x1x128xi32> to vector<4x16x128xi32>
    %30 = vector.broadcast %27 : vector<1x16x1xi32> to vector<4x16x128xi32>
    %31 = arith.cmpi eq, %29, %30 : vector<4x16x128xi32>
    %32 = vector.shape_cast %11 : vector<4x128xf32> to vector<4x1x128xf32>
    %cst_12 = arith.constant 1.000000e+00 : f32
    %33 = vector.broadcast %cst_12 : f32 to vector<4x1x128xf32>
    %34 = arith.subf %33, %32 : vector<4x1x128xf32>
    %cst_13 = arith.constant 0.000000e+00 : f32
    %35 = vector.shape_cast %34 : vector<4x1x128xf32> to vector<4x1x128xf32>
    %36 = vector.broadcast %35 : vector<4x1x128xf32> to vector<4x16x128xf32>
    %37 = vector.broadcast %cst_13 : f32 to vector<4x16x128xf32>
    %38 = arith.select %31, %36, %37 : vector<4x16x128xi1>, vector<4x16x128xf32>
    %39 = vector.shape_cast %20 : vector<4x128xi32> to vector<4x1x128xi32>
    %40 = vector.broadcast %39 : vector<4x1x128xi32> to vector<4x16x128xi32>
    %41 = vector.broadcast %27 : vector<1x16x1xi32> to vector<4x16x128xi32>
    %42 = arith.cmpi eq, %40, %41 : vector<4x16x128xi32>
    %43 = vector.shape_cast %11 : vector<4x128xf32> to vector<4x1x128xf32>
    %cst_14 = arith.constant 0.000000e+00 : f32
    %44 = vector.shape_cast %43 : vector<4x1x128xf32> to vector<4x1x128xf32>
    %45 = vector.broadcast %44 : vector<4x1x128xf32> to vector<4x16x128xf32>
    %46 = vector.broadcast %cst_14 : f32 to vector<4x16x128xf32>
    %47 = arith.select %42, %45, %46 : vector<4x16x128xi1>, vector<4x16x128xf32>
    %48 = arith.addf %38, %47 : vector<4x16x128xf32>
    %49 = tpu.iota {dimensions = array<i32: 1>} : vector<1x16x1xi32>
    %50 = vector.shape_cast %22 : vector<4x128xi32> to vector<4x1x128xi32>
    %51 = vector.broadcast %50 : vector<4x1x128xi32> to vector<4x16x128xi32>
    %52 = vector.broadcast %49 : vector<1x16x1xi32> to vector<4x16x128xi32>
    %53 = arith.cmpi eq, %51, %52 : vector<4x16x128xi32>
    %54 = vector.shape_cast %12 : vector<4x128xf32> to vector<4x1x128xf32>
    %cst_15 = arith.constant 1.000000e+00 : f32
    %55 = vector.broadcast %cst_15 : f32 to vector<4x1x128xf32>
    %56 = arith.subf %55, %54 : vector<4x1x128xf32>
    %cst_16 = arith.constant 0.000000e+00 : f32
    %57 = vector.shape_cast %56 : vector<4x1x128xf32> to vector<4x1x128xf32>
    %58 = vector.broadcast %57 : vector<4x1x128xf32> to vector<4x16x128xf32>
    %59 = vector.broadcast %cst_16 : f32 to vector<4x16x128xf32>
    %60 = arith.select %53, %58, %59 : vector<4x16x128xi1>, vector<4x16x128xf32>
    %61 = vector.shape_cast %26 : vector<4x128xi32> to vector<4x1x128xi32>
    %62 = vector.broadcast %61 : vector<4x1x128xi32> to vector<4x16x128xi32>
    %63 = vector.broadcast %49 : vector<1x16x1xi32> to vector<4x16x128xi32>
    %64 = arith.cmpi eq, %62, %63 : vector<4x16x128xi32>
    %65 = vector.shape_cast %12 : vector<4x128xf32> to vector<4x1x128xf32>
    %cst_17 = arith.constant 0.000000e+00 : f32
    %66 = vector.shape_cast %65 : vector<4x1x128xf32> to vector<4x1x128xf32>
    %67 = vector.broadcast %66 : vector<4x1x128xf32> to vector<4x16x128xf32>
    %68 = vector.broadcast %cst_17 : f32 to vector<4x16x128xf32>
    %69 = arith.select %64, %67, %68 : vector<4x16x128xi1>, vector<4x16x128xf32>
    %70 = arith.addf %60, %69 : vector<4x16x128xf32>
    %cst_18 = arith.constant dense<0.000000e+00> : vector<4x16x128xf32>
    %71 = tpu.matmul %0, %48, %cst_18 {dimension_numbers = #tpu.dot_dimension_numbers<[2], [1], [1], [2], [0, 0, 0, 1, 1, 2], [0], [0]>, precision = #tpu.contract_precision<fp32>} : vector<4x16x16xf32>, vector<4x16x128xf32>, vector<4x16x128xf32> -> vector<4x16x128xf32>
    %72 = arith.mulf %70, %71 : vector<4x16x128xf32>
    %cst_19 = arith.constant dense<0.000000e+00> : vector<4x128xf32>
    %73 = vector.multi_reduction <add>, %72, %cst_19 [1] : vector<4x16x128xf32> to vector<4x128xf32>
    %c0_20 = arith.constant 0 : index
    %c0_21 = arith.constant 0 : index
    %74 = vector.load %arg3[%c0_20, %c0_21] : memref<4x128xf32, #tpu.memory_space<vmem>>, vector<4x128xf32>
    tpu.vector_store %arg3[%c0_20, %c0_21], %73 {strides = array<i32>} : memref<4x128xf32, #tpu.memory_space<vmem>>, vector<4x128xf32>,
    return
  }
  func.func @transform_0(%arg0: i32) -> (i32, i32, i32) {
    %c0_i32 = arith.constant 0 : i32
    %c0_i32_0 = arith.constant 0 : i32
    %c0_i32_1 = arith.constant 0 : i32
    %c0_i32_2 = arith.constant 0 : i32
    return %c0_i32, %c0_i32_0, %c0_i32_1 : i32, i32, i32
  }
  func.func @transform_1(%arg0: i32) -> (i32, i32, i32) {
    %c0_i32 = arith.constant 0 : i32
    %c0_i32_0 = arith.constant 0 : i32
    %c0_i32_1 = arith.constant 0 : i32
    return %c0_i32, %c0_i32_0, %arg0 : i32, i32, i32
  }
  func.func @transform_2(%arg0: i32) -> (i32, i32) {
    %c0_i32 = arith.constant 0 : i32
    %c0_i32_0 = arith.constant 0 : i32
    return %c0_i32, %arg0 : i32, i32
  }
}

module attributes {stable_mosaic.version = 11 : i64} {
  func.func @noise_kernel_dense(%arg0: i32, %arg1: memref<4x256xf32, #tpu.memory_space<vmem>>, %arg2: memref<2x4x128xf32, #tpu.memory_space<vmem>>, %arg3: memref<4x128xf32, #tpu.memory_space<vmem>>) attributes {dimension_semantics = [#tpu.dimension_semantics<parallel>], iteration_bounds = array<i64: 1>, scalar_prefetch = 0 : i64, scratch_operands = 0 : i64, tpu.core_type = #tpu.core_type<tc>, window_params = [{pipeline_mode = #tpu.pipeline_mode<synchronous>, transform_indices = @transform_0, window_bounds = array<i64: 4, 256>}, {transform_indices = @transform_1, window_bounds = array<i64: 2, 4, 128>}, {transform_indices = @transform_2, window_bounds = array<i64: 4, 128>}]} {
    %c0 = arith.constant 0 : index
    %c0_0 = arith.constant 0 : index
    %0 = vector.load %arg1[%c0, %c0_0] : memref<4x256xf32, #tpu.memory_space<vmem>>, vector<4x256xf32>
    %c0_1 = arith.constant 0 : index
    %c0_2 = arith.constant 0 : index
    %c0_3 = arith.constant 0 : index
    %1 = vector.load %arg2[%c0_1, %c0_2, %c0_3] : memref<2x4x128xf32, #tpu.memory_space<vmem>>, vector<1x4x128xf32>
    %2 = vector.shape_cast %1 : vector<1x4x128xf32> to vector<4x128xf32>
    %cst = arith.constant 5.000000e-01 : f32
    %3 = vector.broadcast %cst : f32 to vector<4x128xf32>
    %4 = arith.subf %2, %3 : vector<4x128xf32>
    %c1 = arith.constant 1 : index
    %c0_4 = arith.constant 0 : index
    %c0_5 = arith.constant 0 : index
    %5 = vector.load %arg2[%c1, %c0_4, %c0_5] : memref<2x4x128xf32, #tpu.memory_space<vmem>>, vector<1x4x128xf32>
    %6 = vector.shape_cast %5 : vector<1x4x128xf32> to vector<4x128xf32>
    %cst_6 = arith.constant 5.000000e-01 : f32
    %7 = vector.broadcast %cst_6 : f32 to vector<4x128xf32>
    %8 = arith.subf %6, %7 : vector<4x128xf32>
    %9 = math.floor %4 : vector<4x128xf32>
    %10 = math.floor %8 : vector<4x128xf32>
    %11 = arith.subf %4, %9 : vector<4x128xf32>
    %12 = arith.subf %8, %10 : vector<4x128xf32>
    %13 = arith.fptosi %9 : vector<4x128xf32> to vector<4x128xi32>
    %14 = arith.fptosi %10 : vector<4x128xf32> to vector<4x128xi32>
    %c15_i32 = arith.constant 15 : i32
    %15 = vector.broadcast %c15_i32 : i32 to vector<4x128xi32>
    %16 = arith.andi %13, %15 : vector<4x128xi32>
    %c1_i32 = arith.constant 1 : i32
    %17 = vector.broadcast %c1_i32 : i32 to vector<4x128xi32>
    %18 = arith.addi %13, %17 : vector<4x128xi32>
    %c15_i32_7 = arith.constant 15 : i32
    %19 = vector.broadcast %c15_i32_7 : i32 to vector<4x128xi32>
    %20 = arith.andi %18, %19 : vector<4x128xi32>
    %c15_i32_8 = arith.constant 15 : i32
    %21 = vector.broadcast %c15_i32_8 : i32 to vector<4x128xi32>
    %22 = arith.andi %14, %21 : vector<4x128xi32>
    %c1_i32_9 = arith.constant 1 : i32
    %23 = vector.broadcast %c1_i32_9 : i32 to vector<4x128xi32>
    %24 = arith.addi %14, %23 : vector<4x128xi32>
    %c15_i32_10 = arith.constant 15 : i32
    %25 = vector.broadcast %c15_i32_10 : i32 to vector<4x128xi32>
    %26 = arith.andi %24, %25 : vector<4x128xi32>
    %c16_i32 = arith.constant 16 : i32
    %27 = vector.broadcast %c16_i32 : i32 to vector<4x128xi32>
    %28 = arith.muli %22, %27 : vector<4x128xi32>
    %29 = arith.addi %28, %16 : vector<4x128xi32>
    %c16_i32_11 = arith.constant 16 : i32
    %30 = vector.broadcast %c16_i32_11 : i32 to vector<4x128xi32>
    %31 = arith.muli %22, %30 : vector<4x128xi32>
    %32 = arith.addi %31, %20 : vector<4x128xi32>
    %c16_i32_12 = arith.constant 16 : i32
    %33 = vector.broadcast %c16_i32_12 : i32 to vector<4x128xi32>
    %34 = arith.muli %26, %33 : vector<4x128xi32>
    %35 = arith.addi %34, %16 : vector<4x128xi32>
    %c16_i32_13 = arith.constant 16 : i32
    %36 = vector.broadcast %c16_i32_13 : i32 to vector<4x128xi32>
    %37 = arith.muli %26, %36 : vector<4x128xi32>
    %38 = arith.addi %37, %20 : vector<4x128xi32>
    %cst_14 = arith.constant 1.000000e+00 : f32
    %39 = vector.broadcast %cst_14 : f32 to vector<4x128xf32>
    %40 = arith.subf %39, %11 : vector<4x128xf32>
    %cst_15 = arith.constant 1.000000e+00 : f32
    %41 = vector.broadcast %cst_15 : f32 to vector<4x128xf32>
    %42 = arith.subf %41, %12 : vector<4x128xf32>
    %43 = arith.mulf %40, %42 : vector<4x128xf32>
    %cst_16 = arith.constant 1.000000e+00 : f32
    %44 = vector.broadcast %cst_16 : f32 to vector<4x128xf32>
    %45 = arith.subf %44, %12 : vector<4x128xf32>
    %46 = arith.mulf %11, %45 : vector<4x128xf32>
    %cst_17 = arith.constant 1.000000e+00 : f32
    %47 = vector.broadcast %cst_17 : f32 to vector<4x128xf32>
    %48 = arith.subf %47, %11 : vector<4x128xf32>
    %49 = arith.mulf %48, %12 : vector<4x128xf32>
    %50 = arith.mulf %11, %12 : vector<4x128xf32>
    %51 = tpu.iota {dimensions = array<i32: 2>} : vector<1x1x256xi32>
    %52 = vector.shape_cast %29 : vector<4x128xi32> to vector<4x128x1xi32>
    %53 = vector.broadcast %52 : vector<4x128x1xi32> to vector<4x128x256xi32>
    %54 = vector.broadcast %51 : vector<1x1x256xi32> to vector<4x128x256xi32>
    %55 = arith.cmpi eq, %53, %54 : vector<4x128x256xi32>
    %56 = vector.shape_cast %43 : vector<4x128xf32> to vector<4x128x1xf32>
    %cst_18 = arith.constant 0.000000e+00 : f32
    %57 = vector.shape_cast %56 : vector<4x128x1xf32> to vector<4x128x1xf32>
    %58 = vector.broadcast %57 : vector<4x128x1xf32> to vector<4x128x256xf32>
    %59 = vector.broadcast %cst_18 : f32 to vector<4x128x256xf32>
    %60 = arith.select %55, %58, %59 : vector<4x128x256xi1>, vector<4x128x256xf32>
    %61 = vector.shape_cast %32 : vector<4x128xi32> to vector<4x128x1xi32>
    %62 = vector.broadcast %61 : vector<4x128x1xi32> to vector<4x128x256xi32>
    %63 = vector.broadcast %51 : vector<1x1x256xi32> to vector<4x128x256xi32>
    %64 = arith.cmpi eq, %62, %63 : vector<4x128x256xi32>
    %65 = vector.shape_cast %46 : vector<4x128xf32> to vector<4x128x1xf32>
    %cst_19 = arith.constant 0.000000e+00 : f32
    %66 = vector.shape_cast %65 : vector<4x128x1xf32> to vector<4x128x1xf32>
    %67 = vector.broadcast %66 : vector<4x128x1xf32> to vector<4x128x256xf32>
    %68 = vector.broadcast %cst_19 : f32 to vector<4x128x256xf32>
    %69 = arith.select %64, %67, %68 : vector<4x128x256xi1>, vector<4x128x256xf32>
    %70 = arith.addf %60, %69 : vector<4x128x256xf32>
    %71 = vector.shape_cast %35 : vector<4x128xi32> to vector<4x128x1xi32>
    %72 = vector.broadcast %71 : vector<4x128x1xi32> to vector<4x128x256xi32>
    %73 = vector.broadcast %51 : vector<1x1x256xi32> to vector<4x128x256xi32>
    %74 = arith.cmpi eq, %72, %73 : vector<4x128x256xi32>
    %75 = vector.shape_cast %49 : vector<4x128xf32> to vector<4x128x1xf32>
    %cst_20 = arith.constant 0.000000e+00 : f32
    %76 = vector.shape_cast %75 : vector<4x128x1xf32> to vector<4x128x1xf32>
    %77 = vector.broadcast %76 : vector<4x128x1xf32> to vector<4x128x256xf32>
    %78 = vector.broadcast %cst_20 : f32 to vector<4x128x256xf32>
    %79 = arith.select %74, %77, %78 : vector<4x128x256xi1>, vector<4x128x256xf32>
    %80 = arith.addf %70, %79 : vector<4x128x256xf32>
    %81 = vector.shape_cast %38 : vector<4x128xi32> to vector<4x128x1xi32>
    %82 = vector.broadcast %81 : vector<4x128x1xi32> to vector<4x128x256xi32>
    %83 = vector.broadcast %51 : vector<1x1x256xi32> to vector<4x128x256xi32>
    %84 = arith.cmpi eq, %82, %83 : vector<4x128x256xi32>
    %85 = vector.shape_cast %50 : vector<4x128xf32> to vector<4x128x1xf32>
    %cst_21 = arith.constant 0.000000e+00 : f32
    %86 = vector.shape_cast %85 : vector<4x128x1xf32> to vector<4x128x1xf32>
    %87 = vector.broadcast %86 : vector<4x128x1xf32> to vector<4x128x256xf32>
    %88 = vector.broadcast %cst_21 : f32 to vector<4x128x256xf32>
    %89 = arith.select %84, %87, %88 : vector<4x128x256xi1>, vector<4x128x256xf32>
    %90 = arith.addf %80, %89 : vector<4x128x256xf32>
    %91 = vector.shape_cast %0 : vector<4x256xf32> to vector<4x1x256xf32>
    %92 = vector.broadcast %91 : vector<4x1x256xf32> to vector<4x128x256xf32>
    %93 = arith.mulf %90, %92 : vector<4x128x256xf32>
    %cst_22 = arith.constant dense<0.000000e+00> : vector<4x128xf32>
    %94 = vector.multi_reduction <add>, %93, %cst_22 [2] : vector<4x128x256xf32> to vector<4x128xf32>
    %c0_23 = arith.constant 0 : index
    %c0_24 = arith.constant 0 : index
    %95 = vector.load %arg3[%c0_23, %c0_24] : memref<4x128xf32, #tpu.memory_space<vmem>>, vector<4x128xf32>
    tpu.vector_store %arg3[%c0_23, %c0_24], %94 {strides = array<i32>} : memref<4x128xf32, #tpu.memory_space<vmem>>, vector<4x128xf32>,
    return
  }
  func.func @transform_0(%arg0: i32) -> (i32, i32) {
    %c0_i32 = arith.constant 0 : i32
    %c0_i32_0 = arith.constant 0 : i32
    %c0_i32_1 = arith.constant 0 : i32
    return %c0_i32, %c0_i32_0 : i32, i32
  }
  func.func @transform_1(%arg0: i32) -> (i32, i32, i32) {
    %c0_i32 = arith.constant 0 : i32
    %c0_i32_0 = arith.constant 0 : i32
    %c0_i32_1 = arith.constant 0 : i32
    return %c0_i32, %c0_i32_0, %arg0 : i32, i32, i32
  }
  func.func @transform_2(%arg0: i32) -> (i32, i32) {
    %c0_i32 = arith.constant 0 : i32
    %c0_i32_0 = arith.constant 0 : i32
    return %c0_i32, %arg0 : i32, i32
  }
}

</mosaic_0001>

<llo_original>
// kernel: _noise_forward_impl.1
$region0: #{_noise_forward_impl.1}
  #allocation0 [shape = 'u32[]', space=smem, size = 0x4, offset = 0x4, fixed_abs, tag = 'smem constant byte address 0x4 - core index']
  #allocation1 [shape = 'u32[144,128]{1,0:T(1,128)}', space=vmem, size = 0x12000, scoped, tag = 'internal scratch']
  %s0 = inlined_call_operand.vmem [shape: f32[4,16,16], index: 0, kind: input, shape index: {}]
  %s1 = inlined_call_operand.vmem [shape: f32[2,4,128], index: 1, kind: input, shape index: {}]
  %s2 = inlined_call_operand.vmem [shape: f32[4,128], index: 2, kind: output, shape index: {}]
  %s3 = sld [smem:[#allocation0]]
  $region18: #{_noise_forward_impl.1} parent=0
    _
  %s5 = ssub.s32 1, %s3
  %s6 = scalar_select 0, %s5, %s3
  // Predicated region
  $region2: #{_noise_forward_impl.1} parent=0 // pred_check
    _
  $region3: #{_noise_forward_impl.1} parent=0 // pred_check_branch
    %8 = sbr.rel (0) target = $region5
  $region4: #{_noise_forward_impl.1} parent=0 // pred_region
    _
  $region5: #{_noise_forward_impl.1} parent=0 // pred_fallthru
    _
  // Predicated region
  $region6: #{_noise_forward_impl.1} parent=0 // pred_check
    _
  $region7: #{_noise_forward_impl.1} parent=0 // pred_check_branch
    %10 = sbr.rel (0) target = $region9
  $region8: #{_noise_forward_impl.1} parent=0 // pred_region
    _
  $region9: #{_noise_forward_impl.1} parent=0 // pred_fallthru
    _
  %v11 = vld [vmem:[%s0] sm:$0xff]
  %v12 = vld [vmem:[%s0 + $0x8] sm:$0xff]
  %v13 = vld [vmem:[%s0 + $0x10] sm:$0xff]
  %v14 = vld [vmem:[%s0 + $0x18] sm:$0xff]
  %v15 = vld [vmem:[%s0 + $0x20] sm:$0xff]
  %v16 = vld [vmem:[%s0 + $0x28] sm:$0xff]
  %v17 = vld [vmem:[%s0 + $0x30] sm:$0xff]
  %v18 = vld [vmem:[%s0 + $0x38] sm:$0xff]
  %v19 = vld [vmem:[%s1] sm:$0xf]
  %v20 = vsub.f32 %v19, 0.5
  %s21 = scalar_lea.vmem %s1, 4
  %v22 = vld [vmem:[%s21] sm:$0xf]
  %v23 = vsub.f32 %v22, 0.5
  %v24 = vfloor.f32 %v20
  %v25 = vfloor.f32 %v23
  %v26 = vsub.f32 %v20, %v24
  %v27 = vsub.f32 %v23, %v25
  %v28 = vcvt.f32.s32.to.zero.pseudo %v24
  %v29 = vcvt.f32.s32.to.zero.pseudo %v25
  %v30 = vand.u32 %v28, 15
  %v31 = vadd.s32 %v28, 1
  %v32 = vand.u32 %v31, 15
  %v33 = vand.u32 %v29, 15
  %v34 = vadd.s32 %v29, 1
  %v35 = vand.u32 %v34, 15
  %v36 = vlaneseq
  %v37 = vshrl.u32 %v36, 7
  %v38 = vadd.s32 %v37, 8
  %v40 = vunpack.c.l.s4 1966171168
  %v41 = vunpack.c.0.s8 %v40
  %v42 = vlaneseq
  %v43 = vshrl.u32 %v42, 7
  %v44 = vsub.s32 %v41, %v43
  %v45 = vrot.slane %v30, %v44
  %v46 = vcombine.high %v45, %v45
  %v48 = vunpack.c.l.s4 1966171168
  %v49 = vunpack.c.0.s8 %v48
  %v50 = vlaneseq
  %v51 = vshrl.u32 %v50, 7
  %v52 = vsub.s32 %v49, %v51
  %v53 = vrot.slane %v45, %v52
  %v55 = vunpack.c.l.s4 1966171168
  %v56 = vunpack.c.0.s8 %v55
  %v57 = vlaneseq
  %v58 = vshrl.u32 %v57, 7
  %v59 = vsub.s32 %v56, %v58
  %v60 = vrot.slane %v46, %v59
  %v61 = vcombine.high %v53, %v53
  %v62 = vcombine.high %v60, %v60
  %v63 = vlaneseq
  %v64 = vshrl.u32 %v63, 7
  %v65 = vsub.s32 0, %v64
  %v66 = vrot.slane %v53, %v65
  %v67 = vlaneseq
  %v68 = vshrl.u32 %v67, 7
  %v69 = vsub.s32 0, %v68
  %v70 = vrot.slane %v60, %v69
  %v71 = vlaneseq
  %v72 = vshrl.u32 %v71, 7
  %v73 = vsub.s32 0, %v72
  %v74 = vrot.slane %v61, %v73
  %v75 = vlaneseq
  %v76 = vshrl.u32 %v75, 7
  %v77 = vsub.s32 0, %v76
  %v78 = vrot.slane %v62, %v77
  %vm79 = vcmp.eq.s32.totalorder %v66, %v37
  %vm80 = vcmp.eq.s32.totalorder %v66, %v38
  %vm81 = vcmp.eq.s32.totalorder %v70, %v37
  %vm82 = vcmp.eq.s32.totalorder %v70, %v38
  %vm83 = vcmp.eq.s32.totalorder %v74, %v37
  %vm84 = vcmp.eq.s32.totalorder %v74, %v38
  %vm85 = vcmp.eq.s32.totalorder %v78, %v37
  %vm86 = vcmp.eq.s32.totalorder %v78, %v38
  %v89 = vunpack.c.l.s4 1966171168
  %v90 = vunpack.c.0.s8 %v89
  %v91 = vlaneseq
  %v92 = vshrl.u32 %v91, 7
  %v93 = vsub.s32 %v90, %v92
  %v94 = vrot.slane %v26, %v93
  %v95 = vcombine.high %v94, %v94
  %v97 = vunpack.c.l.s4 1966171168
  %v98 = vunpack.c.0.s8 %v97
  %v99 = vlaneseq
  %v100 = vshrl.u32 %v99, 7
  %v101 = vsub.s32 %v98, %v100
  %v102 = vrot.slane %v94, %v101
  %v104 = vunpack.c.l.s4 1966171168
  %v105 = vunpack.c.0.s8 %v104
  %v106 = vlaneseq
  %v107 = vshrl.u32 %v106, 7
  %v108 = vsub.s32 %v105, %v107
  %v109 = vrot.slane %v95, %v108
  %v110 = vcombine.high %v102, %v102
  %v111 = vcombine.high %v109, %v109
  %v116 = vsub.f32 1.0, %v102
  %v117 = vsub.f32 1.0, %v109
  %v118 = vsub.f32 1.0, %v110
  %v119 = vsub.f32 1.0, %v111
  %v124 = vlaneseq
  %v125 = vshrl.u32 %v124, 7
  %v126 = vsub.s32 0, %v125
  %v127 = vrot.slane %v116, %v126
  %v128 = vlaneseq
  %v129 = vshrl.u32 %v128, 7
  %v130 = vsub.s32 0, %v129
  %v131 = vrot.slane %v117, %v130
  %v132 = vlaneseq
  %v133 = vshrl.u32 %v132, 7
  %v134 = vsub.s32 0, %v133
  %v135 = vrot.slane %v118, %v134
  %v136 = vlaneseq
  %v137 = vshrl.u32 %v136, 7
  %v138 = vsub.s32 0, %v137
  %v139 = vrot.slane %v119, %v138
  %v144 = vsel %vm79, %v127, 0.0
  %v145 = vsel %vm80, %v127, 0.0
  %v146 = vsel %vm81, %v131, 0.0
  %v147 = vsel %vm82, %v131, 0.0
  %v148 = vsel %vm83, %v135, 0.0
  %v149 = vsel %vm84, %v135, 0.0
  %v150 = vsel %vm85, %v139, 0.0
  %v151 = vsel %vm86, %v139, 0.0
  %v153 = vunpack.c.l.s4 1966171168
  %v154 = vunpack.c.0.s8 %v153
  %v155 = vlaneseq
  %v156 = vshrl.u32 %v155, 7
  %v157 = vsub.s32 %v154, %v156
  %v158 = vrot.slane %v32, %v157
  %v159 = vcombine.high %v158, %v158
  %v161 = vunpack.c.l.s4 1966171168
  %v162 = vunpack.c.0.s8 %v161
  %v163 = vlaneseq
  %v164 = vshrl.u32 %v163, 7
  %v165 = vsub.s32 %v162, %v164
  %v166 = vrot.slane %v158, %v165
  %v168 = vunpack.c.l.s4 1966171168
  %v169 = vunpack.c.0.s8 %v168
  %v170 = vlaneseq
  %v171 = vshrl.u32 %v170, 7
  %v172 = vsub.s32 %v169, %v171
  %v173 = vrot.slane %v159, %v172
  %v174 = vcombine.high %v166, %v166
  %v175 = vcombine.high %v173, %v173
  %v176 = vlaneseq
  %v177 = vshrl.u32 %v176, 7
  %v178 = vsub.s32 0, %v177
  %v179 = vrot.slane %v166, %v178
  %v180 = vlaneseq
  %v181 = vshrl.u32 %v180, 7
  %v182 = vsub.s32 0, %v181
  %v183 = vrot.slane %v173, %v182
  %v184 = vlaneseq
  %v185 = vshrl.u32 %v184, 7
  %v186 = vsub.s32 0, %v185
  %v187 = vrot.slane %v174, %v186
  %v188 = vlaneseq
  %v189 = vshrl.u32 %v188, 7
  %v190 = vsub.s32 0, %v189
  %v191 = vrot.slane %v175, %v190
  %vm192 = vcmp.eq.s32.totalorder %v179, %v37
  %vm193 = vcmp.eq.s32.totalorder %v179, %v38
  %vm194 = vcmp.eq.s32.totalorder %v183, %v37
  %vm195 = vcmp.eq.s32.totalorder %v183, %v38
  %vm196 = vcmp.eq.s32.totalorder %v187, %v37
  %vm197 = vcmp.eq.s32.totalorder %v187, %v38
  %vm198 = vcmp.eq.s32.totalorder %v191, %v37
  %vm199 = vcmp.eq.s32.totalorder %v191, %v38
  %v200 = vlaneseq
  %v201 = vshrl.u32 %v200, 7
  %v202 = vsub.s32 0, %v201
  %v203 = vrot.slane %v102, %v202
  %v204 = vlaneseq
  %v205 = vshrl.u32 %v204, 7
  %v206 = vsub.s32 0, %v205
  %v207 = vrot.slane %v109, %v206
  %v208 = vlaneseq
  %v209 = vshrl.u32 %v208, 7
  %v210 = vsub.s32 0, %v209
  %v211 = vrot.slane %v110, %v210
  %v212 = vlaneseq
  %v213 = vshrl.u32 %v212, 7
  %v214 = vsub.s32 0, %v213
  %v215 = vrot.slane %v111, %v214
  %v220 = vsel %vm192, %v203, 0.0
  %v221 = vsel %vm193, %v203, 0.0
  %v222 = vsel %vm194, %v207, 0.0
  %v223 = vsel %vm195, %v207, 0.0
  %v224 = vsel %vm196, %v211, 0.0
  %v225 = vsel %vm197, %v211, 0.0
  %v226 = vsel %vm198, %v215, 0.0
  %v227 = vsel %vm199, %v215, 0.0
  %v228 = vadd.f32 %v144, %v220
  %v229 = vadd.f32 %v145, %v221
  %v230 = vadd.f32 %v146, %v222
  %v231 = vadd.f32 %v147, %v223
  %v232 = vadd.f32 %v148, %v224
  %v233 = vadd.f32 %v149, %v225
  %v234 = vadd.f32 %v150, %v226
  %v235 = vadd.f32 %v151, %v227
  %v237 = vunpack.c.l.s4 1966171168
  %v238 = vunpack.c.0.s8 %v237
  %v239 = vlaneseq
  %v240 = vshrl.u32 %v239, 7
  %v241 = vsub.s32 %v238, %v240
  %v242 = vrot.slane %v33, %v241
  %v243 = vcombine.high %v242, %v242
  %v245 = vunpack.c.l.s4 1966171168
  %v246 = vunpack.c.0.s8 %v245
  %v247 = vlaneseq
  %v248 = vshrl.u32 %v247, 7
  %v249 = vsub.s32 %v246, %v248
  %v250 = vrot.slane %v242, %v249
  %v252 = vunpack.c.l.s4 1966171168
  %v253 = vunpack.c.0.s8 %v252
  %v254 = vlaneseq
  %v255 = vshrl.u32 %v254, 7
  %v256 = vsub.s32 %v253, %v255
  %v257 = vrot.slane %v243, %v256
  %v258 = vcombine.high %v250, %v250
  %v259 = vcombine.high %v257, %v257
  %v260 = vlaneseq
  %v261 = vshrl.u32 %v260, 7
  %v262 = vsub.s32 0, %v261
  %v263 = vrot.slane %v250, %v262
  %v264 = vlaneseq
  %v265 = vshrl.u32 %v264, 7
  %v266 = vsub.s32 0, %v265
  %v267 = vrot.slane %v257, %v266
  %v268 = vlaneseq
  %v269 = vshrl.u32 %v268, 7
  %v270 = vsub.s32 0, %v269
  %v271 = vrot.slane %v258, %v270
  %v272 = vlaneseq
  %v273 = vshrl.u32 %v272, 7
  %v274 = vsub.s32 0, %v273
  %v275 = vrot.slane %v259, %v274
  %vm276 = vcmp.eq.s32.totalorder %v263, %v37
  %vm277 = vcmp.eq.s32.totalorder %v263, %v38
  %vm278 = vcmp.eq.s32.totalorder %v267, %v37
  %vm279 = vcmp.eq.s32.totalorder %v267, %v38
  %vm280 = vcmp.eq.s32.totalorder %v271, %v37
  %vm281 = vcmp.eq.s32.totalorder %v271, %v38
  %vm282 = vcmp.eq.s32.totalorder %v275, %v37
  %vm283 = vcmp.eq.s32.totalorder %v275, %v38
  %v286 = vunpack.c.l.s4 1966171168
  %v287 = vunpack.c.0.s8 %v286
  %v288 = vlaneseq
  %v289 = vshrl.u32 %v288, 7
  %v290 = vsub.s32 %v287, %v289
  %v291 = vrot.slane %v27, %v290
  %v292 = vcombine.high %v291, %v291
  %v294 = vunpack.c.l.s4 1966171168
  %v295 = vunpack.c.0.s8 %v294
  %v296 = vlaneseq
  %v297 = vshrl.u32 %v296, 7
  %v298 = vsub.s32 %v295, %v297
  %v299 = vrot.slane %v291, %v298
  %v301 = vunpack.c.l.s4 1966171168
  %v302 = vunpack.c.0.s8 %v301
  %v303 = vlaneseq
  %v304 = vshrl.u32 %v303, 7
  %v305 = vsub.s32 %v302, %v304
  %v306 = vrot.slane %v292, %v305
  %v307 = vcombine.high %v299, %v299
  %v308 = vcombine.high %v306, %v306
  %v313 = vsub.f32 1.0, %v299
  %v314 = vsub.f32 1.0, %v306
  %v315 = vsub.f32 1.0, %v307
  %v316 = vsub.f32 1.0, %v308
  %v321 = vlaneseq
  %v322 = vshrl.u32 %v321, 7
  %v323 = vsub.s32 0, %v322
  %v324 = vrot.slane %v313, %v323
  %v325 = vlaneseq
  %v326 = vshrl.u32 %v325, 7
  %v327 = vsub.s32 0, %v326
  %v328 = vrot.slane %v314, %v327
  %v329 = vlaneseq
  %v330 = vshrl.u32 %v329, 7
  %v331 = vsub.s32 0, %v330
  %v332 = vrot.slane %v315, %v331
  %v333 = vlaneseq
  %v334 = vshrl.u32 %v333, 7
  %v335 = vsub.s32 0, %v334
  %v336 = vrot.slane %v316, %v335
  %v341 = vsel %vm276, %v324, 0.0
  %v342 = vsel %vm277, %v324, 0.0
  %v343 = vsel %vm278, %v328, 0.0
  %v344 = vsel %vm279, %v328, 0.0
  %v345 = vsel %vm280, %v332, 0.0
  %v346 = vsel %vm281, %v332, 0.0
  %v347 = vsel %vm282, %v336, 0.0
  %v348 = vsel %vm283, %v336, 0.0
  %v350 = vunpack.c.l.s4 1966171168
  %v351 = vunpack.c.0.s8 %v350
  %v352 = vlaneseq
  %v353 = vshrl.u32 %v352, 7
  %v354 = vsub.s32 %v351, %v353
  %v355 = vrot.slane %v35, %v354
  %v356 = vcombine.high %v355, %v355
  %v358 = vunpack.c.l.s4 1966171168
  %v359 = vunpack.c.0.s8 %v358
  %v360 = vlaneseq
  %v361 = vshrl.u32 %v360, 7
  %v362 = vsub.s32 %v359, %v361
  %v363 = vrot.slane %v355, %v362
  %v365 = vunpack.c.l.s4 1966171168
  %v366 = vunpack.c.0.s8 %v365
  %v367 = vlaneseq
  %v368 = vshrl.u32 %v367, 7
  %v369 = vsub.s32 %v366, %v368
  %v370 = vrot.slane %v356, %v369
  %v371 = vcombine.high %v363, %v363
  %v372 = vcombine.high %v370, %v370
  %v373 = vlaneseq
  %v374 = vshrl.u32 %v373, 7
  %v375 = vsub.s32 0, %v374
  %v376 = vrot.slane %v363, %v375
  %v377 = vlaneseq
  %v378 = vshrl.u32 %v377, 7
  %v379 = vsub.s32 0, %v378
  %v380 = vrot.slane %v370, %v379
  %v381 = vlaneseq
  %v382 = vshrl.u32 %v381, 7
  %v383 = vsub.s32 0, %v382
  %v384 = vrot.slane %v371, %v383
  %v385 = vlaneseq
  %v386 = vshrl.u32 %v385, 7
  %v387 = vsub.s32 0, %v386
  %v388 = vrot.slane %v372, %v387
  %vm389 = vcmp.eq.s32.totalorder %v376, %v37
  %vm390 = vcmp.eq.s32.totalorder %v376, %v38
  %vm391 = vcmp.eq.s32.totalorder %v380, %v37
  %vm392 = vcmp.eq.s32.totalorder %v380, %v38
  %vm393 = vcmp.eq.s32.totalorder %v384, %v37
  %vm394 = vcmp.eq.s32.totalorder %v384, %v38
  %vm395 = vcmp.eq.s32.totalorder %v388, %v37
  %vm396 = vcmp.eq.s32.totalorder %v388, %v38
  %v397 = vlaneseq
  %v398 = vshrl.u32 %v397, 7
  %v399 = vsub.s32 0, %v398
  %v400 = vrot.slane %v299, %v399
  %v401 = vlaneseq
  %v402 = vshrl.u32 %v401, 7
  %v403 = vsub.s32 0, %v402
  %v404 = vrot.slane %v306, %v403
  %v405 = vlaneseq
  %v406 = vshrl.u32 %v405, 7
  %v407 = vsub.s32 0, %v406
  %v408 = vrot.slane %v307, %v407
  %v409 = vlaneseq
  %v410 = vshrl.u32 %v409, 7
  %v411 = vsub.s32 0, %v410
  %v412 = vrot.slane %v308, %v411
  %v417 = vsel %vm389, %v400, 0.0
  %v418 = vsel %vm390, %v400, 0.0
  %v419 = vsel %vm391, %v404, 0.0
  %v420 = vsel %vm392, %v404, 0.0
  %v421 = vsel %vm393, %v408, 0.0
  %v422 = vsel %vm394, %v408, 0.0
  %v423 = vsel %vm395, %v412, 0.0
  %v424 = vsel %vm396, %v412, 0.0
  %v425 = vadd.f32 %v341, %v417
  %v426 = vadd.f32 %v342, %v418
  %v427 = vadd.f32 %v343, %v419
  %v428 = vadd.f32 %v344, %v420
  %v429 = vadd.f32 %v345, %v421
  %v430 = vadd.f32 %v346, %v422
  %v431 = vadd.f32 %v347, %v423
  %v432 = vadd.f32 %v348, %v424
  %vm433 = vcmask 130048
  %v435 = vsel %vm433, %v11, 0
  %v438 = vsel %vm433, %v12, 0
  %440 = vmatprep.subr.mxu0 0.0
  %441 = vmatpush1.msra.mxu0 0.0
  %442 = vmatprep.subr.mxu0 0.0
  %443 = vmatpush1.msra.mxu0 0.0
  %444 = vmatprep.subr.mxu0 0.0
  %445 = vmatpush1.msra.mxu0 0.0
  %446 = vmatprep.subr.mxu0 0.0
  %447 = vmatpush1.msra.mxu0 0.0
  %448 = vmatprep.subr.mxu0 0.0
  %449 = vmatpush1.msra.mxu0 0.0
  %450 = vmatprep.subr.mxu0 0.0
  %451 = vmatpush1.msra.mxu0 0.0
  %452 = vmatprep.subr.mxu0 0.0
  %453 = vmatpush1.msra.mxu0 0.0
  %454 = vmatprep.subr.mxu0 0.0
  %455 = vmatpush1.msra.mxu0 0.0
  %456 = vmatprep.subr.mxu0 0.0
  %457 = vmatpush1.msra.mxu0 0.0
  %458 = vmatprep.subr.mxu0 0.0
  %459 = vmatpush1.msra.mxu0 0.0
  %460 = vmatprep.subr.mxu0 0.0
  %461 = vmatpush1.msra.mxu0 0.0
  %462 = vmatprep.subr.mxu0 0.0
  %463 = vmatpush1.msra.mxu0 0.0
  %464 = vmatprep.subr.mxu0 0.0
  %465 = vmatpush1.msra.mxu0 0.0
  %466 = vmatprep.subr.mxu0 0.0
  %467 = vmatpush1.msra.mxu0 0.0
  %468 = vmatprep.subr.mxu0 0.0
  %v469 = vand.u32 %v229, 4294901760
  %470 = vmatpush1.msra.mxu0 %v469
  %471 = vmatprep.subr.mxu0 0.0
  %v472 = vand.u32 %v228, 4294901760
  %473 = vmatpush1.msra.mxu0 %v472
  %474 = vmatprep.subr.mxu0 0.0
  %475 = vmatpush2.msra.mxu0 0.0
  %476 = vmatprep.subr.mxu0 0.0
  %477 = vmatpush2.msra.mxu0 0.0
  %478 = vmatprep.subr.mxu0 0.0
  %479 = vmatpush2.msra.mxu0 0.0
  %480 = vmatprep.subr.mxu0 0.0
  %481 = vmatpush2.msra.mxu0 0.0
  %482 = vmatprep.subr.mxu0 0.0
  %483 = vmatpush2.msra.mxu0 0.0
  %484 = vmatprep.subr.mxu0 0.0
  %485 = vmatpush2.msra.mxu0 0.0
  %486 = vmatprep.subr.mxu0 0.0
  %487 = vmatpush2.msra.mxu0 0.0
  %488 = vmatprep.subr.mxu0 0.0
  %489 = vmatpush2.msra.mxu0 0.0
  %490 = vmatprep.subr.mxu0 0.0
  %491 = vmatpush2.msra.mxu0 0.0
  %492 = vmatprep.subr.mxu0 0.0
  %493 = vmatpush2.msra.mxu0 0.0
  %494 = vmatprep.subr.mxu0 0.0
  %495 = vmatpush2.msra.mxu0 0.0
  %496 = vmatprep.subr.mxu0 0.0
  %497 = vmatpush2.msra.mxu0 0.0
  %498 = vmatprep.subr.mxu0 0.0
  %499 = vmatpush2.msra.mxu0 0.0
  %500 = vmatprep.subr.mxu0 0.0
  %501 = vmatpush2.msra.mxu0 0.0
  %502 = vmatprep.subr.mxu0 0.0
  %503 = vmatpush2.msra.mxu0 0.0
  %504 = vmatprep.subr.mxu0 0.0
  %505 = vmatpush2.msra.mxu0 0.0
  %506 = vmatprep.mubr.f32.mxu0 0.0
  %v507 = vand.u32 %v435, 4294901760
  %v508 = vsub.f32 %v435, %v507
  %v509 = vand.u32 %v508, 4294901760
  %v510 = vsub.f32 %v508, %v509
  %v511 = vand.u32 %v510, 4294901760
  %512 = vmatmul.mubr.f32.gmra.mxu0 %v511
  %v513 = vpop.f32.mrf.mxu0
  %v514 = vadd.f32 0.0, %v513
  %v515 = vpop.f32.mrf.mxu0
  %516 = vmatprep.mubr.f32.mxu0 0.0
  %v517 = vand.u32 %v438, 4294901760
  %v518 = vsub.f32 %v438, %v517
  %v519 = vand.u32 %v518, 4294901760
  %v520 = vsub.f32 %v518, %v519
  %v521 = vand.u32 %v520, 4294901760
  %522 = vmatmul.mubr.f32.gmra.mxu0 %v521
  %v523 = vpop.f32.mrf.mxu0
  %v524 = vadd.f32 0.0, %v523
  %v525 = vpop.f32.mrf.mxu0
  %526 = vdwg.mxu0
  %527 = vmatprep.subr.mxu0 0.0
  %528 = vmatpush1.msra.mxu0 0.0
  %529 = vmatprep.subr.mxu0 0.0
  %530 = vmatpush1.msra.mxu0 0.0
  %531 = vmatprep.subr.mxu0 0.0
  %532 = vmatpush1.msra.mxu0 0.0
  %533 = vmatprep.subr.mxu0 0.0
  %534 = vmatpush1.msra.mxu0 0.0
  %535 = vmatprep.subr.mxu0 0.0
  %536 = vmatpush1.msra.mxu0 0.0
  %537 = vmatprep.subr.mxu0 0.0
  %538 = vmatpush1.msra.mxu0 0.0
  %539 = vmatprep.subr.mxu0 0.0
  %540 = vmatpush1.msra.mxu0 0.0
  %541 = vmatprep.subr.mxu0 0.0
  %542 = vmatpush1.msra.mxu0 0.0
  %543 = vmatprep.subr.mxu0 0.0
  %544 = vmatpush1.msra.mxu0 0.0
  %545 = vmatprep.subr.mxu0 0.0
  %546 = vmatpush1.msra.mxu0 0.0
  %547 = vmatprep.subr.mxu0 0.0
  %548 = vmatpush1.msra.mxu0 0.0
  %549 = vmatprep.subr.mxu0 0.0
  %550 = vmatpush1.msra.mxu0 0.0
  %551 = vmatprep.subr.mxu0 0.0
  %552 = vmatpush1.msra.mxu0 0.0
  %553 = vmatprep.subr.mxu0 0.0
  %554 = vmatpush1.msra.mxu0 0.0
  %555 = vmatprep.subr.mxu0 0.0
  %v556 = vand.u32 %v229, 4294901760
  %v557 = vsub.f32 %v229, %v556
  %v558 = vand.u32 %v557, 4294901760
  %v559 = vsub.f32 %v557, %v558
  %v560 = vand.u32 %v559, 4294901760
  %561 = vmatpush1.msra.mxu0 %v560
  %562 = vmatprep.subr.mxu0 0.0
  %v563 = vand.u32 %v228, 4294901760
  %v564 = vsub.f32 %v228, %v563
  %v565 = vand.u32 %v564, 4294901760
  %v566 = vsub.f32 %v564, %v565
  %v567 = vand.u32 %v566, 4294901760
  %568 = vmatpush1.msra.mxu0 %v567
  %569 = vmatprep.subr.mxu0 0.0
  %570 = vmatpush2.msra.mxu0 0.0
  %571 = vmatprep.subr.mxu0 0.0
  %572 = vmatpush2.msra.mxu0 0.0
  %573 = vmatprep.subr.mxu0 0.0
  %574 = vmatpush2.msra.mxu0 0.0
  %575 = vmatprep.subr.mxu0 0.0
  %576 = vmatpush2.msra.mxu0 0.0
  %577 = vmatprep.subr.mxu0 0.0
  %578 = vmatpush2.msra.mxu0 0.0
  %579 = vmatprep.subr.mxu0 0.0
  %580 = vmatpush2.msra.mxu0 0.0
  %581 = vmatprep.subr.mxu0 0.0
  %582 = vmatpush2.msra.mxu0 0.0
  %583 = vmatprep.subr.mxu0 0.0
  %584 = vmatpush2.msra.mxu0 0.0
  %585 = vmatprep.subr.mxu0 0.0
  %586 = vmatpush2.msra.mxu0 0.0
  %587 = vmatprep.subr.mxu0 0.0
  %588 = vmatpush2.msra.mxu0 0.0
  %589 = vmatprep.subr.mxu0 0.0
  %590 = vmatpush2.msra.mxu0 0.0
  %591 = vmatprep.subr.mxu0 0.0
  %592 = vmatpush2.msra.mxu0 0.0
  %593 = vmatprep.subr.mxu0 0.0
  %594 = vmatpush2.msra.mxu0 0.0
  %595 = vmatprep.subr.mxu0 0.0
  %596 = vmatpush2.msra.mxu0 0.0
  %597 = vmatprep.subr.mxu0 0.0
  %598 = vmatpush2.msra.mxu0 0.0
  %599 = vmatprep.subr.mxu0 0.0
  %600 = vmatpush2.msra.mxu0 0.0
  %601 = vmatprep.mubr.f32.mxu0 0.0
  %v602 = vand.u32 %v435, 4294901760
  %603 = vmatmul.mubr.f32.gmra.mxu0 %v602
  %v604 = vpop.f32.mrf.mxu0
  %v605 = vadd.f32 %v514, %v604
  %v606 = vpop.f32.mrf.mxu0
  %607 = vmatprep.mubr.f32.mxu0 0.0
  %v608 = vand.u32 %v438, 4294901760
  %609 = vmatmul.mubr.f32.gmra.mxu0 %v608
  %v610 = vpop.f32.mrf.mxu0
  %v611 = vadd.f32 %v524, %v610
  %v612 = vpop.f32.mrf.mxu0
  %613 = vdwg.mxu0
  %614 = vmatprep.subr.mxu0 0.0
  %615 = vmatpush1.msra.mxu0 0.0
  %616 = vmatprep.subr.mxu0 0.0
  %617 = vmatpush1.msra.mxu0 0.0
  %618 = vmatprep.subr.mxu0 0.0
  %619 = vmatpush1.msra.mxu0 0.0
  %620 = vmatprep.subr.mxu0 0.0
  %621 = vmatpush1.msra.mxu0 0.0
  %622 = vmatprep.subr.mxu0 0.0
  %623 = vmatpush1.msra.mxu0 0.0
  %624 = vmatprep.subr.mxu0 0.0
  %625 = vmatpush1.msra.mxu0 0.0
  %626 = vmatprep.subr.mxu0 0.0
  %627 = vmatpush1.msra.mxu0 0.0
  %628 = vmatprep.subr.mxu0 0.0
  %629 = vmatpush1.msra.mxu0 0.0
  %630 = vmatprep.subr.mxu0 0.0
  %631 = vmatpush1.msra.mxu0 0.0
  %632 = vmatprep.subr.mxu0 0.0
  %633 = vmatpush1.msra.mxu0 0.0
  %634 = vmatprep.subr.mxu0 0.0
  %635 = vmatpush1.msra.mxu0 0.0
  %636 = vmatprep.subr.mxu0 0.0
  %637 = vmatpush1.msra.mxu0 0.0
  %638 = vmatprep.subr.mxu0 0.0
  %639 = vmatpush1.msra.mxu0 0.0
  %640 = vmatprep.subr.mxu0 0.0
  %641 = vmatpush1.msra.mxu0 0.0
  %642 = vmatprep.subr.mxu0 0.0
  %v643 = vand.u32 %v229, 4294901760
  %v644 = vsub.f32 %v229, %v643
  %645 = vmatpush1.msra.mxu0 %v644
  %646 = vmatprep.subr.mxu0 0.0
  %v647 = vand.u32 %v228, 4294901760
  %v648 = vsub.f32 %v228, %v647
  %649 = vmatpush1.msra.mxu0 %v648
  %650 = vmatprep.subr.mxu0 0.0
  %651 = vmatpush2.msra.mxu0 0.0
  %652 = vmatprep.subr.mxu0 0.0
  %653 = vmatpush2.msra.mxu0 0.0
  %654 = vmatprep.subr.mxu0 0.0
  %655 = vmatpush2.msra.mxu0 0.0
  %656 = vmatprep.subr.mxu0 0.0
  %657 = vmatpush2.msra.mxu0 0.0
  %658 = vmatprep.subr.mxu0 0.0
  %659 = vmatpush2.msra.mxu0 0.0
  %660 = vmatprep.subr.mxu0 0.0
  %661 = vmatpush2.msra.mxu0 0.0
  %662 = vmatprep.subr.mxu0 0.0
  %663 = vmatpush2.msra.mxu0 0.0
  %664 = vmatprep.subr.mxu0 0.0
  %665 = vmatpush2.msra.mxu0 0.0
  %666 = vmatprep.subr.mxu0 0.0
  %667 = vmatpush2.msra.mxu0 0.0
  %668 = vmatprep.subr.mxu0 0.0
  %669 = vmatpush2.msra.mxu0 0.0
  %670 = vmatprep.subr.mxu0 0.0
  %671 = vmatpush2.msra.mxu0 0.0
  %672 = vmatprep.subr.mxu0 0.0
  %673 = vmatpush2.msra.mxu0 0.0
  %674 = vmatprep.subr.mxu0 0.0
  %675 = vmatpush2.msra.mxu0 0.0
  %676 = vmatprep.subr.mxu0 0.0
  %677 = vmatpush2.msra.mxu0 0.0
  %678 = vmatprep.subr.mxu0 0.0
  %679 = vmatpush2.msra.mxu0 0.0
  %680 = vmatprep.subr.mxu0 0.0
  %681 = vmatpush2.msra.mxu0 0.0
  %682 = vmatprep.mubr.f32.mxu0 0.0
  %v683 = vand.u32 %v435, 4294901760
  %v684 = vsub.f32 %v435, %v683
  %685 = vmatmul.mubr.f32.gmra.mxu0 %v684
  %v686 = vpop.f32.mrf.mxu0
  %v687 = vadd.f32 %v605, %v686
  %v688 = vpop.f32.mrf.mxu0
  %689 = vmatprep.mubr.f32.mxu0 0.0
  %v690 = vand.u32 %v438, 4294901760
  %v691 = vsub.f32 %v438, %v690
  %692 = vmatmul.mubr.f32.gmra.mxu0 %v691
  %v693 = vpop.f32.mrf.mxu0
  %v694 = vadd.f32 %v611, %v693
  %v695 = vpop.f32.mrf.mxu0
  %696 = vdwg.mxu0
  %697 = vmatprep.subr.mxu0 0.0
  %698 = vmatpush1.msra.mxu0 0.0
  %699 = vmatprep.subr.mxu0 0.0
  %700 = vmatpush1.msra.mxu0 0.0
  %701 = vmatprep.subr.mxu0 0.0
  %702 = vmatpush1.msra.mxu0 0.0
  %703 = vmatprep.subr.mxu0 0.0
  %704 = vmatpush1.msra.mxu0 0.0
  %705 = vmatprep.subr.mxu0 0.0
  %706 = vmatpush1.msra.mxu0 0.0
  %707 = vmatprep.subr.mxu0 0.0
  %708 = vmatpush1.msra.mxu0 0.0
  %709 = vmatprep.subr.mxu0 0.0
  %710 = vmatpush1.msra.mxu0 0.0
  %711 = vmatprep.subr.mxu0 0.0
  %712 = vmatpush1.msra.mxu0 0.0
  %713 = vmatprep.subr.mxu0 0.0
  %714 = vmatpush1.msra.mxu0 0.0
  %715 = vmatprep.subr.mxu0 0.0
  %716 = vmatpush1.msra.mxu0 0.0
  %717 = vmatprep.subr.mxu0 0.0
  %718 = vmatpush1.msra.mxu0 0.0
  %719 = vmatprep.subr.mxu0 0.0
  %720 = vmatpush1.msra.mxu0 0.0
  %721 = vmatprep.subr.mxu0 0.0
  %722 = vmatpush1.msra.mxu0 0.0
  %723 = vmatprep.subr.mxu0 0.0
  %724 = vmatpush1.msra.mxu0 0.0
  %725 = vmatprep.subr.mxu0 0.0
  %v726 = vand.u32 %v229, 4294901760
  %727 = vmatpush1.msra.mxu0 %v726
  %728 = vmatprep.subr.mxu0 0.0
  %v729 = vand.u32 %v228, 4294901760
  %730 = vmatpush1.msra.mxu0 %v729
  %731 = vmatprep.subr.mxu0 0.0
  %732 = vmatpush2.msra.mxu0 0.0
  %733 = vmatprep.subr.mxu0 0.0
  %734 = vmatpush2.msra.mxu0 0.0
  %735 = vmatprep.subr.mxu0 0.0
  %736 = vmatpush2.msra.mxu0 0.0
  %737 = vmatprep.subr.mxu0 0.0
  %738 = vmatpush2.msra.mxu0 0.0
  %739 = vmatprep.subr.mxu0 0.0
  %740 = vmatpush2.msra.mxu0 0.0
  %741 = vmatprep.subr.mxu0 0.0
  %742 = vmatpush2.msra.mxu0 0.0
  %743 = vmatprep.subr.mxu0 0.0
  %744 = vmatpush2.msra.mxu0 0.0
  %745 = vmatprep.subr.mxu0 0.0
  %746 = vmatpush2.msra.mxu0 0.0
  %747 = vmatprep.subr.mxu0 0.0
  %748 = vmatpush2.msra.mxu0 0.0
  %749 = vmatprep.subr.mxu0 0.0
  %750 = vmatpush2.msra.mxu0 0.0
  %751 = vmatprep.subr.mxu0 0.0
  %752 = vmatpush2.msra.mxu0 0.0
  %753 = vmatprep.subr.mxu0 0.0
  %754 = vmatpush2.msra.mxu0 0.0
  %755 = vmatprep.subr.mxu0 0.0
  %756 = vmatpush2.msra.mxu0 0.0
  %757 = vmatprep.subr.mxu0 0.0
  %758 = vmatpush2.msra.mxu0 0.0
  %759 = vmatprep.subr.mxu0 0.0
  %760 = vmatpush2.msra.mxu0 0.0
  %761 = vmatprep.subr.mxu0 0.0
  %762 = vmatpush2.msra.mxu0 0.0
  %763 = vmatprep.mubr.f32.mxu0 0.0
  %v764 = vand.u32 %v435, 4294901760
  %v765 = vsub.f32 %v435, %v764
  %v766 = vand.u32 %v765, 4294901760
  %767 = vmatmul.mubr.f32.gmra.mxu0 %v766
  %v768 = vpop.f32.mrf.mxu0
  %v769 = vadd.f32 %v687, %v768
  %v770 = vpop.f32.mrf.mxu0
  %771 = vmatprep.mubr.f32.mxu0 0.0
  %v772 = vand.u32 %v438, 4294901760
  %v773 = vsub.f32 %v438, %v772
  %v774 = vand.u32 %v773, 4294901760
  %775 = vmatmul.mubr.f32.gmra.mxu0 %v774
  %v776 = vpop.f32.mrf.mxu0
  %v777 = vadd.f32 %v694, %v776
  %v778 = vpop.f32.mrf.mxu0
  %779 = vdwg.mxu0
  %780 = vmatprep.subr.mxu0 0.0
  %781 = vmatpush1.msra.mxu0 0.0
  %782 = vmatprep.subr.mxu0 0.0
  %783 = vmatpush1.msra.mxu0 0.0
  %784 = vmatprep.subr.mxu0 0.0
  %785 = vmatpush1.msra.mxu0 0.0
  %786 = vmatprep.subr.mxu0 0.0
  %787 = vmatpush1.msra.mxu0 0.0
  %788 = vmatprep.subr.mxu0 0.0
  %789 = vmatpush1.msra.mxu0 0.0
  %790 = vmatprep.subr.mxu0 0.0
  %791 = vmatpush1.msra.mxu0 0.0
  %792 = vmatprep.subr.mxu0 0.0
  %793 = vmatpush1.msra.mxu0 0.0
  %794 = vmatprep.subr.mxu0 0.0
  %795 = vmatpush1.msra.mxu0 0.0
  %796 = vmatprep.subr.mxu0 0.0
  %797 = vmatpush1.msra.mxu0 0.0
  %798 = vmatprep.subr.mxu0 0.0
  %799 = vmatpush1.msra.mxu0 0.0
  %800 = vmatprep.subr.mxu0 0.0
  %801 = vmatpush1.msra.mxu0 0.0
  %802 = vmatprep.subr.mxu0 0.0
  %803 = vmatpush1.msra.mxu0 0.0
  %804 = vmatprep.subr.mxu0 0.0
  %805 = vmatpush1.msra.mxu0 0.0
  %806 = vmatprep.subr.mxu0 0.0
  %807 = vmatpush1.msra.mxu0 0.0
  %808 = vmatprep.subr.mxu0 0.0
  %v809 = vand.u32 %v229, 4294901760
  %v810 = vsub.f32 %v229, %v809
  %v811 = vand.u32 %v810, 4294901760
  %812 = vmatpush1.msra.mxu0 %v811
  %813 = vmatprep.subr.mxu0 0.0
  %v814 = vand.u32 %v228, 4294901760
  %v815 = vsub.f32 %v228, %v814
  %v816 = vand.u32 %v815, 4294901760
  %817 = vmatpush1.msra.mxu0 %v816
  %818 = vmatprep.subr.mxu0 0.0
  %819 = vmatpush2.msra.mxu0 0.0
  %820 = vmatprep.subr.mxu0 0.0
  %821 = vmatpush2.msra.mxu0 0.0
  %822 = vmatprep.subr.mxu0 0.0
  %823 = vmatpush2.msra.mxu0 0.0
  %824 = vmatprep.subr.mxu0 0.0
  %825 = vmatpush2.msra.mxu0 0.0
  %826 = vmatprep.subr.mxu0 0.0
  %827 = vmatpush2.msra.mxu0 0.0
  %828 = vmatprep.subr.mxu0 0.0
  %829 = vmatpush2.msra.mxu0 0.0
  %830 = vmatprep.subr.mxu0 0.0
  %831 = vmatpush2.msra.mxu0 0.0
  %832 = vmatprep.subr.mxu0 0.0
  %833 = vmatpush2.msra.mxu0 0.0
  %834 = vmatprep.subr.mxu0 0.0
  %835 = vmatpush2.msra.mxu0 0.0
  %836 = vmatprep.subr.mxu0 0.0
  %837 = vmatpush2.msra.mxu0 0.0
  %838 = vmatprep.subr.mxu0 0.0
  %839 = vmatpush2.msra.mxu0 0.0
  %840 = vmatprep.subr.mxu0 0.0
  %841 = vmatpush2.msra.mxu0 0.0
  %842 = vmatprep.subr.mxu0 0.0
  %843 = vmatpush2.msra.mxu0 0.0
  %844 = vmatprep.subr.mxu0 0.0
  %845 = vmatpush2.msra.mxu0 0.0
  %846 = vmatprep.subr.mxu0 0.0
  %847 = vmatpush2.msra.mxu0 0.0
  %848 = vmatprep.subr.mxu0 0.0
  %849 = vmatpush2.msra.mxu0 0.0
  %850 = vmatprep.mubr.f32.mxu0 0.0
  %v851 = vand.u32 %v435, 4294901760
  %852 = vmatmul.mubr.f32.gmra.mxu0 %v851
  %v853 = vpop.f32.mrf.mxu0
  %v854 = vadd.f32 %v769, %v853
  %v855 = vpop.f32.mrf.mxu0
  %856 = vmatprep.mubr.f32.mxu0 0.0
  %v857 = vand.u32 %v438, 4294901760
  %858 = vmatmul.mubr.f32.gmra.mxu0 %v857
  %v859 = vpop.f32.mrf.mxu0
  %v860 = vadd.f32 %v777, %v859
  %v861 = vpop.f32.mrf.mxu0
  %862 = vdwg.mxu0
  %863 = vmatprep.subr.mxu0 0.0
  %864 = vmatpush1.msra.mxu0 0.0
  %865 = vmatprep.subr.mxu0 0.0
  %866 = vmatpush1.msra.mxu0 0.0
  %867 = vmatprep.subr.mxu0 0.0
  %868 = vmatpush1.msra.mxu0 0.0
  %869 = vmatprep.subr.mxu0 0.0
  %870 = vmatpush1.msra.mxu0 0.0
  %871 = vmatprep.subr.mxu0 0.0
  %872 = vmatpush1.msra.mxu0 0.0
  %873 = vmatprep.subr.mxu0 0.0
  %874 = vmatpush1.msra.mxu0 0.0
  %875 = vmatprep.subr.mxu0 0.0
  %876 = vmatpush1.msra.mxu0 0.0
  %877 = vmatprep.subr.mxu0 0.0
  %878 = vmatpush1.msra.mxu0 0.0
  %879 = vmatprep.subr.mxu0 0.0
  %880 = vmatpush1.msra.mxu0 0.0
  %881 = vmatprep.subr.mxu0 0.0
  %882 = vmatpush1.msra.mxu0 0.0
  %883 = vmatprep.subr.mxu0 0.0
  %884 = vmatpush1.msra.mxu0 0.0
  %885 = vmatprep.subr.mxu0 0.0
  %886 = vmatpush1.msra.mxu0 0.0
  %887 = vmatprep.subr.mxu0 0.0
  %888 = vmatpush1.msra.mxu0 0.0
  %889 = vmatprep.subr.mxu0 0.0
  %890 = vmatpush1.msra.mxu0 0.0
  %891 = vmatprep.subr.mxu0 0.0
  %v892 = vand.u32 %v229, 4294901760
  %893 = vmatpush1.msra.mxu0 %v892
  %894 = vmatprep.subr.mxu0 0.0
  %v895 = vand.u32 %v228, 4294901760
  %896 = vmatpush1.msra.mxu0 %v895
  %897 = vmatprep.subr.mxu0 0.0
  %898 = vmatpush2.msra.mxu0 0.0
  %899 = vmatprep.subr.mxu0 0.0
  %900 = vmatpush2.msra.mxu0 0.0
  %901 = vmatprep.subr.mxu0 0.0
  %902 = vmatpush2.msra.mxu0 0.0
  %903 = vmatprep.subr.mxu0 0.0
  %904 = vmatpush2.msra.mxu0 0.0
  %905 = vmatprep.subr.mxu0 0.0
  %906 = vmatpush2.msra.mxu0 0.0
  %907 = vmatprep.subr.mxu0 0.0
  %908 = vmatpush2.msra.mxu0 0.0
  %909 = vmatprep.subr.mxu0 0.0
  %910 = vmatpush2.msra.mxu0 0.0
  %911 = vmatprep.subr.mxu0 0.0
  %912 = vmatpush2.msra.mxu0 0.0
  %913 = vmatprep.subr.mxu0 0.0
  %914 = vmatpush2.msra.mxu0 0.0
  %915 = vmatprep.subr.mxu0 0.0
  %916 = vmatpush2.msra.mxu0 0.0
  %917 = vmatprep.subr.mxu0 0.0
  %918 = vmatpush2.msra.mxu0 0.0
  %919 = vmatprep.subr.mxu0 0.0
  %920 = vmatpush2.msra.mxu0 0.0
  %921 = vmatprep.subr.mxu0 0.0
  %922 = vmatpush2.msra.mxu0 0.0
  %923 = vmatprep.subr.mxu0 0.0
  %924 = vmatpush2.msra.mxu0 0.0
  %925 = vmatprep.subr.mxu0 0.0
  %926 = vmatpush2.msra.mxu0 0.0
  %927 = vmatprep.subr.mxu0 0.0
  %928 = vmatpush2.msra.mxu0 0.0
  %929 = vmatprep.mubr.f32.mxu0 0.0
  %v930 = vand.u32 %v435, 4294901760
  %931 = vmatmul.mubr.f32.gmra.mxu0 %v930
  %v932 = vpop.f32.mrf.mxu0
  %v933 = vadd.f32 %v854, %v932
  %v934 = vpop.f32.mrf.mxu0
  %935 = vmatprep.mubr.f32.mxu0 0.0
  %v936 = vand.u32 %v438, 4294901760
  %937 = vmatmul.mubr.f32.gmra.mxu0 %v936
  %v938 = vpop.f32.mrf.mxu0
  %v939 = vadd.f32 %v860, %v938
  %v940 = vpop.f32.mrf.mxu0
  %941 = vdwg.mxu0
  %v943 = vsel %vm433, %v13, 0
  %v946 = vsel %vm433, %v14, 0
  %948 = vmatprep.subr.mxu0 0.0
  %949 = vmatpush1.msra.mxu0 0.0
  %950 = vmatprep.subr.mxu0 0.0
  %951 = vmatpush1.msra.mxu0 0.0
  %952 = vmatprep.subr.mxu0 0.0
  %953 = vmatpush1.msra.mxu0 0.0
  %954 = vmatprep.subr.mxu0 0.0
  %955 = vmatpush1.msra.mxu0 0.0
  %956 = vmatprep.subr.mxu0 0.0
  %957 = vmatpush1.msra.mxu0 0.0
  %958 = vmatprep.subr.mxu0 0.0
  %959 = vmatpush1.msra.mxu0 0.0
  %960 = vmatprep.subr.mxu0 0.0
  %961 = vmatpush1.msra.mxu0 0.0
  %962 = vmatprep.subr.mxu0 0.0
  %963 = vmatpush1.msra.mxu0 0.0
  %964 = vmatprep.subr.mxu0 0.0
  %965 = vmatpush1.msra.mxu0 0.0
  %966 = vmatprep.subr.mxu0 0.0
  %967 = vmatpush1.msra.mxu0 0.0
  %968 = vmatprep.subr.mxu0 0.0
  %969 = vmatpush1.msra.mxu0 0.0
  %970 = vmatprep.subr.mxu0 0.0
  %971 = vmatpush1.msra.mxu0 0.0
  %972 = vmatprep.subr.mxu0 0.0
  %973 = vmatpush1.msra.mxu0 0.0
  %974 = vmatprep.subr.mxu0 0.0
  %975 = vmatpush1.msra.mxu0 0.0
  %976 = vmatprep.subr.mxu0 0.0
  %v977 = vand.u32 %v231, 4294901760
  %978 = vmatpush1.msra.mxu0 %v977
  %979 = vmatprep.subr.mxu0 0.0
  %v980 = vand.u32 %v230, 4294901760
  %981 = vmatpush1.msra.mxu0 %v980
  %982 = vmatprep.subr.mxu0 0.0
  %983 = vmatpush2.msra.mxu0 0.0
  %984 = vmatprep.subr.mxu0 0.0
  %985 = vmatpush2.msra.mxu0 0.0
  %986 = vmatprep.subr.mxu0 0.0
  %987 = vmatpush2.msra.mxu0 0.0
  %988 = vmatprep.subr.mxu0 0.0
  %989 = vmatpush2.msra.mxu0 0.0
  %990 = vmatprep.subr.mxu0 0.0
  %991 = vmatpush2.msra.mxu0 0.0
  %992 = vmatprep.subr.mxu0 0.0
  %993 = vmatpush2.msra.mxu0 0.0
  %994 = vmatprep.subr.mxu0 0.0
  %995 = vmatpush2.msra.mxu0 0.0
  %996 = vmatprep.subr.mxu0 0.0
  %997 = vmatpush2.msra.mxu0 0.0
  %998 = vmatprep.subr.mxu0 0.0
  %999 = vmatpush2.msra.mxu0 0.0
  %1000 = vmatprep.subr.mxu0 0.0
  %1001 = vmatpush2.msra.mxu0 0.0
  %1002 = vmatprep.subr.mxu0 0.0
  %1003 = vmatpush2.msra.mxu0 0.0
  %1004 = vmatprep.subr.mxu0 0.0
  %1005 = vmatpush2.msra.mxu0 0.0
  %1006 = vmatprep.subr.mxu0 0.0
  %1007 = vmatpush2.msra.mxu0 0.0
  %1008 = vmatprep.subr.mxu0 0.0
  %1009 = vmatpush2.msra.mxu0 0.0
  %1010 = vmatprep.subr.mxu0 0.0
  %1011 = vmatpush2.msra.mxu0 0.0
  %1012 = vmatprep.subr.mxu0 0.0
  %1013 = vmatpush2.msra.mxu0 0.0
  %1014 = vmatprep.mubr.f32.mxu0 0.0
  %v1015 = vand.u32 %v943, 4294901760
  %v1016 = vsub.f32 %v943, %v1015
  %v1017 = vand.u32 %v1016, 4294901760
  %v1018 = vsub.f32 %v1016, %v1017
  %v1019 = vand.u32 %v1018, 4294901760
  %1020 = vmatmul.mubr.f32.gmra.mxu0 %v1019
  %v1021 = vpop.f32.mrf.mxu0
  %v1022 = vadd.f32 0.0, %v1021
  %v1023 = vpop.f32.mrf.mxu0
  %1024 = vmatprep.mubr.f32.mxu0 0.0
  %v1025 = vand.u32 %v946, 4294901760
  %v1026 = vsub.f32 %v946, %v1025
  %v1027 = vand.u32 %v1026, 4294901760
  %v1028 = vsub.f32 %v1026, %v1027
  %v1029 = vand.u32 %v1028, 4294901760
  %1030 = vmatmul.mubr.f32.gmra.mxu0 %v1029
  %v1031 = vpop.f32.mrf.mxu0
  %v1032 = vadd.f32 0.0, %v1031
  %v1033 = vpop.f32.mrf.mxu0
  %1034 = vdwg.mxu0
  %1035 = vmatprep.subr.mxu0 0.0
  %1036 = vmatpush1.msra.mxu0 0.0
  %1037 = vmatprep.subr.mxu0 0.0
  %1038 = vmatpush1.msra.mxu0 0.0
  %1039 = vmatprep.subr.mxu0 0.0
  %1040 = vmatpush1.msra.mxu0 0.0
  %1041 = vmatprep.subr.mxu0 0.0
  %1042 = vmatpush1.msra.mxu0 0.0
  %1043 = vmatprep.subr.mxu0 0.0
  %1044 = vmatpush1.msra.mxu0 0.0
  %1045 = vmatprep.subr.mxu0 0.0
  %1046 = vmatpush1.msra.mxu0 0.0
  %1047 = vmatprep.subr.mxu0 0.0
  %1048 = vmatpush1.msra.mxu0 0.0
  %1049 = vmatprep.subr.mxu0 0.0
  %1050 = vmatpush1.msra.mxu0 0.0
  %1051 = vmatprep.subr.mxu0 0.0
  %1052 = vmatpush1.msra.mxu0 0.0
  %1053 = vmatprep.subr.mxu0 0.0
  %1054 = vmatpush1.msra.mxu0 0.0
  %1055 = vmatprep.subr.mxu0 0.0
  %1056 = vmatpush1.msra.mxu0 0.0
  %1057 = vmatprep.subr.mxu0 0.0
  %1058 = vmatpush1.msra.mxu0 0.0
  %1059 = vmatprep.subr.mxu0 0.0
  %1060 = vmatpush1.msra.mxu0 0.0
  %1061 = vmatprep.subr.mxu0 0.0
  %1062 = vmatpush1.msra.mxu0 0.0
  %1063 = vmatprep.subr.mxu0 0.0
  %v1064 = vand.u32 %v231, 4294901760
  %v1065 = vsub.f32 %v231, %v1064
  %v1066 = vand.u32 %v1065, 4294901760
  %v1067 = vsub.f32 %v1065, %v1066
  %v1068 = vand.u32 %v1067, 4294901760
  %1069 = vmatpush1.msra.mxu0 %v1068
  %1070 = vmatprep.subr.mxu0 0.0
  %v1071 = vand.u32 %v230, 4294901760
  %v1072 = vsub.f32 %v230, %v1071
  %v1073 = vand.u32 %v1072, 4294901760
  %v1074 = vsub.f32 %v1072, %v1073
  %v1075 = vand.u32 %v1074, 4294901760
  %1076 = vmatpush1.msra.mxu0 %v1075
  %1077 = vmatprep.subr.mxu0 0.0
  %1078 = vmatpush2.msra.mxu0 0.0
  %1079 = vmatprep.subr.mxu0 0.0
  %1080 = vmatpush2.msra.mxu0 0.0
  %1081 = vmatprep.subr.mxu0 0.0
  %1082 = vmatpush2.msra.mxu0 0.0
  %1083 = vmatprep.subr.mxu0 0.0
  %1084 = vmatpush2.msra.mxu0 0.0
  %1085 = vmatprep.subr.mxu0 0.0
  %1086 = vmatpush2.msra.mxu0 0.0
  %1087 = vmatprep.subr.mxu0 0.0
  %1088 = vmatpush2.msra.mxu0 0.0
  %1089 = vmatprep.subr.mxu0 0.0
  %1090 = vmatpush2.msra.mxu0 0.0
  %1091 = vmatprep.subr.mxu0 0.0
  %1092 = vmatpush2.msra.mxu0 0.0
  %1093 = vmatprep.subr.mxu0 0.0
  %1094 = vmatpush2.msra.mxu0 0.0
  %1095 = vmatprep.subr.mxu0 0.0
  %1096 = vmatpush2.msra.mxu0 0.0
  %1097 = vmatprep.subr.mxu0 0.0
  %1098 = vmatpush2.msra.mxu0 0.0
  %1099 = vmatprep.subr.mxu0 0.0
  %1100 = vmatpush2.msra.mxu0 0.0
  %1101 = vmatprep.subr.mxu0 0.0
  %1102 = vmatpush2.msra.mxu0 0.0
  %1103 = vmatprep.subr.mxu0 0.0
  %1104 = vmatpush2.msra.mxu0 0.0
  %1105 = vmatprep.subr.mxu0 0.0
  %1106 = vmatpush2.msra.mxu0 0.0
  %1107 = vmatprep.subr.mxu0 0.0
  %1108 = vmatpush2.msra.mxu0 0.0
  %1109 = vmatprep.mubr.f32.mxu0 0.0
  %v1110 = vand.u32 %v943, 4294901760
  %1111 = vmatmul.mubr.f32.gmra.mxu0 %v1110
  %v1112 = vpop.f32.mrf.mxu0
  %v1113 = vadd.f32 %v1022, %v1112
  %v1114 = vpop.f32.mrf.mxu0
  %1115 = vmatprep.mubr.f32.mxu0 0.0
  %v1116 = vand.u32 %v946, 4294901760
  %1117 = vmatmul.mubr.f32.gmra.mxu0 %v1116
  %v1118 = vpop.f32.mrf.mxu0
  %v1119 = vadd.f32 %v1032, %v1118
  %v1120 = vpop.f32.mrf.mxu0
  %1121 = vdwg.mxu0
  %1122 = vmatprep.subr.mxu0 0.0
  %1123 = vmatpush1.msra.mxu0 0.0
  %1124 = vmatprep.subr.mxu0 0.0
  %1125 = vmatpush1.msra.mxu0 0.0
  %1126 = vmatprep.subr.mxu0 0.0
  %1127 = vmatpush1.msra.mxu0 0.0
  %1128 = vmatprep.subr.mxu0 0.0
  %1129 = vmatpush1.msra.mxu0 0.0
  %1130 = vmatprep.subr.mxu0 0.0
  %1131 = vmatpush1.msra.mxu0 0.0
  %1132 = vmatprep.subr.mxu0 0.0
  %1133 = vmatpush1.msra.mxu0 0.0
  %1134 = vmatprep.subr.mxu0 0.0
  %1135 = vmatpush1.msra.mxu0 0.0
  %1136 = vmatprep.subr.mxu0 0.0
  %1137 = vmatpush1.msra.mxu0 0.0
  %1138 = vmatprep.subr.mxu0 0.0
  %1139 = vmatpush1.msra.mxu0 0.0
  %1140 = vmatprep.subr.mxu0 0.0
  %1141 = vmatpush1.msra.mxu0 0.0
  %1142 = vmatprep.subr.mxu0 0.0
  %1143 = vmatpush1.msra.mxu0 0.0
  %1144 = vmatprep.subr.mxu0 0.0
  %1145 = vmatpush1.msra.mxu0 0.0
  %1146 = vmatprep.subr.mxu0 0.0
  %1147 = vmatpush1.msra.mxu0 0.0
  %1148 = vmatprep.subr.mxu0 0.0
  %1149 = vmatpush1.msra.mxu0 0.0
  %1150 = vmatprep.subr.mxu0 0.0
  %v1151 = vand.u32 %v231, 4294901760
  %v1152 = vsub.f32 %v231, %v1151
  %1153 = vmatpush1.msra.mxu0 %v1152
  %1154 = vmatprep.subr.mxu0 0.0
  %v1155 = vand.u32 %v230, 4294901760
  %v1156 = vsub.f32 %v230, %v1155
  %1157 = vmatpush1.msra.mxu0 %v1156
  %1158 = vmatprep.subr.mxu0 0.0
  %1159 = vmatpush2.msra.mxu0 0.0
  %1160 = vmatprep.subr.mxu0 0.0
  %1161 = vmatpush2.msra.mxu0 0.0
  %1162 = vmatprep.subr.mxu0 0.0
  %1163 = vmatpush2.msra.mxu0 0.0
  %1164 = vmatprep.subr.mxu0 0.0
  %1165 = vmatpush2.msra.mxu0 0.0
  %1166 = vmatprep.subr.mxu0 0.0
  %1167 = vmatpush2.msra.mxu0 0.0
  %1168 = vmatprep.subr.mxu0 0.0
  %1169 = vmatpush2.msra.mxu0 0.0
  %1170 = vmatprep.subr.mxu0 0.0
  %1171 = vmatpush2.msra.mxu0 0.0
  %1172 = vmatprep.subr.mxu0 0.0
  %1173 = vmatpush2.msra.mxu0 0.0
  %1174 = vmatprep.subr.mxu0 0.0
  %1175 = vmatpush2.msra.mxu0 0.0
  %1176 = vmatprep.subr.mxu0 0.0
  %1177 = vmatpush2.msra.mxu0 0.0
  %1178 = vmatprep.subr.mxu0 0.0
  %1179 = vmatpush2.msra.mxu0 0.0
  %1180 = vmatprep.subr.mxu0 0.0
  %1181 = vmatpush2.msra.mxu0 0.0
  %1182 = vmatprep.subr.mxu0 0.0
  %1183 = vmatpush2.msra.mxu0 0.0
  %1184 = vmatprep.subr.mxu0 0.0
  %1185 = vmatpush2.msra.mxu0 0.0
  %1186 = vmatprep.subr.mxu0 0.0
  %1187 = vmatpush2.msra.mxu0 0.0
  %1188 = vmatprep.subr.mxu0 0.0
  %1189 = vmatpush2.msra.mxu0 0.0
  %1190 = vmatprep.mubr.f32.mxu0 0.0
  %v1191 = vand.u32 %v943, 4294901760
  %v1192 = vsub.f32 %v943, %v1191
  %1193 = vmatmul.mubr.f32.gmra.mxu0 %v1192
  %v1194 = vpop.f32.mrf.mxu0
  %v1195 = vadd.f32 %v1113, %v1194
  %v1196 = vpop.f32.mrf.mxu0
  %1197 = vmatprep.mubr.f32.mxu0 0.0
  %v1198 = vand.u32 %v946, 4294901760
  %v1199 = vsub.f32 %v946, %v1198
  %1200 = vmatmul.mubr.f32.gmra.mxu0 %v1199
  %v1201 = vpop.f32.mrf.mxu0
  %v1202 = vadd.f32 %v1119, %v1201
  %v1203 = vpop.f32.mrf.mxu0
  %1204 = vdwg.mxu0
  %1205 = vmatprep.subr.mxu0 0.0
  %1206 = vmatpush1.msra.mxu0 0.0
  %1207 = vmatprep.subr.mxu0 0.0
  %1208 = vmatpush1.msra.mxu0 0.0
  %1209 = vmatprep.subr.mxu0 0.0
  %1210 = vmatpush1.msra.mxu0 0.0
  %1211 = vmatprep.subr.mxu0 0.0
  %1212 = vmatpush1.msra.mxu0 0.0
  %1213 = vmatprep.subr.mxu0 0.0
  %1214 = vmatpush1.msra.mxu0 0.0
  %1215 = vmatprep.subr.mxu0 0.0
  %1216 = vmatpush1.msra.mxu0 0.0
  %1217 = vmatprep.subr.mxu0 0.0
  %1218 = vmatpush1.msra.mxu0 0.0
  %1219 = vmatprep.subr.mxu0 0.0
  %1220 = vmatpush1.msra.mxu0 0.0
  %1221 = vmatprep.subr.mxu0 0.0
  %1222 = vmatpush1.msra.mxu0 0.0
  %1223 = vmatprep.subr.mxu0 0.0
  %1224 = vmatpush1.msra.mxu0 0.0
  %1225 = vmatprep.subr.mxu0 0.0
  %1226 = vmatpush1.msra.mxu0 0.0
  %1227 = vmatprep.subr.mxu0 0.0
  %1228 = vmatpush1.msra.mxu0 0.0
  %1229 = vmatprep.subr.mxu0 0.0
  %1230 = vmatpush1.msra.mxu0 0.0
  %1231 = vmatprep.subr.mxu0 0.0
  %1232 = vmatpush1.msra.mxu0 0.0
  %1233 = vmatprep.subr.mxu0 0.0
  %v1234 = vand.u32 %v231, 4294901760
  %1235 = vmatpush1.msra.mxu0 %v1234
  %1236 = vmatprep.subr.mxu0 0.0
  %v1237 = vand.u32 %v230, 4294901760
  %1238 = vmatpush1.msra.mxu0 %v1237
  %1239 = vmatprep.subr.mxu0 0.0
  %1240 = vmatpush2.msra.mxu0 0.0
  %1241 = vmatprep.subr.mxu0 0.0
  %1242 = vmatpush2.msra.mxu0 0.0
  %1243 = vmatprep.subr.mxu0 0.0
  %1244 = vmatpush2.msra.mxu0 0.0
  %1245 = vmatprep.subr.mxu0 0.0
  %1246 = vmatpush2.msra.mxu0 0.0
  %1247 = vmatprep.subr.mxu0 0.0
  %1248 = vmatpush2.msra.mxu0 0.0
  %1249 = vmatprep.subr.mxu0 0.0
  %1250 = vmatpush2.msra.mxu0 0.0
  %1251 = vmatprep.subr.mxu0 0.0
  %1252 = vmatpush2.msra.mxu0 0.0
  %1253 = vmatprep.subr.mxu0 0.0
  %1254 = vmatpush2.msra.mxu0 0.0
  %1255 = vmatprep.subr.mxu0 0.0
  %1256 = vmatpush2.msra.mxu0 0.0
  %1257 = vmatprep.subr.mxu0 0.0
  %1258 = vmatpush2.msra.mxu0 0.0
  %1259 = vmatprep.subr.mxu0 0.0
  %1260 = vmatpush2.msra.mxu0 0.0
  %1261 = vmatprep.subr.mxu0 0.0
  %1262 = vmatpush2.msra.mxu0 0.0
  %1263 = vmatprep.subr.mxu0 0.0
  %1264 = vmatpush2.msra.mxu0 0.0
  %1265 = vmatprep.subr.mxu0 0.0
  %1266 = vmatpush2.msra.mxu0 0.0
  %1267 = vmatprep.subr.mxu0 0.0
  %1268 = vmatpush2.msra.mxu0 0.0
  %1269 = vmatprep.subr.mxu0 0.0
  %1270 = vmatpush2.msra.mxu0 0.0
  %1271 = vmatprep.mubr.f32.mxu0 0.0
  %v1272 = vand.u32 %v943, 4294901760
  %v1273 = vsub.f32 %v943, %v1272
  %v1274 = vand.u32 %v1273, 4294901760
  %1275 = vmatmul.mubr.f32.gmra.mxu0 %v1274
  %v1276 = vpop.f32.mrf.mxu0
  %v1277 = vadd.f32 %v1195, %v1276
  %v1278 = vpop.f32.mrf.mxu0
  %1279 = vmatprep.mubr.f32.mxu0 0.0
  %v1280 = vand.u32 %v946, 4294901760
  %v1281 = vsub.f32 %v946, %v1280
  %v1282 = vand.u32 %v1281, 4294901760
  %1283 = vmatmul.mubr.f32.gmra.mxu0 %v1282
  %v1284 = vpop.f32.mrf.mxu0
  %v1285 = vadd.f32 %v1202, %v1284
  %v1286 = vpop.f32.mrf.mxu0
  %1287 = vdwg.mxu0
  %1288 = vmatprep.subr.mxu0 0.0
  %1289 = vmatpush1.msra.mxu0 0.0
  %1290 = vmatprep.subr.mxu0 0.0
  %1291 = vmatpush1.msra.mxu0 0.0
  %1292 = vmatprep.subr.mxu0 0.0
  %1293 = vmatpush1.msra.mxu0 0.0
  %1294 = vmatprep.subr.mxu0 0.0
  %1295 = vmatpush1.msra.mxu0 0.0
  %1296 = vmatprep.subr.mxu0 0.0
  %1297 = vmatpush1.msra.mxu0 0.0
  %1298 = vmatprep.subr.mxu0 0.0
  %1299 = vmatpush1.msra.mxu0 0.0
  %1300 = vmatprep.subr.mxu0 0.0
  %1301 = vmatpush1.msra.mxu0 0.0
  %1302 = vmatprep.subr.mxu0 0.0
  %1303 = vmatpush1.msra.mxu0 0.0
  %1304 = vmatprep.subr.mxu0 0.0
  %1305 = vmatpush1.msra.mxu0 0.0
  %1306 = vmatprep.subr.mxu0 0.0
  %1307 = vmatpush1.msra.mxu0 0.0
  %1308 = vmatprep.subr.mxu0 0.0
  %1309 = vmatpush1.msra.mxu0 0.0
  %1310 = vmatprep.subr.mxu0 0.0
  %1311 = vmatpush1.msra.mxu0 0.0
  %1312 = vmatprep.subr.mxu0 0.0
  %1313 = vmatpush1.msra.mxu0 0.0
  %1314 = vmatprep.subr.mxu0 0.0
  %1315 = vmatpush1.msra.mxu0 0.0
  %1316 = vmatprep.subr.mxu0 0.0
  %v1317 = vand.u32 %v231, 4294901760
  %v1318 = vsub.f32 %v231, %v1317
  %v1319 = vand.u32 %v1318, 4294901760
  %1320 = vmatpush1.msra.mxu0 %v1319
  %1321 = vmatprep.subr.mxu0 0.0
  %v1322 = vand.u32 %v230, 4294901760
  %v1323 = vsub.f32 %v230, %v1322
  %v1324 = vand.u32 %v1323, 4294901760
  %1325 = vmatpush1.msra.mxu0 %v1324
  %1326 = vmatprep.subr.mxu0 0.0
  %1327 = vmatpush2.msra.mxu0 0.0
  %1328 = vmatprep.subr.mxu0 0.0
  %1329 = vmatpush2.msra.mxu0 0.0
  %1330 = vmatprep.subr.mxu0 0.0
  %1331 = vmatpush2.msra.mxu0 0.0
  %1332 = vmatprep.subr.mxu0 0.0
  %1333 = vmatpush2.msra.mxu0 0.0
  %1334 = vmatprep.subr.mxu0 0.0
  %1335 = vmatpush2.msra.mxu0 0.0
  %1336 = vmatprep.subr.mxu0 0.0
  %1337 = vmatpush2.msra.mxu0 0.0
  %1338 = vmatprep.subr.mxu0 0.0
  %1339 = vmatpush2.msra.mxu0 0.0
  %1340 = vmatprep.subr.mxu0 0.0
  %1341 = vmatpush2.msra.mxu0 0.0
  %1342 = vmatprep.subr.mxu0 0.0
  %1343 = vmatpush2.msra.mxu0 0.0
  %1344 = vmatprep.subr.mxu0 0.0
  %1345 = vmatpush2.msra.mxu0 0.0
  %1346 = vmatprep.subr.mxu0 0.0
  %1347 = vmatpush2.msra.mxu0 0.0
  %1348 = vmatprep.subr.mxu0 0.0
  %1349 = vmatpush2.msra.mxu0 0.0
  %1350 = vmatprep.subr.mxu0 0.0
  %1351 = vmatpush2.msra.mxu0 0.0
  %1352 = vmatprep.subr.mxu0 0.0
  %1353 = vmatpush2.msra.mxu0 0.0
  %1354 = vmatprep.subr.mxu0 0.0
  %1355 = vmatpush2.msra.mxu0 0.0
  %1356 = vmatprep.subr.mxu0 0.0
  %1357 = vmatpush2.msra.mxu0 0.0
  %1358 = vmatprep.mubr.f32.mxu0 0.0
  %v1359 = vand.u32 %v943, 4294901760
  %1360 = vmatmul.mubr.f32.gmra.mxu0 %v1359
  %v1361 = vpop.f32.mrf.mxu0
  %v1362 = vadd.f32 %v1277, %v1361
  %v1363 = vpop.f32.mrf.mxu0
  %1364 = vmatprep.mubr.f32.mxu0 0.0
  %v1365 = vand.u32 %v946, 4294901760
  %1366 = vmatmul.mubr.f32.gmra.mxu0 %v1365
  %v1367 = vpop.f32.mrf.mxu0
  %v1368 = vadd.f32 %v1285, %v1367
  %v1369 = vpop.f32.mrf.mxu0
  %1370 = vdwg.mxu0
  %1371 = vmatprep.subr.mxu0 0.0
  %1372 = vmatpush1.msra.mxu0 0.0
  %1373 = vmatprep.subr.mxu0 0.0
  %1374 = vmatpush1.msra.mxu0 0.0
  %1375 = vmatprep.subr.mxu0 0.0
  %1376 = vmatpush1.msra.mxu0 0.0
  %1377 = vmatprep.subr.mxu0 0.0
  %1378 = vmatpush1.msra.mxu0 0.0
  %1379 = vmatprep.subr.mxu0 0.0
  %1380 = vmatpush1.msra.mxu0 0.0
  %1381 = vmatprep.subr.mxu0 0.0
  %1382 = vmatpush1.msra.mxu0 0.0
  %1383 = vmatprep.subr.mxu0 0.0
  %1384 = vmatpush1.msra.mxu0 0.0
  %1385 = vmatprep.subr.mxu0 0.0
  %1386 = vmatpush1.msra.mxu0 0.0
  %1387 = vmatprep.subr.mxu0 0.0
  %1388 = vmatpush1.msra.mxu0 0.0
  %1389 = vmatprep.subr.mxu0 0.0
  %1390 = vmatpush1.msra.mxu0 0.0
  %1391 = vmatprep.subr.mxu0 0.0
  %1392 = vmatpush1.msra.mxu0 0.0
  %1393 = vmatprep.subr.mxu0 0.0
  %1394 = vmatpush1.msra.mxu0 0.0
  %1395 = vmatprep.subr.mxu0 0.0
  %1396 = vmatpush1.msra.mxu0 0.0
  %1397 = vmatprep.subr.mxu0 0.0
  %1398 = vmatpush1.msra.mxu0 0.0
  %1399 = vmatprep.subr.mxu0 0.0
  %v1400 = vand.u32 %v231, 4294901760
  %1401 = vmatpush1.msra.mxu0 %v1400
  %1402 = vmatprep.subr.mxu0 0.0
  %v1403 = vand.u32 %v230, 4294901760
  %1404 = vmatpush1.msra.mxu0 %v1403
  %1405 = vmatprep.subr.mxu0 0.0
  %1406 = vmatpush2.msra.mxu0 0.0
  %1407 = vmatprep.subr.mxu0 0.0
  %1408 = vmatpush2.msra.mxu0 0.0
  %1409 = vmatprep.subr.mxu0 0.0
  %1410 = vmatpush2.msra.mxu0 0.0
  %1411 = vmatprep.subr.mxu0 0.0
  %1412 = vmatpush2.msra.mxu0 0.0
  %1413 = vmatprep.subr.mxu0 0.0
  %1414 = vmatpush2.msra.mxu0 0.0
  %1415 = vmatprep.subr.mxu0 0.0
  %1416 = vmatpush2.msra.mxu0 0.0
  %1417 = vmatprep.subr.mxu0 0.0
  %1418 = vmatpush2.msra.mxu0 0.0
  %1419 = vmatprep.subr.mxu0 0.0
  %1420 = vmatpush2.msra.mxu0 0.0
  %1421 = vmatprep.subr.mxu0 0.0
  %1422 = vmatpush2.msra.mxu0 0.0
  %1423 = vmatprep.subr.mxu0 0.0
  %1424 = vmatpush2.msra.mxu0 0.0
  %1425 = vmatprep.subr.mxu0 0.0
  %1426 = vmatpush2.msra.mxu0 0.0
  %1427 = vmatprep.subr.mxu0 0.0
  %1428 = vmatpush2.msra.mxu0 0.0
  %1429 = vmatprep.subr.mxu0 0.0
  %1430 = vmatpush2.msra.mxu0 0.0
  %1431 = vmatprep.subr.mxu0 0.0
  %1432 = vmatpush2.msra.mxu0 0.0
  %1433 = vmatprep.subr.mxu0 0.0
  %1434 = vmatpush2.msra.mxu0 0.0
  %1435 = vmatprep.subr.mxu0 0.0
  %1436 = vmatpush2.msra.mxu0 0.0
  %1437 = vmatprep.mubr.f32.mxu0 0.0
  %v1438 = vand.u32 %v943, 4294901760
  %1439 = vmatmul.mubr.f32.gmra.mxu0 %v1438
  %v1440 = vpop.f32.mrf.mxu0
  %v1441 = vadd.f32 %v1362, %v1440
  %v1442 = vpop.f32.mrf.mxu0
  %1443 = vmatprep.mubr.f32.mxu0 0.0
  %v1444 = vand.u32 %v946, 4294901760
  %1445 = vmatmul.mubr.f32.gmra.mxu0 %v1444
  %v1446 = vpop.f32.mrf.mxu0
  %v1447 = vadd.f32 %v1368, %v1446
  %v1448 = vpop.f32.mrf.mxu0
  %1449 = vdwg.mxu0
  %v1451 = vsel %vm433, %v15, 0
  %v1454 = vsel %vm433, %v16, 0
  %1456 = vmatprep.subr.mxu0 0.0
  %1457 = vmatpush1.msra.mxu0 0.0
  %1458 = vmatprep.subr.mxu0 0.0
  %1459 = vmatpush1.msra.mxu0 0.0
  %1460 = vmatprep.subr.mxu0 0.0
  %1461 = vmatpush1.msra.mxu0 0.0
  %1462 = vmatprep.subr.mxu0 0.0
  %1463 = vmatpush1.msra.mxu0 0.0
  %1464 = vmatprep.subr.mxu0 0.0
  %1465 = vmatpush1.msra.mxu0 0.0
  %1466 = vmatprep.subr.mxu0 0.0
  %1467 = vmatpush1.msra.mxu0 0.0
  %1468 = vmatprep.subr.mxu0 0.0
  %1469 = vmatpush1.msra.mxu0 0.0
  %1470 = vmatprep.subr.mxu0 0.0
  %1471 = vmatpush1.msra.mxu0 0.0
  %1472 = vmatprep.subr.mxu0 0.0
  %1473 = vmatpush1.msra.mxu0 0.0
  %1474 = vmatprep.subr.mxu0 0.0
  %1475 = vmatpush1.msra.mxu0 0.0
  %1476 = vmatprep.subr.mxu0 0.0
  %1477 = vmatpush1.msra.mxu0 0.0
  %1478 = vmatprep.subr.mxu0 0.0
  %1479 = vmatpush1.msra.mxu0 0.0
  %1480 = vmatprep.subr.mxu0 0.0
  %1481 = vmatpush1.msra.mxu0 0.0
  %1482 = vmatprep.subr.mxu0 0.0
  %1483 = vmatpush1.msra.mxu0 0.0
  %1484 = vmatprep.subr.mxu0 0.0
  %v1485 = vand.u32 %v233, 4294901760
  %1486 = vmatpush1.msra.mxu0 %v1485
  %1487 = vmatprep.subr.mxu0 0.0
  %v1488 = vand.u32 %v232, 4294901760
  %1489 = vmatpush1.msra.mxu0 %v1488
  %1490 = vmatprep.subr.mxu0 0.0
  %1491 = vmatpush2.msra.mxu0 0.0
  %1492 = vmatprep.subr.mxu0 0.0
  %1493 = vmatpush2.msra.mxu0 0.0
  %1494 = vmatprep.subr.mxu0 0.0
  %1495 = vmatpush2.msra.mxu0 0.0
  %1496 = vmatprep.subr.mxu0 0.0
  %1497 = vmatpush2.msra.mxu0 0.0
  %1498 = vmatprep.subr.mxu0 0.0
  %1499 = vmatpush2.msra.mxu0 0.0
  %1500 = vmatprep.subr.mxu0 0.0
  %1501 = vmatpush2.msra.mxu0 0.0
  %1502 = vmatprep.subr.mxu0 0.0
  %1503 = vmatpush2.msra.mxu0 0.0
  %1504 = vmatprep.subr.mxu0 0.0
  %1505 = vmatpush2.msra.mxu0 0.0
  %1506 = vmatprep.subr.mxu0 0.0
  %1507 = vmatpush2.msra.mxu0 0.0
  %1508 = vmatprep.subr.mxu0 0.0
  %1509 = vmatpush2.msra.mxu0 0.0
  %1510 = vmatprep.subr.mxu0 0.0
  %1511 = vmatpush2.msra.mxu0 0.0
  %1512 = vmatprep.subr.mxu0 0.0
  %1513 = vmatpush2.msra.mxu0 0.0
  %1514 = vmatprep.subr.mxu0 0.0
  %1515 = vmatpush2.msra.mxu0 0.0
  %1516 = vmatprep.subr.mxu0 0.0
  %1517 = vmatpush2.msra.mxu0 0.0
  %1518 = vmatprep.subr.mxu0 0.0
  %1519 = vmatpush2.msra.mxu0 0.0
  %1520 = vmatprep.subr.mxu0 0.0
  %1521 = vmatpush2.msra.mxu0 0.0
  %1522 = vmatprep.mubr.f32.mxu0 0.0
  %v1523 = vand.u32 %v1451, 4294901760
  %v1524 = vsub.f32 %v1451, %v1523
  %v1525 = vand.u32 %v1524, 4294901760
  %v1526 = vsub.f32 %v1524, %v1525
  %v1527 = vand.u32 %v1526, 4294901760
  %1528 = vmatmul.mubr.f32.gmra.mxu0 %v1527
  %v1529 = vpop.f32.mrf.mxu0
  %v1530 = vadd.f32 0.0, %v1529
  %v1531 = vpop.f32.mrf.mxu0
  %1532 = vmatprep.mubr.f32.mxu0 0.0
  %v1533 = vand.u32 %v1454, 4294901760
  %v1534 = vsub.f32 %v1454, %v1533
  %v1535 = vand.u32 %v1534, 4294901760
  %v1536 = vsub.f32 %v1534, %v1535
  %v1537 = vand.u32 %v1536, 4294901760
  %1538 = vmatmul.mubr.f32.gmra.mxu0 %v1537
  %v1539 = vpop.f32.mrf.mxu0
  %v1540 = vadd.f32 0.0, %v1539
  %v1541 = vpop.f32.mrf.mxu0
  %1542 = vdwg.mxu0
  %1543 = vmatprep.subr.mxu0 0.0
  %1544 = vmatpush1.msra.mxu0 0.0
  %1545 = vmatprep.subr.mxu0 0.0
  %1546 = vmatpush1.msra.mxu0 0.0
  %1547 = vmatprep.subr.mxu0 0.0
  %1548 = vmatpush1.msra.mxu0 0.0
  %1549 = vmatprep.subr.mxu0 0.0
  %1550 = vmatpush1.msra.mxu0 0.0
  %1551 = vmatprep.subr.mxu0 0.0
  %1552 = vmatpush1.msra.mxu0 0.0
  %1553 = vmatprep.subr.mxu0 0.0
  %1554 = vmatpush1.msra.mxu0 0.0
  %1555 = vmatprep.subr.mxu0 0.0
  %1556 = vmatpush1.msra.mxu0 0.0
  %1557 = vmatprep.subr.mxu0 0.0
  %1558 = vmatpush1.msra.mxu0 0.0
  %1559 = vmatprep.subr.mxu0 0.0
  %1560 = vmatpush1.msra.mxu0 0.0
  %1561 = vmatprep.subr.mxu0 0.0
  %1562 = vmatpush1.msra.mxu0 0.0
  %1563 = vmatprep.subr.mxu0 0.0
  %1564 = vmatpush1.msra.mxu0 0.0
  %1565 = vmatprep.subr.mxu0 0.0
  %1566 = vmatpush1.msra.mxu0 0.0
  %1567 = vmatprep.subr.mxu0 0.0
  %1568 = vmatpush1.msra.mxu0 0.0
  %1569 = vmatprep.subr.mxu0 0.0
  %1570 = vmatpush1.msra.mxu0 0.0
  %1571 = vmatprep.subr.mxu0 0.0
  %v1572 = vand.u32 %v233, 4294901760
  %v1573 = vsub.f32 %v233, %v1572
  %v1574 = vand.u32 %v1573, 4294901760
  %v1575 = vsub.f32 %v1573, %v1574
  %v1576 = vand.u32 %v1575, 4294901760
  %1577 = vmatpush1.msra.mxu0 %v1576
  %1578 = vmatprep.subr.mxu0 0.0
  %v1579 = vand.u32 %v232, 4294901760
  %v1580 = vsub.f32 %v232, %v1579
  %v1581 = vand.u32 %v1580, 4294901760
  %v1582 = vsub.f32 %v1580, %v1581
  %v1583 = vand.u32 %v1582, 4294901760
  %1584 = vmatpush1.msra.mxu0 %v1583
  %1585 = vmatprep.subr.mxu0 0.0
  %1586 = vmatpush2.msra.mxu0 0.0
  %1587 = vmatprep.subr.mxu0 0.0
  %1588 = vmatpush2.msra.mxu0 0.0
  %1589 = vmatprep.subr.mxu0 0.0
  %1590 = vmatpush2.msra.mxu0 0.0
  %1591 = vmatprep.subr.mxu0 0.0
  %1592 = vmatpush2.msra.mxu0 0.0
  %1593 = vmatprep.subr.mxu0 0.0
  %1594 = vmatpush2.msra.mxu0 0.0
  %1595 = vmatprep.subr.mxu0 0.0
  %1596 = vmatpush2.msra.mxu0 0.0
  %1597 = vmatprep.subr.mxu0 0.0
  %1598 = vmatpush2.msra.mxu0 0.0
  %1599 = vmatprep.subr.mxu0 0.0
  %1600 = vmatpush2.msra.mxu0 0.0
  %1601 = vmatprep.subr.mxu0 0.0
  %1602 = vmatpush2.msra.mxu0 0.0
  %1603 = vmatprep.subr.mxu0 0.0
  %1604 = vmatpush2.msra.mxu0 0.0
  %1605 = vmatprep.subr.mxu0 0.0
  %1606 = vmatpush2.msra.mxu0 0.0
  %1607 = vmatprep.subr.mxu0 0.0
  %1608 = vmatpush2.msra.mxu0 0.0
  %1609 = vmatprep.subr.mxu0 0.0
  %1610 = vmatpush2.msra.mxu0 0.0
  %1611 = vmatprep.subr.mxu0 0.0
  %1612 = vmatpush2.msra.mxu0 0.0
  %1613 = vmatprep.subr.mxu0 0.0
  %1614 = vmatpush2.msra.mxu0 0.0
  %1615 = vmatprep.subr.mxu0 0.0
  %1616 = vmatpush2.msra.mxu0 0.0
  %1617 = vmatprep.mubr.f32.mxu0 0.0
  %v1618 = vand.u32 %v1451, 4294901760
  %1619 = vmatmul.mubr.f32.gmra.mxu0 %v1618
  %v1620 = vpop.f32.mrf.mxu0
  %v1621 = vadd.f32 %v1530, %v1620
  %v1622 = vpop.f32.mrf.mxu0
  %1623 = vmatprep.mubr.f32.mxu0 0.0
  %v1624 = vand.u32 %v1454, 4294901760
  %1625 = vmatmul.mubr.f32.gmra.mxu0 %v1624
  %v1626 = vpop.f32.mrf.mxu0
  %v1627 = vadd.f32 %v1540, %v1626
  %v1628 = vpop.f32.mrf.mxu0
  %1629 = vdwg.mxu0
  %1630 = vmatprep.subr.mxu0 0.0
  %1631 = vmatpush1.msra.mxu0 0.0
  %1632 = vmatprep.subr.mxu0 0.0
  %1633 = vmatpush1.msra.mxu0 0.0
  %1634 = vmatprep.subr.mxu0 0.0
  %1635 = vmatpush1.msra.mxu0 0.0
  %1636 = vmatprep.subr.mxu0 0.0
  %1637 = vmatpush1.msra.mxu0 0.0
  %1638 = vmatprep.subr.mxu0 0.0
  %1639 = vmatpush1.msra.mxu0 0.0
  %1640 = vmatprep.subr.mxu0 0.0
  %1641 = vmatpush1.msra.mxu0 0.0
  %1642 = vmatprep.subr.mxu0 0.0
  %1643 = vmatpush1.msra.mxu0 0.0
  %1644 = vmatprep.subr.mxu0 0.0
  %1645 = vmatpush1.msra.mxu0 0.0
  %1646 = vmatprep.subr.mxu0 0.0
  %1647 = vmatpush1.msra.mxu0 0.0
  %1648 = vmatprep.subr.mxu0 0.0
  %1649 = vmatpush1.msra.mxu0 0.0
  %1650 = vmatprep.subr.mxu0 0.0
  %1651 = vmatpush1.msra.mxu0 0.0
  %1652 = vmatprep.subr.mxu0 0.0
  %1653 = vmatpush1.msra.mxu0 0.0
  %1654 = vmatprep.subr.mxu0 0.0
  %1655 = vmatpush1.msra.mxu0 0.0
  %1656 = vmatprep.subr.mxu0 0.0
  %1657 = vmatpush1.msra.mxu0 0.0
  %1658 = vmatprep.subr.mxu0 0.0
  %v1659 = vand.u32 %v233, 4294901760
  %v1660 = vsub.f32 %v233, %v1659
  %1661 = vmatpush1.msra.mxu0 %v1660
  %1662 = vmatprep.subr.mxu0 0.0
  %v1663 = vand.u32 %v232, 4294901760
  %v1664 = vsub.f32 %v232, %v1663
  %1665 = vmatpush1.msra.mxu0 %v1664
  %1666 = vmatprep.subr.mxu0 0.0
  %1667 = vmatpush2.msra.mxu0 0.0
  %1668 = vmatprep.subr.mxu0 0.0
  %1669 = vmatpush2.msra.mxu0 0.0
  %1670 = vmatprep.subr.mxu0 0.0
  %1671 = vmatpush2.msra.mxu0 0.0
  %1672 = vmatprep.subr.mxu0 0.0
  %1673 = vmatpush2.msra.mxu0 0.0
  %1674 = vmatprep.subr.mxu0 0.0
  %1675 = vmatpush2.msra.mxu0 0.0
  %1676 = vmatprep.subr.mxu0 0.0
  %1677 = vmatpush2.msra.mxu0 0.0
  %1678 = vmatprep.subr.mxu0 0.0
  %1679 = vmatpush2.msra.mxu0 0.0
  %1680 = vmatprep.subr.mxu0 0.0
  %1681 = vmatpush2.msra.mxu0 0.0
  %1682 = vmatprep.subr.mxu0 0.0
  %1683 = vmatpush2.msra.mxu0 0.0
  %1684 = vmatprep.subr.mxu0 0.0
  %1685 = vmatpush2.msra.mxu0 0.0
  %1686 = vmatprep.subr.mxu0 0.0
  %1687 = vmatpush2.msra.mxu0 0.0
  %1688 = vmatprep.subr.mxu0 0.0
  %1689 = vmatpush2.msra.mxu0 0.0
  %1690 = vmatprep.subr.mxu0 0.0
  %1691 = vmatpush2.msra.mxu0 0.0
  %1692 = vmatprep.subr.mxu0 0.0
  %1693 = vmatpush2.msra.mxu0 0.0
  %1694 = vmatprep.subr.mxu0 0.0
  %1695 = vmatpush2.msra.mxu0 0.0
  %1696 = vmatprep.subr.mxu0 0.0
  %1697 = vmatpush2.msra.mxu0 0.0
  %1698 = vmatprep.mubr.f32.mxu0 0.0
  %v1699 = vand.u32 %v1451, 4294901760
  %v1700 = vsub.f32 %v1451, %v1699
  %1701 = vmatmul.mubr.f32.gmra.mxu0 %v1700
  %v1702 = vpop.f32.mrf.mxu0
  %v1703 = vadd.f32 %v1621, %v1702
  %v1704 = vpop.f32.mrf.mxu0
  %1705 = vmatprep.mubr.f32.mxu0 0.0
  %v1706 = vand.u32 %v1454, 4294901760
  %v1707 = vsub.f32 %v1454, %v1706
  %1708 = vmatmul.mubr.f32.gmra.mxu0 %v1707
  %v1709 = vpop.f32.mrf.mxu0
  %v1710 = vadd.f32 %v1627, %v1709
  %v1711 = vpop.f32.mrf.mxu0
  %1712 = vdwg.mxu0
  %1713 = vmatprep.subr.mxu0 0.0
  %1714 = vmatpush1.msra.mxu0 0.0
  %1715 = vmatprep.subr.mxu0 0.0
  %1716 = vmatpush1.msra.mxu0 0.0
  %1717 = vmatprep.subr.mxu0 0.0
  %1718 = vmatpush1.msra.mxu0 0.0
  %1719 = vmatprep.subr.mxu0 0.0
  %1720 = vmatpush1.msra.mxu0 0.0
  %1721 = vmatprep.subr.mxu0 0.0
  %1722 = vmatpush1.msra.mxu0 0.0
  %1723 = vmatprep.subr.mxu0 0.0
  %1724 = vmatpush1.msra.mxu0 0.0
  %1725 = vmatprep.subr.mxu0 0.0
  %1726 = vmatpush1.msra.mxu0 0.0
  %1727 = vmatprep.subr.mxu0 0.0
  %1728 = vmatpush1.msra.mxu0 0.0
  %1729 = vmatprep.subr.mxu0 0.0
  %1730 = vmatpush1.msra.mxu0 0.0
  %1731 = vmatprep.subr.mxu0 0.0
  %1732 = vmatpush1.msra.mxu0 0.0
  %1733 = vmatprep.subr.mxu0 0.0
  %1734 = vmatpush1.msra.mxu0 0.0
  %1735 = vmatprep.subr.mxu0 0.0
  %1736 = vmatpush1.msra.mxu0 0.0
  %1737 = vmatprep.subr.mxu0 0.0
  %1738 = vmatpush1.msra.mxu0 0.0
  %1739 = vmatprep.subr.mxu0 0.0
  %1740 = vmatpush1.msra.mxu0 0.0
  %1741 = vmatprep.subr.mxu0 0.0
  %v1742 = vand.u32 %v233, 4294901760
  %1743 = vmatpush1.msra.mxu0 %v1742
  %1744 = vmatprep.subr.mxu0 0.0
  %v1745 = vand.u32 %v232, 4294901760
  %1746 = vmatpush1.msra.mxu0 %v1745
  %1747 = vmatprep.subr.mxu0 0.0
  %1748 = vmatpush2.msra.mxu0 0.0
  %1749 = vmatprep.subr.mxu0 0.0
  %1750 = vmatpush2.msra.mxu0 0.0
  %1751 = vmatprep.subr.mxu0 0.0
  %1752 = vmatpush2.msra.mxu0 0.0
  %1753 = vmatprep.subr.mxu0 0.0
  %1754 = vmatpush2.msra.mxu0 0.0
  %1755 = vmatprep.subr.mxu0 0.0
  %1756 = vmatpush2.msra.mxu0 0.0
  %1757 = vmatprep.subr.mxu0 0.0
  %1758 = vmatpush2.msra.mxu0 0.0
  %1759 = vmatprep.subr.mxu0 0.0
  %1760 = vmatpush2.msra.mxu0 0.0
  %1761 = vmatprep.subr.mxu0 0.0
  %1762 = vmatpush2.msra.mxu0 0.0
  %1763 = vmatprep.subr.mxu0 0.0
  %1764 = vmatpush2.msra.mxu0 0.0
  %1765 = vmatprep.subr.mxu0 0.0
  %1766 = vmatpush2.msra.mxu0 0.0
  %1767 = vmatprep.subr.mxu0 0.0
  %1768 = vmatpush2.msra.mxu0 0.0
  %1769 = vmatprep.subr.mxu0 0.0
  %1770 = vmatpush2.msra.mxu0 0.0
  %1771 = vmatprep.subr.mxu0 0.0
  %1772 = vmatpush2.msra.mxu0 0.0
  %1773 = vmatprep.subr.mxu0 0.0
  %1774 = vmatpush2.msra.mxu0 0.0
  %1775 = vmatprep.subr.mxu0 0.0
  %1776 = vmatpush2.msra.mxu0 0.0
  %1777 = vmatprep.subr.mxu0 0.0
  %1778 = vmatpush2.msra.mxu0 0.0
  %1779 = vmatprep.mubr.f32.mxu0 0.0
  %v1780 = vand.u32 %v1451, 4294901760
  %v1781 = vsub.f32 %v1451, %v1780
  %v1782 = vand.u32 %v1781, 4294901760
  %1783 = vmatmul.mubr.f32.gmra.mxu0 %v1782
  %v1784 = vpop.f32.mrf.mxu0
  %v1785 = vadd.f32 %v1703, %v1784
  %v1786 = vpop.f32.mrf.mxu0
  %1787 = vmatprep.mubr.f32.mxu0 0.0
  %v1788 = vand.u32 %v1454, 4294901760
  %v1789 = vsub.f32 %v1454, %v1788
  %v1790 = vand.u32 %v1789, 4294901760
  %1791 = vmatmul.mubr.f32.gmra.mxu0 %v1790
  %v1792 = vpop.f32.mrf.mxu0
  %v1793 = vadd.f32 %v1710, %v1792
  %v1794 = vpop.f32.mrf.mxu0
  %1795 = vdwg.mxu0
  %1796 = vmatprep.subr.mxu0 0.0
  %1797 = vmatpush1.msra.mxu0 0.0
  %1798 = vmatprep.subr.mxu0 0.0
  %1799 = vmatpush1.msra.mxu0 0.0
  %1800 = vmatprep.subr.mxu0 0.0
  %1801 = vmatpush1.msra.mxu0 0.0
  %1802 = vmatprep.subr.mxu0 0.0
  %1803 = vmatpush1.msra.mxu0 0.0
  %1804 = vmatprep.subr.mxu0 0.0
  %1805 = vmatpush1.msra.mxu0 0.0
  %1806 = vmatprep.subr.mxu0 0.0
  %1807 = vmatpush1.msra.mxu0 0.0
  %1808 = vmatprep.subr.mxu0 0.0
  %1809 = vmatpush1.msra.mxu0 0.0
  %1810 = vmatprep.subr.mxu0 0.0
  %1811 = vmatpush1.msra.mxu0 0.0
  %1812 = vmatprep.subr.mxu0 0.0
  %1813 = vmatpush1.msra.mxu0 0.0
  %1814 = vmatprep.subr.mxu0 0.0
  %1815 = vmatpush1.msra.mxu0 0.0
  %1816 = vmatprep.subr.mxu0 0.0
  %1817 = vmatpush1.msra.mxu0 0.0
  %1818 = vmatprep.subr.mxu0 0.0
  %1819 = vmatpush1.msra.mxu0 0.0
  %1820 = vmatprep.subr.mxu0 0.0
  %1821 = vmatpush1.msra.mxu0 0.0
  %1822 = vmatprep.subr.mxu0 0.0
  %1823 = vmatpush1.msra.mxu0 0.0
  %1824 = vmatprep.subr.mxu0 0.0
  %v1825 = vand.u32 %v233, 4294901760
  %v1826 = vsub.f32 %v233, %v1825
  %v1827 = vand.u32 %v1826, 4294901760
  %1828 = vmatpush1.msra.mxu0 %v1827
  %1829 = vmatprep.subr.mxu0 0.0
  %v1830 = vand.u32 %v232, 4294901760
  %v1831 = vsub.f32 %v232, %v1830
  %v1832 = vand.u32 %v1831, 4294901760
  %1833 = vmatpush1.msra.mxu0 %v1832
  %1834 = vmatprep.subr.mxu0 0.0
  %1835 = vmatpush2.msra.mxu0 0.0
  %1836 = vmatprep.subr.mxu0 0.0
  %1837 = vmatpush2.msra.mxu0 0.0
  %1838 = vmatprep.subr.mxu0 0.0
  %1839 = vmatpush2.msra.mxu0 0.0
  %1840 = vmatprep.subr.mxu0 0.0
  %1841 = vmatpush2.msra.mxu0 0.0
  %1842 = vmatprep.subr.mxu0 0.0
  %1843 = vmatpush2.msra.mxu0 0.0
  %1844 = vmatprep.subr.mxu0 0.0
  %1845 = vmatpush2.msra.mxu0 0.0
  %1846 = vmatprep.subr.mxu0 0.0
  %1847 = vmatpush2.msra.mxu0 0.0
  %1848 = vmatprep.subr.mxu0 0.0
  %1849 = vmatpush2.msra.mxu0 0.0
  %1850 = vmatprep.subr.mxu0 0.0
  %1851 = vmatpush2.msra.mxu0 0.0
  %1852 = vmatprep.subr.mxu0 0.0
  %1853 = vmatpush2.msra.mxu0 0.0
  %1854 = vmatprep.subr.mxu0 0.0
  %1855 = vmatpush2.msra.mxu0 0.0
  %1856 = vmatprep.subr.mxu0 0.0
  %1857 = vmatpush2.msra.mxu0 0.0
  %1858 = vmatprep.subr.mxu0 0.0
  %1859 = vmatpush2.msra.mxu0 0.0
  %1860 = vmatprep.subr.mxu0 0.0
  %1861 = vmatpush2.msra.mxu0 0.0
  %1862 = vmatprep.subr.mxu0 0.0
  %1863 = vmatpush2.msra.mxu0 0.0
  %1864 = vmatprep.subr.mxu0 0.0
  %1865 = vmatpush2.msra.mxu0 0.0
  %1866 = vmatprep.mubr.f32.mxu0 0.0
  %v1867 = vand.u32 %v1451, 4294901760
  %1868 = vmatmul.mubr.f32.gmra.mxu0 %v1867
  %v1869 = vpop.f32.mrf.mxu0
  %v1870 = vadd.f32 %v1785, %v1869
  %v1871 = vpop.f32.mrf.mxu0
  %1872 = vmatprep.mubr.f32.mxu0 0.0
  %v1873 = vand.u32 %v1454, 4294901760
  %1874 = vmatmul.mubr.f32.gmra.mxu0 %v1873
  %v1875 = vpop.f32.mrf.mxu0
  %v1876 = vadd.f32 %v1793, %v1875
  %v1877 = vpop.f32.mrf.mxu0
  %1878 = vdwg.mxu0
  %1879 = vmatprep.subr.mxu0 0.0
  %1880 = vmatpush1.msra.mxu0 0.0
  %1881 = vmatprep.subr.mxu0 0.0
  %1882 = vmatpush1.msra.mxu0 0.0
  %1883 = vmatprep.subr.mxu0 0.0
  %1884 = vmatpush1.msra.mxu0 0.0
  %1885 = vmatprep.subr.mxu0 0.0
  %1886 = vmatpush1.msra.mxu0 0.0
  %1887 = vmatprep.subr.mxu0 0.0
  %1888 = vmatpush1.msra.mxu0 0.0
  %1889 = vmatprep.subr.mxu0 0.0
  %1890 = vmatpush1.msra.mxu0 0.0
  %1891 = vmatprep.subr.mxu0 0.0
  %1892 = vmatpush1.msra.mxu0 0.0
  %1893 = vmatprep.subr.mxu0 0.0
  %1894 = vmatpush1.msra.mxu0 0.0
  %1895 = vmatprep.subr.mxu0 0.0
  %1896 = vmatpush1.msra.mxu0 0.0
  %1897 = vmatprep.subr.mxu0 0.0
  %1898 = vmatpush1.msra.mxu0 0.0
  %1899 = vmatprep.subr.mxu0 0.0
  %1900 = vmatpush1.msra.mxu0 0.0
  %1901 = vmatprep.subr.mxu0 0.0
  %1902 = vmatpush1.msra.mxu0 0.0
  %1903 = vmatprep.subr.mxu0 0.0
  %1904 = vmatpush1.msra.mxu0 0.0
  %1905 = vmatprep.subr.mxu0 0.0
  %1906 = vmatpush1.msra.mxu0 0.0
  %1907 = vmatprep.subr.mxu0 0.0
  %v1908 = vand.u32 %v233, 4294901760
  %1909 = vmatpush1.msra.mxu0 %v1908
  %1910 = vmatprep.subr.mxu0 0.0
  %v1911 = vand.u32 %v232, 4294901760
  %1912 = vmatpush1.msra.mxu0 %v1911
  %1913 = vmatprep.subr.mxu0 0.0
  %1914 = vmatpush2.msra.mxu0 0.0
  %1915 = vmatprep.subr.mxu0 0.0
  %1916 = vmatpush2.msra.mxu0 0.0
  %1917 = vmatprep.subr.mxu0 0.0
  %1918 = vmatpush2.msra.mxu0 0.0
  %1919 = vmatprep.subr.mxu0 0.0
  %1920 = vmatpush2.msra.mxu0 0.0
  %1921 = vmatprep.subr.mxu0 0.0
  %1922 = vmatpush2.msra.mxu0 0.0
  %1923 = vmatprep.subr.mxu0 0.0
  %1924 = vmatpush2.msra.mxu0 0.0
  %1925 = vmatprep.subr.mxu0 0.0
  %1926 = vmatpush2.msra.mxu0 0.0
  %1927 = vmatprep.subr.mxu0 0.0
  %1928 = vmatpush2.msra.mxu0 0.0
  %1929 = vmatprep.subr.mxu0 0.0
  %1930 = vmatpush2.msra.mxu0 0.0
  %1931 = vmatprep.subr.mxu0 0.0
  %1932 = vmatpush2.msra.mxu0 0.0
  %1933 = vmatprep.subr.mxu0 0.0
  %1934 = vmatpush2.msra.mxu0 0.0
  %1935 = vmatprep.subr.mxu0 0.0
  %1936 = vmatpush2.msra.mxu0 0.0
  %1937 = vmatprep.subr.mxu0 0.0
  %1938 = vmatpush2.msra.mxu0 0.0
  %1939 = vmatprep.subr.mxu0 0.0
  %1940 = vmatpush2.msra.mxu0 0.0
  %1941 = vmatprep.subr.mxu0 0.0
  %1942 = vmatpush2.msra.mxu0 0.0
  %1943 = vmatprep.subr.mxu0 0.0
  %1944 = vmatpush2.msra.mxu0 0.0
  %1945 = vmatprep.mubr.f32.mxu0 0.0
  %v1946 = vand.u32 %v1451, 4294901760
  %1947 = vmatmul.mubr.f32.gmra.mxu0 %v1946
  %v1948 = vpop.f32.mrf.mxu0
  %v1949 = vadd.f32 %v1870, %v1948
  %v1950 = vpop.f32.mrf.mxu0
  %1951 = vmatprep.mubr.f32.mxu0 0.0
  %v1952 = vand.u32 %v1454, 4294901760
  %1953 = vmatmul.mubr.f32.gmra.mxu0 %v1952
  %v1954 = vpop.f32.mrf.mxu0
  %v1955 = vadd.f32 %v1876, %v1954
  %v1956 = vpop.f32.mrf.mxu0
  %1957 = vdwg.mxu0
  %v1959 = vsel %vm433, %v17, 0
  %v1962 = vsel %vm433, %v18, 0
  %1964 = vmatprep.subr.mxu0 0.0
  %1965 = vmatpush1.msra.mxu0 0.0
  %1966 = vmatprep.subr.mxu0 0.0
  %1967 = vmatpush1.msra.mxu0 0.0
  %1968 = vmatprep.subr.mxu0 0.0
  %1969 = vmatpush1.msra.mxu0 0.0
  %1970 = vmatprep.subr.mxu0 0.0
  %1971 = vmatpush1.msra.mxu0 0.0
  %1972 = vmatprep.subr.mxu0 0.0
  %1973 = vmatpush1.msra.mxu0 0.0
  %1974 = vmatprep.subr.mxu0 0.0
  %1975 = vmatpush1.msra.mxu0 0.0
  %1976 = vmatprep.subr.mxu0 0.0
  %1977 = vmatpush1.msra.mxu0 0.0
  %1978 = vmatprep.subr.mxu0 0.0
  %1979 = vmatpush1.msra.mxu0 0.0
  %1980 = vmatprep.subr.mxu0 0.0
  %1981 = vmatpush1.msra.mxu0 0.0
  %1982 = vmatprep.subr.mxu0 0.0
  %1983 = vmatpush1.msra.mxu0 0.0
  %1984 = vmatprep.subr.mxu0 0.0
  %1985 = vmatpush1.msra.mxu0 0.0
  %1986 = vmatprep.subr.mxu0 0.0
  %1987 = vmatpush1.msra.mxu0 0.0
  %1988 = vmatprep.subr.mxu0 0.0
  %1989 = vmatpush1.msra.mxu0 0.0
  %1990 = vmatprep.subr.mxu0 0.0
  %1991 = vmatpush1.msra.mxu0 0.0
  %1992 = vmatprep.subr.mxu0 0.0
  %v1993 = vand.u32 %v235, 4294901760
  %1994 = vmatpush1.msra.mxu0 %v1993
  %1995 = vmatprep.subr.mxu0 0.0
  %v1996 = vand.u32 %v234, 4294901760
  %1997 = vmatpush1.msra.mxu0 %v1996
  %1998 = vmatprep.subr.mxu0 0.0
  %1999 = vmatpush2.msra.mxu0 0.0
  %2000 = vmatprep.subr.mxu0 0.0
  %2001 = vmatpush2.msra.mxu0 0.0
  %2002 = vmatprep.subr.mxu0 0.0
  %2003 = vmatpush2.msra.mxu0 0.0
  %2004 = vmatprep.subr.mxu0 0.0
  %2005 = vmatpush2.msra.mxu0 0.0
  %2006 = vmatprep.subr.mxu0 0.0
  %2007 = vmatpush2.msra.mxu0 0.0
  %2008 = vmatprep.subr.mxu0 0.0
  %2009 = vmatpush2.msra.mxu0 0.0
  %2010 = vmatprep.subr.mxu0 0.0
  %2011 = vmatpush2.msra.mxu0 0.0
  %2012 = vmatprep.subr.mxu0 0.0
  %2013 = vmatpush2.msra.mxu0 0.0
  %2014 = vmatprep.subr.mxu0 0.0
  %2015 = vmatpush2.msra.mxu0 0.0
  %2016 = vmatprep.subr.mxu0 0.0
  %2017 = vmatpush2.msra.mxu0 0.0
  %2018 = vmatprep.subr.mxu0 0.0
  %2019 = vmatpush2.msra.mxu0 0.0
  %2020 = vmatprep.subr.mxu0 0.0
  %2021 = vmatpush2.msra.mxu0 0.0
  %2022 = vmatprep.subr.mxu0 0.0
  %2023 = vmatpush2.msra.mxu0 0.0
  %2024 = vmatprep.subr.mxu0 0.0
  %2025 = vmatpush2.msra.mxu0 0.0
  %2026 = vmatprep.subr.mxu0 0.0
  %2027 = vmatpush2.msra.mxu0 0.0
  %2028 = vmatprep.subr.mxu0 0.0
  %2029 = vmatpush2.msra.mxu0 0.0
  %2030 = vmatprep.mubr.f32.mxu0 0.0
  %v2031 = vand.u32 %v1959, 4294901760
  %v2032 = vsub.f32 %v1959, %v2031
  %v2033 = vand.u32 %v2032, 4294901760
  %v2034 = vsub.f32 %v2032, %v2033
  %v2035 = vand.u32 %v2034, 4294901760
  %2036 = vmatmul.mubr.f32.gmra.mxu0 %v2035
  %v2037 = vpop.f32.mrf.mxu0
  %v2038 = vadd.f32 0.0, %v2037
  %v2039 = vpop.f32.mrf.mxu0
  %2040 = vmatprep.mubr.f32.mxu0 0.0
  %v2041 = vand.u32 %v1962, 4294901760
  %v2042 = vsub.f32 %v1962, %v2041
  %v2043 = vand.u32 %v2042, 4294901760
  %v2044 = vsub.f32 %v2042, %v2043
  %v2045 = vand.u32 %v2044, 4294901760
  %2046 = vmatmul.mubr.f32.gmra.mxu0 %v2045
  %v2047 = vpop.f32.mrf.mxu0
  %v2048 = vadd.f32 0.0, %v2047
  %v2049 = vpop.f32.mrf.mxu0
  %2050 = vdwg.mxu0
  %2051 = vmatprep.subr.mxu0 0.0
  %2052 = vmatpush1.msra.mxu0 0.0
  %2053 = vmatprep.subr.mxu0 0.0
  %2054 = vmatpush1.msra.mxu0 0.0
  %2055 = vmatprep.subr.mxu0 0.0
  %2056 = vmatpush1.msra.mxu0 0.0
  %2057 = vmatprep.subr.mxu0 0.0
  %2058 = vmatpush1.msra.mxu0 0.0
  %2059 = vmatprep.subr.mxu0 0.0
  %2060 = vmatpush1.msra.mxu0 0.0
  %2061 = vmatprep.subr.mxu0 0.0
  %2062 = vmatpush1.msra.mxu0 0.0
  %2063 = vmatprep.subr.mxu0 0.0
  %2064 = vmatpush1.msra.mxu0 0.0
  %2065 = vmatprep.subr.mxu0 0.0
  %2066 = vmatpush1.msra.mxu0 0.0
  %2067 = vmatprep.subr.mxu0 0.0
  %2068 = vmatpush1.msra.mxu0 0.0
  %2069 = vmatprep.subr.mxu0 0.0
  %2070 = vmatpush1.msra.mxu0 0.0
  %2071 = vmatprep.subr.mxu0 0.0
  %2072 = vmatpush1.msra.mxu0 0.0
  %2073 = vmatprep.subr.mxu0 0.0
  %2074 = vmatpush1.msra.mxu0 0.0
  %2075 = vmatprep.subr.mxu0 0.0
  %2076 = vmatpush1.msra.mxu0 0.0
  %2077 = vmatprep.subr.mxu0 0.0
  %2078 = vmatpush1.msra.mxu0 0.0
  %2079 = vmatprep.subr.mxu0 0.0
  %v2080 = vand.u32 %v235, 4294901760
  %v2081 = vsub.f32 %v235, %v2080
  %v2082 = vand.u32 %v2081, 4294901760
  %v2083 = vsub.f32 %v2081, %v2082
  %v2084 = vand.u32 %v2083, 4294901760
  %2085 = vmatpush1.msra.mxu0 %v2084
  %2086 = vmatprep.subr.mxu0 0.0
  %v2087 = vand.u32 %v234, 4294901760
  %v2088 = vsub.f32 %v234, %v2087
  %v2089 = vand.u32 %v2088, 4294901760
  %v2090 = vsub.f32 %v2088, %v2089
  %v2091 = vand.u32 %v2090, 4294901760
  %2092 = vmatpush1.msra.mxu0 %v2091
  %2093 = vmatprep.subr.mxu0 0.0
  %2094 = vmatpush2.msra.mxu0 0.0
  %2095 = vmatprep.subr.mxu0 0.0
  %2096 = vmatpush2.msra.mxu0 0.0
  %2097 = vmatprep.subr.mxu0 0.0
  %2098 = vmatpush2.msra.mxu0 0.0
  %2099 = vmatprep.subr.mxu0 0.0
  %2100 = vmatpush2.msra.mxu0 0.0
  %2101 = vmatprep.subr.mxu0 0.0
  %2102 = vmatpush2.msra.mxu0 0.0
  %2103 = vmatprep.subr.mxu0 0.0
  %2104 = vmatpush2.msra.mxu0 0.0
  %2105 = vmatprep.subr.mxu0 0.0
  %2106 = vmatpush2.msra.mxu0 0.0
  %2107 = vmatprep.subr.mxu0 0.0
  %2108 = vmatpush2.msra.mxu0 0.0
  %2109 = vmatprep.subr.mxu0 0.0
  %2110 = vmatpush2.msra.mxu0 0.0
  %2111 = vmatprep.subr.mxu0 0.0
  %2112 = vmatpush2.msra.mxu0 0.0
  %2113 = vmatprep.subr.mxu0 0.0
  %2114 = vmatpush2.msra.mxu0 0.0
  %2115 = vmatprep.subr.mxu0 0.0
  %2116 = vmatpush2.msra.mxu0 0.0
  %2117 = vmatprep.subr.mxu0 0.0
  %2118 = vmatpush2.msra.mxu0 0.0
  %2119 = vmatprep.subr.mxu0 0.0
  %2120 = vmatpush2.msra.mxu0 0.0
  %2121 = vmatprep.subr.mxu0 0.0
  %2122 = vmatpush2.msra.mxu0 0.0
  %2123 = vmatprep.subr.mxu0 0.0
  %2124 = vmatpush2.msra.mxu0 0.0
  %2125 = vmatprep.mubr.f32.mxu0 0.0
  %v2126 = vand.u32 %v1959, 4294901760
  %2127 = vmatmul.mubr.f32.gmra.mxu0 %v2126
  %v2128 = vpop.f32.mrf.mxu0
  %v2129 = vadd.f32 %v2038, %v2128
  %v2130 = vpop.f32.mrf.mxu0
  %2131 = vmatprep.mubr.f32.mxu0 0.0
  %v2132 = vand.u32 %v1962, 4294901760
  %2133 = vmatmul.mubr.f32.gmra.mxu0 %v2132
  %v2134 = vpop.f32.mrf.mxu0
  %v2135 = vadd.f32 %v2048, %v2134
  %v2136 = vpop.f32.mrf.mxu0
  %2137 = vdwg.mxu0
  %2138 = vmatprep.subr.mxu0 0.0
  %2139 = vmatpush1.msra.mxu0 0.0
  %2140 = vmatprep.subr.mxu0 0.0
  %2141 = vmatpush1.msra.mxu0 0.0
  %2142 = vmatprep.subr.mxu0 0.0
  %2143 = vmatpush1.msra.mxu0 0.0
  %2144 = vmatprep.subr.mxu0 0.0
  %2145 = vmatpush1.msra.mxu0 0.0
  %2146 = vmatprep.subr.mxu0 0.0
  %2147 = vmatpush1.msra.mxu0 0.0
  %2148 = vmatprep.subr.mxu0 0.0
  %2149 = vmatpush1.msra.mxu0 0.0
  %2150 = vmatprep.subr.mxu0 0.0
  %2151 = vmatpush1.msra.mxu0 0.0
  %2152 = vmatprep.subr.mxu0 0.0
  %2153 = vmatpush1.msra.mxu0 0.0
  %2154 = vmatprep.subr.mxu0 0.0
  %2155 = vmatpush1.msra.mxu0 0.0
  %2156 = vmatprep.subr.mxu0 0.0
  %2157 = vmatpush1.msra.mxu0 0.0
  %2158 = vmatprep.subr.mxu0 0.0
  %2159 = vmatpush1.msra.mxu0 0.0
  %2160 = vmatprep.subr.mxu0 0.0
  %2161 = vmatpush1.msra.mxu0 0.0
  %2162 = vmatprep.subr.mxu0 0.0
  %2163 = vmatpush1.msra.mxu0 0.0
  %2164 = vmatprep.subr.mxu0 0.0
  %2165 = vmatpush1.msra.mxu0 0.0
  %2166 = vmatprep.subr.mxu0 0.0
  %v2167 = vand.u32 %v235, 4294901760
  %v2168 = vsub.f32 %v235, %v2167
  %2169 = vmatpush1.msra.mxu0 %v2168
  %2170 = vmatprep.subr.mxu0 0.0
  %v2171 = vand.u32 %v234, 4294901760
  %v2172 = vsub.f32 %v234, %v2171
  %2173 = vmatpush1.msra.mxu0 %v2172
  %2174 = vmatprep.subr.mxu0 0.0
  %2175 = vmatpush2.msra.mxu0 0.0
  %2176 = vmatprep.subr.mxu0 0.0
  %2177 = vmatpush2.msra.mxu0 0.0
  %2178 = vmatprep.subr.mxu0 0.0
  %2179 = vmatpush2.msra.mxu0 0.0
  %2180 = vmatprep.subr.mxu0 0.0
  %2181 = vmatpush2.msra.mxu0 0.0
  %2182 = vmatprep.subr.mxu0 0.0
  %2183 = vmatpush2.msra.mxu0 0.0
  %2184 = vmatprep.subr.mxu0 0.0
  %2185 = vmatpush2.msra.mxu0 0.0
  %2186 = vmatprep.subr.mxu0 0.0
  %2187 = vmatpush2.msra.mxu0 0.0
  %2188 = vmatprep.subr.mxu0 0.0
  %2189 = vmatpush2.msra.mxu0 0.0
  %2190 = vmatprep.subr.mxu0 0.0
  %2191 = vmatpush2.msra.mxu0 0.0
  %2192 = vmatprep.subr.mxu0 0.0
  %2193 = vmatpush2.msra.mxu0 0.0
  %2194 = vmatprep.subr.mxu0 0.0
  %2195 = vmatpush2.msra.mxu0 0.0
  %2196 = vmatprep.subr.mxu0 0.0
  %2197 = vmatpush2.msra.mxu0 0.0
  %2198 = vmatprep.subr.mxu0 0.0
  %2199 = vmatpush2.msra.mxu0 0.0
  %2200 = vmatprep.subr.mxu0 0.0
  %2201 = vmatpush2.msra.mxu0 0.0
  %2202 = vmatprep.subr.mxu0 0.0
  %2203 = vmatpush2.msra.mxu0 0.0
  %2204 = vmatprep.subr.mxu0 0.0
  %2205 = vmatpush2.msra.mxu0 0.0
  %2206 = vmatprep.mubr.f32.mxu0 0.0
  %v2207 = vand.u32 %v1959, 4294901760
  %v2208 = vsub.f32 %v1959, %v2207
  %2209 = vmatmul.mubr.f32.gmra.mxu0 %v2208
  %v2210 = vpop.f32.mrf.mxu0
  %v2211 = vadd.f32 %v2129, %v2210
  %v2212 = vpop.f32.mrf.mxu0
  %2213 = vmatprep.mubr.f32.mxu0 0.0
  %v2214 = vand.u32 %v1962, 4294901760
  %v2215 = vsub.f32 %v1962, %v2214
  %2216 = vmatmul.mubr.f32.gmra.mxu0 %v2215
  %v2217 = vpop.f32.mrf.mxu0
  %v2218 = vadd.f32 %v2135, %v2217
  %v2219 = vpop.f32.mrf.mxu0
  %2220 = vdwg.mxu0
  %2221 = vmatprep.subr.mxu0 0.0
  %2222 = vmatpush1.msra.mxu0 0.0
  %2223 = vmatprep.subr.mxu0 0.0
  %2224 = vmatpush1.msra.mxu0 0.0
  %2225 = vmatprep.subr.mxu0 0.0
  %2226 = vmatpush1.msra.mxu0 0.0
  %2227 = vmatprep.subr.mxu0 0.0
  %2228 = vmatpush1.msra.mxu0 0.0
  %2229 = vmatprep.subr.mxu0 0.0
  %2230 = vmatpush1.msra.mxu0 0.0
  %2231 = vmatprep.subr.mxu0 0.0
  %2232 = vmatpush1.msra.mxu0 0.0
  %2233 = vmatprep.subr.mxu0 0.0
  %2234 = vmatpush1.msra.mxu0 0.0
  %2235 = vmatprep.subr.mxu0 0.0
  %2236 = vmatpush1.msra.mxu0 0.0
  %2237 = vmatprep.subr.mxu0 0.0
  %2238 = vmatpush1.msra.mxu0 0.0
  %2239 = vmatprep.subr.mxu0 0.0
  %2240 = vmatpush1.msra.mxu0 0.0
  %2241 = vmatprep.subr.mxu0 0.0
  %2242 = vmatpush1.msra.mxu0 0.0
  %2243 = vmatprep.subr.mxu0 0.0
  %2244 = vmatpush1.msra.mxu0 0.0
  %2245 = vmatprep.subr.mxu0 0.0
  %2246 = vmatpush1.msra.mxu0 0.0
  %2247 = vmatprep.subr.mxu0 0.0
  %2248 = vmatpush1.msra.mxu0 0.0
  %2249 = vmatprep.subr.mxu0 0.0
  %v2250 = vand.u32 %v235, 4294901760
  %2251 = vmatpush1.msra.mxu0 %v2250
  %2252 = vmatprep.subr.mxu0 0.0
  %v2253 = vand.u32 %v234, 4294901760
  %2254 = vmatpush1.msra.mxu0 %v2253
  %2255 = vmatprep.subr.mxu0 0.0
  %2256 = vmatpush2.msra.mxu0 0.0
  %2257 = vmatprep.subr.mxu0 0.0
  %2258 = vmatpush2.msra.mxu0 0.0
  %2259 = vmatprep.subr.mxu0 0.0
  %2260 = vmatpush2.msra.mxu0 0.0
  %2261 = vmatprep.subr.mxu0 0.0
  %2262 = vmatpush2.msra.mxu0 0.0
  %2263 = vmatprep.subr.mxu0 0.0
  %2264 = vmatpush2.msra.mxu0 0.0
  %2265 = vmatprep.subr.mxu0 0.0
  %2266 = vmatpush2.msra.mxu0 0.0
  %2267 = vmatprep.subr.mxu0 0.0
  %2268 = vmatpush2.msra.mxu0 0.0
  %2269 = vmatprep.subr.mxu0 0.0
  %2270 = vmatpush2.msra.mxu0 0.0
  %2271 = vmatprep.subr.mxu0 0.0
  %2272 = vmatpush2.msra.mxu0 0.0
  %2273 = vmatprep.subr.mxu0 0.0
  %2274 = vmatpush2.msra.mxu0 0.0
  %2275 = vmatprep.subr.mxu0 0.0
  %2276 = vmatpush2.msra.mxu0 0.0
  %2277 = vmatprep.subr.mxu0 0.0
  %2278 = vmatpush2.msra.mxu0 0.0
  %2279 = vmatprep.subr.mxu0 0.0
  %2280 = vmatpush2.msra.mxu0 0.0
  %2281 = vmatprep.subr.mxu0 0.0
  %2282 = vmatpush2.msra.mxu0 0.0
  %2283 = vmatprep.subr.mxu0 0.0
  %2284 = vmatpush2.msra.mxu0 0.0
  %2285 = vmatprep.subr.mxu0 0.0
  %2286 = vmatpush2.msra.mxu0 0.0
  %2287 = vmatprep.mubr.f32.mxu0 0.0
  %v2288 = vand.u32 %v1959, 4294901760
  %v2289 = vsub.f32 %v1959, %v2288
  %v2290 = vand.u32 %v2289, 4294901760
  %2291 = vmatmul.mubr.f32.gmra.mxu0 %v2290
  %v2292 = vpop.f32.mrf.mxu0
  %v2293 = vadd.f32 %v2211, %v2292
  %v2294 = vpop.f32.mrf.mxu0
  %2295 = vmatprep.mubr.f32.mxu0 0.0
  %v2296 = vand.u32 %v1962, 4294901760
  %v2297 = vsub.f32 %v1962, %v2296
  %v2298 = vand.u32 %v2297, 4294901760
  %2299 = vmatmul.mubr.f32.gmra.mxu0 %v2298
  %v2300 = vpop.f32.mrf.mxu0
  %v2301 = vadd.f32 %v2218, %v2300
  %v2302 = vpop.f32.mrf.mxu0
  %2303 = vdwg.mxu0
  %2304 = vmatprep.subr.mxu0 0.0
  %2305 = vmatpush1.msra.mxu0 0.0
  %2306 = vmatprep.subr.mxu0 0.0
  %2307 = vmatpush1.msra.mxu0 0.0
  %2308 = vmatprep.subr.mxu0 0.0
  %2309 = vmatpush1.msra.mxu0 0.0
  %2310 = vmatprep.subr.mxu0 0.0
  %2311 = vmatpush1.msra.mxu0 0.0
  %2312 = vmatprep.subr.mxu0 0.0
  %2313 = vmatpush1.msra.mxu0 0.0
  %2314 = vmatprep.subr.mxu0 0.0
  %2315 = vmatpush1.msra.mxu0 0.0
  %2316 = vmatprep.subr.mxu0 0.0
  %2317 = vmatpush1.msra.mxu0 0.0
  %2318 = vmatprep.subr.mxu0 0.0
  %2319 = vmatpush1.msra.mxu0 0.0
  %2320 = vmatprep.subr.mxu0 0.0
  %2321 = vmatpush1.msra.mxu0 0.0
  %2322 = vmatprep.subr.mxu0 0.0
  %2323 = vmatpush1.msra.mxu0 0.0
  %2324 = vmatprep.subr.mxu0 0.0
  %2325 = vmatpush1.msra.mxu0 0.0
  %2326 = vmatprep.subr.mxu0 0.0
  %2327 = vmatpush1.msra.mxu0 0.0
  %2328 = vmatprep.subr.mxu0 0.0
  %2329 = vmatpush1.msra.mxu0 0.0
  %2330 = vmatprep.subr.mxu0 0.0
  %2331 = vmatpush1.msra.mxu0 0.0
  %2332 = vmatprep.subr.mxu0 0.0
  %v2333 = vand.u32 %v235, 4294901760
  %v2334 = vsub.f32 %v235, %v2333
  %v2335 = vand.u32 %v2334, 4294901760
  %2336 = vmatpush1.msra.mxu0 %v2335
  %2337 = vmatprep.subr.mxu0 0.0
  %v2338 = vand.u32 %v234, 4294901760
  %v2339 = vsub.f32 %v234, %v2338
  %v2340 = vand.u32 %v2339, 4294901760
  %2341 = vmatpush1.msra.mxu0 %v2340
  %2342 = vmatprep.subr.mxu0 0.0
  %2343 = vmatpush2.msra.mxu0 0.0
  %2344 = vmatprep.subr.mxu0 0.0
  %2345 = vmatpush2.msra.mxu0 0.0
  %2346 = vmatprep.subr.mxu0 0.0
  %2347 = vmatpush2.msra.mxu0 0.0
  %2348 = vmatprep.subr.mxu0 0.0
  %2349 = vmatpush2.msra.mxu0 0.0
  %2350 = vmatprep.subr.mxu0 0.0
  %2351 = vmatpush2.msra.mxu0 0.0
  %2352 = vmatprep.subr.mxu0 0.0
  %2353 = vmatpush2.msra.mxu0 0.0
  %2354 = vmatprep.subr.mxu0 0.0
  %2355 = vmatpush2.msra.mxu0 0.0
  %2356 = vmatprep.subr.mxu0 0.0
  %2357 = vmatpush2.msra.mxu0 0.0
  %2358 = vmatprep.subr.mxu0 0.0
  %2359 = vmatpush2.msra.mxu0 0.0
  %2360 = vmatprep.subr.mxu0 0.0
  %2361 = vmatpush2.msra.mxu0 0.0
  %2362 = vmatprep.subr.mxu0 0.0
  %2363 = vmatpush2.msra.mxu0 0.0
  %2364 = vmatprep.subr.mxu0 0.0
  %2365 = vmatpush2.msra.mxu0 0.0
  %2366 = vmatprep.subr.mxu0 0.0
  %2367 = vmatpush2.msra.mxu0 0.0
  %2368 = vmatprep.subr.mxu0 0.0
  %2369 = vmatpush2.msra.mxu0 0.0
  %2370 = vmatprep.subr.mxu0 0.0
  %2371 = vmatpush2.msra.mxu0 0.0
  %2372 = vmatprep.subr.mxu0 0.0
  %2373 = vmatpush2.msra.mxu0 0.0
  %2374 = vmatprep.mubr.f32.mxu0 0.0
  %v2375 = vand.u32 %v1959, 4294901760
  %2376 = vmatmul.mubr.f32.gmra.mxu0 %v2375
  %v2377 = vpop.f32.mrf.mxu0
  %v2378 = vadd.f32 %v2293, %v2377
  %v2379 = vpop.f32.mrf.mxu0
  %2380 = vmatprep.mubr.f32.mxu0 0.0
  %v2381 = vand.u32 %v1962, 4294901760
  %2382 = vmatmul.mubr.f32.gmra.mxu0 %v2381
  %v2383 = vpop.f32.mrf.mxu0
  %v2384 = vadd.f32 %v2301, %v2383
  %v2385 = vpop.f32.mrf.mxu0
  %2386 = vdwg.mxu0
  %2387 = vmatprep.subr.mxu0 0.0
  %2388 = vmatpush1.msra.mxu0 0.0
  %2389 = vmatprep.subr.mxu0 0.0
  %2390 = vmatpush1.msra.mxu0 0.0
  %2391 = vmatprep.subr.mxu0 0.0
  %2392 = vmatpush1.msra.mxu0 0.0
  %2393 = vmatprep.subr.mxu0 0.0
  %2394 = vmatpush1.msra.mxu0 0.0
  %2395 = vmatprep.subr.mxu0 0.0
  %2396 = vmatpush1.msra.mxu0 0.0
  %2397 = vmatprep.subr.mxu0 0.0
  %2398 = vmatpush1.msra.mxu0 0.0
  %2399 = vmatprep.subr.mxu0 0.0
  %2400 = vmatpush1.msra.mxu0 0.0
  %2401 = vmatprep.subr.mxu0 0.0
  %2402 = vmatpush1.msra.mxu0 0.0
  %2403 = vmatprep.subr.mxu0 0.0
  %2404 = vmatpush1.msra.mxu0 0.0
  %2405 = vmatprep.subr.mxu0 0.0
  %2406 = vmatpush1.msra.mxu0 0.0
  %2407 = vmatprep.subr.mxu0 0.0
  %2408 = vmatpush1.msra.mxu0 0.0
  %2409 = vmatprep.subr.mxu0 0.0
  %2410 = vmatpush1.msra.mxu0 0.0
  %2411 = vmatprep.subr.mxu0 0.0
  %2412 = vmatpush1.msra.mxu0 0.0
  %2413 = vmatprep.subr.mxu0 0.0
  %2414 = vmatpush1.msra.mxu0 0.0
  %2415 = vmatprep.subr.mxu0 0.0
  %v2416 = vand.u32 %v235, 4294901760
  %2417 = vmatpush1.msra.mxu0 %v2416
  %2418 = vmatprep.subr.mxu0 0.0
  %v2419 = vand.u32 %v234, 4294901760
  %2420 = vmatpush1.msra.mxu0 %v2419
  %2421 = vmatprep.subr.mxu0 0.0
  %2422 = vmatpush2.msra.mxu0 0.0
  %2423 = vmatprep.subr.mxu0 0.0
  %2424 = vmatpush2.msra.mxu0 0.0
  %2425 = vmatprep.subr.mxu0 0.0
  %2426 = vmatpush2.msra.mxu0 0.0
  %2427 = vmatprep.subr.mxu0 0.0
  %2428 = vmatpush2.msra.mxu0 0.0
  %2429 = vmatprep.subr.mxu0 0.0
  %2430 = vmatpush2.msra.mxu0 0.0
  %2431 = vmatprep.subr.mxu0 0.0
  %2432 = vmatpush2.msra.mxu0 0.0
  %2433 = vmatprep.subr.mxu0 0.0
  %2434 = vmatpush2.msra.mxu0 0.0
  %2435 = vmatprep.subr.mxu0 0.0
  %2436 = vmatpush2.msra.mxu0 0.0
  %2437 = vmatprep.subr.mxu0 0.0
  %2438 = vmatpush2.msra.mxu0 0.0
  %2439 = vmatprep.subr.mxu0 0.0
  %2440 = vmatpush2.msra.mxu0 0.0
  %2441 = vmatprep.subr.mxu0 0.0
  %2442 = vmatpush2.msra.mxu0 0.0
  %2443 = vmatprep.subr.mxu0 0.0
  %2444 = vmatpush2.msra.mxu0 0.0
  %2445 = vmatprep.subr.mxu0 0.0
  %2446 = vmatpush2.msra.mxu0 0.0
  %2447 = vmatprep.subr.mxu0 0.0
  %2448 = vmatpush2.msra.mxu0 0.0
  %2449 = vmatprep.subr.mxu0 0.0
  %2450 = vmatpush2.msra.mxu0 0.0
  %2451 = vmatprep.subr.mxu0 0.0
  %2452 = vmatpush2.msra.mxu0 0.0
  %2453 = vmatprep.mubr.f32.mxu0 0.0
  %v2454 = vand.u32 %v1959, 4294901760
  %2455 = vmatmul.mubr.f32.gmra.mxu0 %v2454
  %v2456 = vpop.f32.mrf.mxu0
  %v2457 = vadd.f32 %v2378, %v2456
  %v2458 = vpop.f32.mrf.mxu0
  %2459 = vmatprep.mubr.f32.mxu0 0.0
  %v2460 = vand.u32 %v1962, 4294901760
  %2461 = vmatmul.mubr.f32.gmra.mxu0 %v2460
  %v2462 = vpop.f32.mrf.mxu0
  %v2463 = vadd.f32 %v2384, %v2462
  %v2464 = vpop.f32.mrf.mxu0
  %2465 = vdwg.mxu0
  %v2466 = vmul.f32 %v425, %v933
  %v2467 = vmul.f32 %v426, %v939
  %v2468 = vmul.f32 %v427, %v1441
  %v2469 = vmul.f32 %v428, %v1447
  %v2470 = vmul.f32 %v429, %v1949
  %v2471 = vmul.f32 %v430, %v1955
  %v2472 = vmul.f32 %v431, %v2457
  %v2473 = vmul.f32 %v432, %v2463
  %v2474 = vadd.f32 %v2466, %v2467
  %v2475 = vrot.slane %v2474, 4
  %v2476 = vadd.f32 %v2474, %v2475
  %v2477 = vrot.slane %v2476, 2
  %v2478 = vadd.f32 %v2476, %v2477
  %v2479 = vrot.slane %v2478, 1
  %v2480 = vadd.f32 %v2478, %v2479
  %v2481 = vadd.f32 %v2468, %v2469
  %v2482 = vrot.slane %v2481, 4
  %v2483 = vadd.f32 %v2481, %v2482
  %v2484 = vrot.slane %v2483, 2
  %v2485 = vadd.f32 %v2483, %v2484
  %v2486 = vrot.slane %v2485, 1
  %v2487 = vadd.f32 %v2485, %v2486
  %v2488 = vadd.f32 %v2470, %v2471
  %v2489 = vrot.slane %v2488, 4
  %v2490 = vadd.f32 %v2488, %v2489
  %v2491 = vrot.slane %v2490, 2
  %v2492 = vadd.f32 %v2490, %v2491
  %v2493 = vrot.slane %v2492, 1
  %v2494 = vadd.f32 %v2492, %v2493
  %v2495 = vadd.f32 %v2472, %v2473
  %v2496 = vrot.slane %v2495, 4
  %v2497 = vadd.f32 %v2495, %v2496
  %v2498 = vrot.slane %v2497, 2
  %v2499 = vadd.f32 %v2497, %v2498
  %v2500 = vrot.slane %v2499, 1
  %v2501 = vadd.f32 %v2499, %v2500
  %vm2506 = vcmask 1041409
  %v2507 = vsel %vm2506, %v2487, %v2480
  %vm2508 = vcmask 1042434
  %v2509 = vsel %vm2508, %v2494, %v2507
  %vm2510 = vcmask 1043459
  %v2511 = vsel %vm2510, %v2501, %v2509
  %2513 = vst [vmem:[%s2] sm:$0xf] %v2511
  // Predicated region
  $region10: #{_noise_forward_impl.1} parent=0 // pred_check
    _
  $region11: #{_noise_forward_impl.1} parent=0 // pred_check_branch
    %2515 = sbr.rel (0) target = $region13
  $region12: #{_noise_forward_impl.1} parent=0 // pred_region
    _
  $region13: #{_noise_forward_impl.1} parent=0 // pred_fallthru
    _
  // Predicated region
  $region14: #{_noise_forward_impl.1} parent=0 // pred_check
    _
  $region15: #{_noise_forward_impl.1} parent=0 // pred_check_branch
    %2517 = sbr.rel (0) target = $region17
  $region16: #{_noise_forward_impl.1} parent=0 // pred_region
    _
  $region17: #{_noise_forward_impl.1} parent=0 // pred_fallthru
    _

// kernel: _noise_forward_impl.1
$region0: #{_noise_forward_impl.1}
  #allocation0 [shape = 'u32[]', space=smem, size = 0x4, offset = 0x4, fixed_abs, tag = 'smem constant byte address 0x4 - core index']
  #allocation1 [shape = 'u32[144,128]{1,0:T(1,128)}', space=vmem, size = 0x12000, scoped, tag = 'internal scratch']
  %s0 = inlined_call_operand.vmem [shape: f32[4,256], index: 0, kind: input, shape index: {}]
  %s1 = inlined_call_operand.vmem [shape: f32[2,4,128], index: 1, kind: input, shape index: {}]
  %s2 = inlined_call_operand.vmem [shape: f32[4,128], index: 2, kind: output, shape index: {}]
  %s3 = sld [smem:[#allocation0]]
  $region18: #{_noise_forward_impl.1} parent=0
    _
  %s5 = ssub.s32 1, %s3
  %s6 = scalar_select 0, %s5, %s3
  // Predicated region
  $region2: #{_noise_forward_impl.1} parent=0 // pred_check
    _
  $region3: #{_noise_forward_impl.1} parent=0 // pred_check_branch
    %8 = sbr.rel (0) target = $region5
  $region4: #{_noise_forward_impl.1} parent=0 // pred_region
    _
  $region5: #{_noise_forward_impl.1} parent=0 // pred_fallthru
    _
  // Predicated region
  $region6: #{_noise_forward_impl.1} parent=0 // pred_check
    _
  $region7: #{_noise_forward_impl.1} parent=0 // pred_check_branch
    %10 = sbr.rel (0) target = $region9
  $region8: #{_noise_forward_impl.1} parent=0 // pred_region
    _
  $region9: #{_noise_forward_impl.1} parent=0 // pred_fallthru
    _
  %v11 = vld [vmem:[%s0] sm:$0xff]
  %v12 = vld [vmem:[%s1] sm:$0xf]
  %v13 = vsub.f32 %v12, 0.5
  %s14 = scalar_lea.vmem %s1, 4
  %v15 = vld [vmem:[%s14] sm:$0xf]
  %v16 = vsub.f32 %v15, 0.5
  %v17 = vfloor.f32 %v13
  %v18 = vfloor.f32 %v16
  %v19 = vsub.f32 %v13, %v17
  %v20 = vsub.f32 %v16, %v18
  %v21 = vcvt.f32.s32.to.zero.pseudo %v17
  %v22 = vcvt.f32.s32.to.zero.pseudo %v18
  %v23 = vand.u32 %v21, 15
  %v24 = vadd.s32 %v21, 1
  %v25 = vand.u32 %v24, 15
  %v26 = vand.u32 %v22, 15
  %v27 = vadd.s32 %v22, 1
  %v28 = vand.u32 %v27, 15
  %v29 = vmul.u32 %v26, 16
  %v30 = vadd.s32 %v29, %v23
  %v31 = vadd.s32 %v29, %v25
  %v32 = vmul.u32 %v28, 16
  %v33 = vadd.s32 %v32, %v23
  %v34 = vadd.s32 %v32, %v25
  %v35 = vsub.f32 1.0, %v19
  %v36 = vsub.f32 1.0, %v20
  %v37 = vmul.f32 %v35, %v36
  %v38 = vmul.f32 %v19, %v36
  %v39 = vmul.f32 %v35, %v20
  %v40 = vmul.f32 %v19, %v20
  %v41 = vlaneseq
  %v42 = vand.u32 %v41, 127
  %v43 = vadd.s32 %v42, 128
  %v44 = vlaneseq
  %v45 = vshrl.u32 %v44, 7
  %v46 = vsub.s32 0, %v45
  %v47 = vrot.slane %v30, %v46
  %49 = vbcast.lane.b32.xlu0 %v47, 256
  %v50 = vpop.permute.xlu0 %49
  %s52 = sor.u32 256, 8
  %53 = vbcast.lane.b32.xlu0 %v47, %s52
  %v54 = vpop.permute.xlu0 %53
  %s56 = sor.u32 256, 16
  %57 = vbcast.lane.b32.xlu0 %v47, %s56
  %v58 = vpop.permute.xlu0 %57
  %s60 = sor.u32 256, 24
  %61 = vbcast.lane.b32.xlu0 %v47, %s60
  %v62 = vpop.permute.xlu0 %61
  %s64 = sor.u32 256, 32
  %65 = vbcast.lane.b32.xlu0 %v47, %s64
  %v66 = vpop.permute.xlu0 %65
  %s68 = sor.u32 256, 40
  %69 = vbcast.lane.b32.xlu0 %v47, %s68
  %v70 = vpop.permute.xlu0 %69
  %s72 = sor.u32 256, 48
  %73 = vbcast.lane.b32.xlu0 %v47, %s72
  %v74 = vpop.permute.xlu0 %73
  %s76 = sor.u32 256, 56
  %77 = vbcast.lane.b32.xlu0 %v47, %s76
  %v78 = vpop.permute.xlu0 %77
  %s80 = sor.u32 256, 64
  %81 = vbcast.lane.b32.xlu0 %v47, %s80
  %v82 = vpop.permute.xlu0 %81
  %s84 = sor.u32 256, 72
  %85 = vbcast.lane.b32.xlu0 %v47, %s84
  %v86 = vpop.permute.xlu0 %85
  %s88 = sor.u32 256, 80
  %89 = vbcast.lane.b32.xlu0 %v47, %s88
  %v90 = vpop.permute.xlu0 %89
  %s92 = sor.u32 256, 88
  %93 = vbcast.lane.b32.xlu0 %v47, %s92
  %v94 = vpop.permute.xlu0 %93
  %s96 = sor.u32 256, 96
  %97 = vbcast.lane.b32.xlu0 %v47, %s96
  %v98 = vpop.permute.xlu0 %97
  %s100 = sor.u32 256, 104
  %101 = vbcast.lane.b32.xlu0 %v47, %s100
  %v102 = vpop.permute.xlu0 %101
  %s104 = sor.u32 256, 112
  %105 = vbcast.lane.b32.xlu0 %v47, %s104
  %v106 = vpop.permute.xlu0 %105
  %s108 = sor.u32 256, 120
  %109 = vbcast.lane.b32.xlu0 %v47, %s108
  %v110 = vpop.permute.xlu0 %109
  %v111 = vlaneseq
  %v112 = vshrl.u32 %v111, 7
  %v113 = vsub.s32 1, %v112
  %v114 = vrot.slane %v30, %v113
  %116 = vbcast.lane.b32.xlu0 %v114, 256
  %v117 = vpop.permute.xlu0 %116
  %s119 = sor.u32 256, 8
  %120 = vbcast.lane.b32.xlu0 %v114, %s119
  %v121 = vpop.permute.xlu0 %120
  %s123 = sor.u32 256, 16
  %124 = vbcast.lane.b32.xlu0 %v114, %s123
  %v125 = vpop.permute.xlu0 %124
  %s127 = sor.u32 256, 24
  %128 = vbcast.lane.b32.xlu0 %v114, %s127
  %v129 = vpop.permute.xlu0 %128
  %s131 = sor.u32 256, 32
  %132 = vbcast.lane.b32.xlu0 %v114, %s131
  %v133 = vpop.permute.xlu0 %132
  %s135 = sor.u32 256, 40
  %136 = vbcast.lane.b32.xlu0 %v114, %s135
  %v137 = vpop.permute.xlu0 %136
  %s139 = sor.u32 256, 48
  %140 = vbcast.lane.b32.xlu0 %v114, %s139
  %v141 = vpop.permute.xlu0 %140
  %s143 = sor.u32 256, 56
  %144 = vbcast.lane.b32.xlu0 %v114, %s143
  %v145 = vpop.permute.xlu0 %144
  %s147 = sor.u32 256, 64
  %148 = vbcast.lane.b32.xlu0 %v114, %s147
  %v149 = vpop.permute.xlu0 %148
  %s151 = sor.u32 256, 72
  %152 = vbcast.lane.b32.xlu0 %v114, %s151
  %v153 = vpop.permute.xlu0 %152
  %s155 = sor.u32 256, 80
  %156 = vbcast.lane.b32.xlu0 %v114, %s155
  %v157 = vpop.permute.xlu0 %156
  %s159 = sor.u32 256, 88
  %160 = vbcast.lane.b32.xlu0 %v114, %s159
  %v161 = vpop.permute.xlu0 %160
  %s163 = sor.u32 256, 96
  %164 = vbcast.lane.b32.xlu0 %v114, %s163
  %v165 = vpop.permute.xlu0 %164
  %s167 = sor.u32 256, 104
  %168 = vbcast.lane.b32.xlu0 %v114, %s167
  %v169 = vpop.permute.xlu0 %168
  %s171 = sor.u32 256, 112
  %172 = vbcast.lane.b32.xlu0 %v114, %s171
  %v173 = vpop.permute.xlu0 %172
  %s175 = sor.u32 256, 120
  %176 = vbcast.lane.b32.xlu0 %v114, %s175
  %v177 = vpop.permute.xlu0 %176
  %v178 = vlaneseq
  %v179 = vshrl.u32 %v178, 7
  %v180 = vsub.s32 2, %v179
  %v181 = vrot.slane %v30, %v180
  %183 = vbcast.lane.b32.xlu0 %v181, 256
  %v184 = vpop.permute.xlu0 %183
  %s186 = sor.u32 256, 8
  %187 = vbcast.lane.b32.xlu0 %v181, %s186
  %v188 = vpop.permute.xlu0 %187
  %s190 = sor.u32 256, 16
  %191 = vbcast.lane.b32.xlu0 %v181, %s190
  %v192 = vpop.permute.xlu0 %191
  %s194 = sor.u32 256, 24
  %195 = vbcast.lane.b32.xlu0 %v181, %s194
  %v196 = vpop.permute.xlu0 %195
  %s198 = sor.u32 256, 32
  %199 = vbcast.lane.b32.xlu0 %v181, %s198
  %v200 = vpop.permute.xlu0 %199
  %s202 = sor.u32 256, 40
  %203 = vbcast.lane.b32.xlu0 %v181, %s202
  %v204 = vpop.permute.xlu0 %203
  %s206 = sor.u32 256, 48
  %207 = vbcast.lane.b32.xlu0 %v181, %s206
  %v208 = vpop.permute.xlu0 %207
  %s210 = sor.u32 256, 56
  %211 = vbcast.lane.b32.xlu0 %v181, %s210
  %v212 = vpop.permute.xlu0 %211
  %s214 = sor.u32 256, 64
  %215 = vbcast.lane.b32.xlu0 %v181, %s214
  %v216 = vpop.permute.xlu0 %215
  %s218 = sor.u32 256, 72
  %219 = vbcast.lane.b32.xlu0 %v181, %s218
  %v220 = vpop.permute.xlu0 %219
  %s222 = sor.u32 256, 80
  %223 = vbcast.lane.b32.xlu0 %v181, %s222
  %v224 = vpop.permute.xlu0 %223
  %s226 = sor.u32 256, 88
  %227 = vbcast.lane.b32.xlu0 %v181, %s226
  %v228 = vpop.permute.xlu0 %227
  %s230 = sor.u32 256, 96
  %231 = vbcast.lane.b32.xlu0 %v181, %s230
  %v232 = vpop.permute.xlu0 %231
  %s234 = sor.u32 256, 104
  %235 = vbcast.lane.b32.xlu0 %v181, %s234
  %v236 = vpop.permute.xlu0 %235
  %s238 = sor.u32 256, 112
  %239 = vbcast.lane.b32.xlu0 %v181, %s238
  %v240 = vpop.permute.xlu0 %239
  %s242 = sor.u32 256, 120
  %243 = vbcast.lane.b32.xlu0 %v181, %s242
  %v244 = vpop.permute.xlu0 %243
  %v245 = vlaneseq
  %v246 = vshrl.u32 %v245, 7
  %v247 = vsub.s32 3, %v246
  %v248 = vrot.slane %v30, %v247
  %250 = vbcast.lane.b32.xlu0 %v248, 256
  %v251 = vpop.permute.xlu0 %250
  %s253 = sor.u32 256, 8
  %254 = vbcast.lane.b32.xlu0 %v248, %s253
  %v255 = vpop.permute.xlu0 %254
  %s257 = sor.u32 256, 16
  %258 = vbcast.lane.b32.xlu0 %v248, %s257
  %v259 = vpop.permute.xlu0 %258
  %s261 = sor.u32 256, 24
  %262 = vbcast.lane.b32.xlu0 %v248, %s261
  %v263 = vpop.permute.xlu0 %262
  %s265 = sor.u32 256, 32
  %266 = vbcast.lane.b32.xlu0 %v248, %s265
  %v267 = vpop.permute.xlu0 %266
  %s269 = sor.u32 256, 40
  %270 = vbcast.lane.b32.xlu0 %v248, %s269
  %v271 = vpop.permute.xlu0 %270
  %s273 = sor.u32 256, 48
  %274 = vbcast.lane.b32.xlu0 %v248, %s273
  %v275 = vpop.permute.xlu0 %274
  %s277 = sor.u32 256, 56
  %278 = vbcast.lane.b32.xlu0 %v248, %s277
  %v279 = vpop.permute.xlu0 %278
  %s281 = sor.u32 256, 64
  %282 = vbcast.lane.b32.xlu0 %v248, %s281
  %v283 = vpop.permute.xlu0 %282
  %s285 = sor.u32 256, 72
  %286 = vbcast.lane.b32.xlu0 %v248, %s285
  %v287 = vpop.permute.xlu0 %286
  %s289 = sor.u32 256, 80
  %290 = vbcast.lane.b32.xlu0 %v248, %s289
  %v291 = vpop.permute.xlu0 %290
  %s293 = sor.u32 256, 88
  %294 = vbcast.lane.b32.xlu0 %v248, %s293
  %v295 = vpop.permute.xlu0 %294
  %s297 = sor.u32 256, 96
  %298 = vbcast.lane.b32.xlu0 %v248, %s297
  %v299 = vpop.permute.xlu0 %298
  %s301 = sor.u32 256, 104
  %302 = vbcast.lane.b32.xlu0 %v248, %s301
  %v303 = vpop.permute.xlu0 %302
  %s305 = sor.u32 256, 112
  %306 = vbcast.lane.b32.xlu0 %v248, %s305
  %v307 = vpop.permute.xlu0 %306
  %s309 = sor.u32 256, 120
  %310 = vbcast.lane.b32.xlu0 %v248, %s309
  %v311 = vpop.permute.xlu0 %310
  %vm312 = vcmp.eq.s32.totalorder %v50, %v42
  %vm313 = vcmp.eq.s32.totalorder %v50, %v43
  %vm314 = vcmp.eq.s32.totalorder %v54, %v42
  %vm315 = vcmp.eq.s32.totalorder %v54, %v43
  %vm316 = vcmp.eq.s32.totalorder %v58, %v42
  %vm317 = vcmp.eq.s32.totalorder %v58, %v43
  %vm318 = vcmp.eq.s32.totalorder %v62, %v42
  %vm319 = vcmp.eq.s32.totalorder %v62, %v43
  %vm320 = vcmp.eq.s32.totalorder %v66, %v42
  %vm321 = vcmp.eq.s32.totalorder %v66, %v43
  %vm322 = vcmp.eq.s32.totalorder %v70, %v42
  %vm323 = vcmp.eq.s32.totalorder %v70, %v43
  %vm324 = vcmp.eq.s32.totalorder %v74, %v42
  %vm325 = vcmp.eq.s32.totalorder %v74, %v43
  %vm326 = vcmp.eq.s32.totalorder %v78, %v42
  %vm327 = vcmp.eq.s32.totalorder %v78, %v43
  %vm328 = vcmp.eq.s32.totalorder %v82, %v42
  %vm329 = vcmp.eq.s32.totalorder %v82, %v43
  %vm330 = vcmp.eq.s32.totalorder %v86, %v42
  %vm331 = vcmp.eq.s32.totalorder %v86, %v43
  %vm332 = vcmp.eq.s32.totalorder %v90, %v42
  %vm333 = vcmp.eq.s32.totalorder %v90, %v43
  %vm334 = vcmp.eq.s32.totalorder %v94, %v42
  %vm335 = vcmp.eq.s32.totalorder %v94, %v43
  %vm336 = vcmp.eq.s32.totalorder %v98, %v42
  %vm337 = vcmp.eq.s32.totalorder %v98, %v43
  %vm338 = vcmp.eq.s32.totalorder %v102, %v42
  %vm339 = vcmp.eq.s32.totalorder %v102, %v43
  %vm340 = vcmp.eq.s32.totalorder %v106, %v42
  %vm341 = vcmp.eq.s32.totalorder %v106, %v43
  %vm342 = vcmp.eq.s32.totalorder %v110, %v42
  %vm343 = vcmp.eq.s32.totalorder %v110, %v43
  %vm344 = vcmp.eq.s32.totalorder %v117, %v42
  %vm345 = vcmp.eq.s32.totalorder %v117, %v43
  %vm346 = vcmp.eq.s32.totalorder %v121, %v42
  %vm347 = vcmp.eq.s32.totalorder %v121, %v43
  %vm348 = vcmp.eq.s32.totalorder %v125, %v42
  %vm349 = vcmp.eq.s32.totalorder %v125, %v43
  %vm350 = vcmp.eq.s32.totalorder %v129, %v42
  %vm351 = vcmp.eq.s32.totalorder %v129, %v43
  %vm352 = vcmp.eq.s32.totalorder %v133, %v42
  %vm353 = vcmp.eq.s32.totalorder %v133, %v43
  %vm354 = vcmp.eq.s32.totalorder %v137, %v42
  %vm355 = vcmp.eq.s32.totalorder %v137, %v43
  %vm356 = vcmp.eq.s32.totalorder %v141, %v42
  %vm357 = vcmp.eq.s32.totalorder %v141, %v43
  %vm358 = vcmp.eq.s32.totalorder %v145, %v42
  %vm359 = vcmp.eq.s32.totalorder %v145, %v43
  %vm360 = vcmp.eq.s32.totalorder %v149, %v42
  %vm361 = vcmp.eq.s32.totalorder %v149, %v43
  %vm362 = vcmp.eq.s32.totalorder %v153, %v42
  %vm363 = vcmp.eq.s32.totalorder %v153, %v43
  %vm364 = vcmp.eq.s32.totalorder %v157, %v42
  %vm365 = vcmp.eq.s32.totalorder %v157, %v43
  %vm366 = vcmp.eq.s32.totalorder %v161, %v42
  %vm367 = vcmp.eq.s32.totalorder %v161, %v43
  %vm368 = vcmp.eq.s32.totalorder %v165, %v42
  %vm369 = vcmp.eq.s32.totalorder %v165, %v43
  %vm370 = vcmp.eq.s32.totalorder %v169, %v42
  %vm371 = vcmp.eq.s32.totalorder %v169, %v43
  %vm372 = vcmp.eq.s32.totalorder %v173, %v42
  %vm373 = vcmp.eq.s32.totalorder %v173, %v43
  %vm374 = vcmp.eq.s32.totalorder %v177, %v42
  %vm375 = vcmp.eq.s32.totalorder %v177, %v43
  %vm376 = vcmp.eq.s32.totalorder %v184, %v42
  %vm377 = vcmp.eq.s32.totalorder %v184, %v43
  %vm378 = vcmp.eq.s32.totalorder %v188, %v42
  %vm379 = vcmp.eq.s32.totalorder %v188, %v43
  %vm380 = vcmp.eq.s32.totalorder %v192, %v42
  %vm381 = vcmp.eq.s32.totalorder %v192, %v43
  %vm382 = vcmp.eq.s32.totalorder %v196, %v42
  %vm383 = vcmp.eq.s32.totalorder %v196, %v43
  %vm384 = vcmp.eq.s32.totalorder %v200, %v42
  %vm385 = vcmp.eq.s32.totalorder %v200, %v43
  %vm386 = vcmp.eq.s32.totalorder %v204, %v42
  %vm387 = vcmp.eq.s32.totalorder %v204, %v43
  %vm388 = vcmp.eq.s32.totalorder %v208, %v42
  %vm389 = vcmp.eq.s32.totalorder %v208, %v43
  %vm390 = vcmp.eq.s32.totalorder %v212, %v42
  %vm391 = vcmp.eq.s32.totalorder %v212, %v43
  %vm392 = vcmp.eq.s32.totalorder %v216, %v42
  %vm393 = vcmp.eq.s32.totalorder %v216, %v43
  %vm394 = vcmp.eq.s32.totalorder %v220, %v42
  %vm395 = vcmp.eq.s32.totalorder %v220, %v43
  %vm396 = vcmp.eq.s32.totalorder %v224, %v42
  %vm397 = vcmp.eq.s32.totalorder %v224, %v43
  %vm398 = vcmp.eq.s32.totalorder %v228, %v42
  %vm399 = vcmp.eq.s32.totalorder %v228, %v43
  %vm400 = vcmp.eq.s32.totalorder %v232, %v42
  %vm401 = vcmp.eq.s32.totalorder %v232, %v43
  %vm402 = vcmp.eq.s32.totalorder %v236, %v42
  %vm403 = vcmp.eq.s32.totalorder %v236, %v43
  %vm404 = vcmp.eq.s32.totalorder %v240, %v42
  %vm405 = vcmp.eq.s32.totalorder %v240, %v43
  %vm406 = vcmp.eq.s32.totalorder %v244, %v42
  %vm407 = vcmp.eq.s32.totalorder %v244, %v43
  %vm408 = vcmp.eq.s32.totalorder %v251, %v42
  %vm409 = vcmp.eq.s32.totalorder %v251, %v43
  %vm410 = vcmp.eq.s32.totalorder %v255, %v42
  %vm411 = vcmp.eq.s32.totalorder %v255, %v43
  %vm412 = vcmp.eq.s32.totalorder %v259, %v42
  %vm413 = vcmp.eq.s32.totalorder %v259, %v43
  %vm414 = vcmp.eq.s32.totalorder %v263, %v42
  %vm415 = vcmp.eq.s32.totalorder %v263, %v43
  %vm416 = vcmp.eq.s32.totalorder %v267, %v42
  %vm417 = vcmp.eq.s32.totalorder %v267, %v43
  %vm418 = vcmp.eq.s32.totalorder %v271, %v42
  %vm419 = vcmp.eq.s32.totalorder %v271, %v43
  %vm420 = vcmp.eq.s32.totalorder %v275, %v42
  %vm421 = vcmp.eq.s32.totalorder %v275, %v43
  %vm422 = vcmp.eq.s32.totalorder %v279, %v42
  %vm423 = vcmp.eq.s32.totalorder %v279, %v43
  %vm424 = vcmp.eq.s32.totalorder %v283, %v42
  %vm425 = vcmp.eq.s32.totalorder %v283, %v43
  %vm426 = vcmp.eq.s32.totalorder %v287, %v42
  %vm427 = vcmp.eq.s32.totalorder %v287, %v43
  %vm428 = vcmp.eq.s32.totalorder %v291, %v42
  %vm429 = vcmp.eq.s32.totalorder %v291, %v43
  %vm430 = vcmp.eq.s32.totalorder %v295, %v42
  %vm431 = vcmp.eq.s32.totalorder %v295, %v43
  %vm432 = vcmp.eq.s32.totalorder %v299, %v42
  %vm433 = vcmp.eq.s32.totalorder %v299, %v43
  %vm434 = vcmp.eq.s32.totalorder %v303, %v42
  %vm435 = vcmp.eq.s32.totalorder %v303, %v43
  %vm436 = vcmp.eq.s32.totalorder %v307, %v42
  %vm437 = vcmp.eq.s32.totalorder %v307, %v43
  %vm438 = vcmp.eq.s32.totalorder %v311, %v42
  %vm439 = vcmp.eq.s32.totalorder %v311, %v43
  %v440 = vlaneseq
  %v441 = vshrl.u32 %v440, 7
  %v442 = vsub.s32 0, %v441
  %v443 = vrot.slane %v37, %v442
  %445 = vbcast.lane.b32.xlu0 %v443, 256
  %v446 = vpop.permute.xlu0 %445
  %s448 = sor.u32 256, 8
  %449 = vbcast.lane.b32.xlu0 %v443, %s448
  %v450 = vpop.permute.xlu0 %449
  %s452 = sor.u32 256, 16
  %453 = vbcast.lane.b32.xlu0 %v443, %s452
  %v454 = vpop.permute.xlu0 %453
  %s456 = sor.u32 256, 24
  %457 = vbcast.lane.b32.xlu0 %v443, %s456
  %v458 = vpop.permute.xlu0 %457
  %s460 = sor.u32 256, 32
  %461 = vbcast.lane.b32.xlu0 %v443, %s460
  %v462 = vpop.permute.xlu0 %461
  %s464 = sor.u32 256, 40
  %465 = vbcast.lane.b32.xlu0 %v443, %s464
  %v466 = vpop.permute.xlu0 %465
  %s468 = sor.u32 256, 48
  %469 = vbcast.lane.b32.xlu0 %v443, %s468
  %v470 = vpop.permute.xlu0 %469
  %s472 = sor.u32 256, 56
  %473 = vbcast.lane.b32.xlu0 %v443, %s472
  %v474 = vpop.permute.xlu0 %473
  %s476 = sor.u32 256, 64
  %477 = vbcast.lane.b32.xlu0 %v443, %s476
  %v478 = vpop.permute.xlu0 %477
  %s480 = sor.u32 256, 72
  %481 = vbcast.lane.b32.xlu0 %v443, %s480
  %v482 = vpop.permute.xlu0 %481
  %s484 = sor.u32 256, 80
  %485 = vbcast.lane.b32.xlu0 %v443, %s484
  %v486 = vpop.permute.xlu0 %485
  %s488 = sor.u32 256, 88
  %489 = vbcast.lane.b32.xlu0 %v443, %s488
  %v490 = vpop.permute.xlu0 %489
  %s492 = sor.u32 256, 96
  %493 = vbcast.lane.b32.xlu0 %v443, %s492
  %v494 = vpop.permute.xlu0 %493
  %s496 = sor.u32 256, 104
  %497 = vbcast.lane.b32.xlu0 %v443, %s496
  %v498 = vpop.permute.xlu0 %497
  %s500 = sor.u32 256, 112
  %501 = vbcast.lane.b32.xlu0 %v443, %s500
  %v502 = vpop.permute.xlu0 %501
  %s504 = sor.u32 256, 120
  %505 = vbcast.lane.b32.xlu0 %v443, %s504
  %v506 = vpop.permute.xlu0 %505
  %v507 = vlaneseq
  %v508 = vshrl.u32 %v507, 7
  %v509 = vsub.s32 1, %v508
  %v510 = vrot.slane %v37, %v509
  %512 = vbcast.lane.b32.xlu0 %v510, 256
  %v513 = vpop.permute.xlu0 %512
  %s515 = sor.u32 256, 8
  %516 = vbcast.lane.b32.xlu0 %v510, %s515
  %v517 = vpop.permute.xlu0 %516
  %s519 = sor.u32 256, 16
  %520 = vbcast.lane.b32.xlu0 %v510, %s519
  %v521 = vpop.permute.xlu0 %520
  %s523 = sor.u32 256, 24
  %524 = vbcast.lane.b32.xlu0 %v510, %s523
  %v525 = vpop.permute.xlu0 %524
  %s527 = sor.u32 256, 32
  %528 = vbcast.lane.b32.xlu0 %v510, %s527
  %v529 = vpop.permute.xlu0 %528
  %s531 = sor.u32 256, 40
  %532 = vbcast.lane.b32.xlu0 %v510, %s531
  %v533 = vpop.permute.xlu0 %532
  %s535 = sor.u32 256, 48
  %536 = vbcast.lane.b32.xlu0 %v510, %s535
  %v537 = vpop.permute.xlu0 %536
  %s539 = sor.u32 256, 56
  %540 = vbcast.lane.b32.xlu0 %v510, %s539
  %v541 = vpop.permute.xlu0 %540
  %s543 = sor.u32 256, 64
  %544 = vbcast.lane.b32.xlu0 %v510, %s543
  %v545 = vpop.permute.xlu0 %544
  %s547 = sor.u32 256, 72
  %548 = vbcast.lane.b32.xlu0 %v510, %s547
  %v549 = vpop.permute.xlu0 %548
  %s551 = sor.u32 256, 80
  %552 = vbcast.lane.b32.xlu0 %v510, %s551
  %v553 = vpop.permute.xlu0 %552
  %s555 = sor.u32 256, 88
  %556 = vbcast.lane.b32.xlu0 %v510, %s555
  %v557 = vpop.permute.xlu0 %556
  %s559 = sor.u32 256, 96
  %560 = vbcast.lane.b32.xlu0 %v510, %s559
  %v561 = vpop.permute.xlu0 %560
  %s563 = sor.u32 256, 104
  %564 = vbcast.lane.b32.xlu0 %v510, %s563
  %v565 = vpop.permute.xlu0 %564
  %s567 = sor.u32 256, 112
  %568 = vbcast.lane.b32.xlu0 %v510, %s567
  %v569 = vpop.permute.xlu0 %568
  %s571 = sor.u32 256, 120
  %572 = vbcast.lane.b32.xlu0 %v510, %s571
  %v573 = vpop.permute.xlu0 %572
  %v574 = vlaneseq
  %v575 = vshrl.u32 %v574, 7
  %v576 = vsub.s32 2, %v575
  %v577 = vrot.slane %v37, %v576
  %579 = vbcast.lane.b32.xlu0 %v577, 256
  %v580 = vpop.permute.xlu0 %579
  %s582 = sor.u32 256, 8
  %583 = vbcast.lane.b32.xlu0 %v577, %s582
  %v584 = vpop.permute.xlu0 %583
  %s586 = sor.u32 256, 16
  %587 = vbcast.lane.b32.xlu0 %v577, %s586
  %v588 = vpop.permute.xlu0 %587
  %s590 = sor.u32 256, 24
  %591 = vbcast.lane.b32.xlu0 %v577, %s590
  %v592 = vpop.permute.xlu0 %591
  %s594 = sor.u32 256, 32
  %595 = vbcast.lane.b32.xlu0 %v577, %s594
  %v596 = vpop.permute.xlu0 %595
  %s598 = sor.u32 256, 40
  %599 = vbcast.lane.b32.xlu0 %v577, %s598
  %v600 = vpop.permute.xlu0 %599
  %s602 = sor.u32 256, 48
  %603 = vbcast.lane.b32.xlu0 %v577, %s602
  %v604 = vpop.permute.xlu0 %603
  %s606 = sor.u32 256, 56
  %607 = vbcast.lane.b32.xlu0 %v577, %s606
  %v608 = vpop.permute.xlu0 %607
  %s610 = sor.u32 256, 64
  %611 = vbcast.lane.b32.xlu0 %v577, %s610
  %v612 = vpop.permute.xlu0 %611
  %s614 = sor.u32 256, 72
  %615 = vbcast.lane.b32.xlu0 %v577, %s614
  %v616 = vpop.permute.xlu0 %615
  %s618 = sor.u32 256, 80
  %619 = vbcast.lane.b32.xlu0 %v577, %s618
  %v620 = vpop.permute.xlu0 %619
  %s622 = sor.u32 256, 88
  %623 = vbcast.lane.b32.xlu0 %v577, %s622
  %v624 = vpop.permute.xlu0 %623
  %s626 = sor.u32 256, 96
  %627 = vbcast.lane.b32.xlu0 %v577, %s626
  %v628 = vpop.permute.xlu0 %627
  %s630 = sor.u32 256, 104
  %631 = vbcast.lane.b32.xlu0 %v577, %s630
  %v632 = vpop.permute.xlu0 %631
  %s634 = sor.u32 256, 112
  %635 = vbcast.lane.b32.xlu0 %v577, %s634
  %v636 = vpop.permute.xlu0 %635
  %s638 = sor.u32 256, 120
  %639 = vbcast.lane.b32.xlu0 %v577, %s638
  %v640 = vpop.permute.xlu0 %639
  %v641 = vlaneseq
  %v642 = vshrl.u32 %v641, 7
  %v643 = vsub.s32 3, %v642
  %v644 = vrot.slane %v37, %v643
  %646 = vbcast.lane.b32.xlu0 %v644, 256
  %v647 = vpop.permute.xlu0 %646
  %s649 = sor.u32 256, 8
  %650 = vbcast.lane.b32.xlu0 %v644, %s649
  %v651 = vpop.permute.xlu0 %650
  %s653 = sor.u32 256, 16
  %654 = vbcast.lane.b32.xlu0 %v644, %s653
  %v655 = vpop.permute.xlu0 %654
  %s657 = sor.u32 256, 24
  %658 = vbcast.lane.b32.xlu0 %v644, %s657
  %v659 = vpop.permute.xlu0 %658
  %s661 = sor.u32 256, 32
  %662 = vbcast.lane.b32.xlu0 %v644, %s661
  %v663 = vpop.permute.xlu0 %662
  %s665 = sor.u32 256, 40
  %666 = vbcast.lane.b32.xlu0 %v644, %s665
  %v667 = vpop.permute.xlu0 %666
  %s669 = sor.u32 256, 48
  %670 = vbcast.lane.b32.xlu0 %v644, %s669
  %v671 = vpop.permute.xlu0 %670
  %s673 = sor.u32 256, 56
  %674 = vbcast.lane.b32.xlu0 %v644, %s673
  %v675 = vpop.permute.xlu0 %674
  %s677 = sor.u32 256, 64
  %678 = vbcast.lane.b32.xlu0 %v644, %s677
  %v679 = vpop.permute.xlu0 %678
  %s681 = sor.u32 256, 72
  %682 = vbcast.lane.b32.xlu0 %v644, %s681
  %v683 = vpop.permute.xlu0 %682
  %s685 = sor.u32 256, 80
  %686 = vbcast.lane.b32.xlu0 %v644, %s685
  %v687 = vpop.permute.xlu0 %686
  %s689 = sor.u32 256, 88
  %690 = vbcast.lane.b32.xlu0 %v644, %s689
  %v691 = vpop.permute.xlu0 %690
  %s693 = sor.u32 256, 96
  %694 = vbcast.lane.b32.xlu0 %v644, %s693
  %v695 = vpop.permute.xlu0 %694
  %s697 = sor.u32 256, 104
  %698 = vbcast.lane.b32.xlu0 %v644, %s697
  %v699 = vpop.permute.xlu0 %698
  %s701 = sor.u32 256, 112
  %702 = vbcast.lane.b32.xlu0 %v644, %s701
  %v703 = vpop.permute.xlu0 %702
  %s705 = sor.u32 256, 120
  %706 = vbcast.lane.b32.xlu0 %v644, %s705
  %v707 = vpop.permute.xlu0 %706
  %v708 = vsel %vm312, %v446, 0.0
  %v709 = vsel %vm313, %v446, 0.0
  %v710 = vsel %vm314, %v450, 0.0
  %v711 = vsel %vm315, %v450, 0.0
  %v712 = vsel %vm316, %v454, 0.0
  %v713 = vsel %vm317, %v454, 0.0
  %v714 = vsel %vm318, %v458, 0.0
  %v715 = vsel %vm319, %v458, 0.0
  %v716 = vsel %vm320, %v462, 0.0
  %v717 = vsel %vm321, %v462, 0.0
  %v718 = vsel %vm322, %v466, 0.0
  %v719 = vsel %vm323, %v466, 0.0
  %v720 = vsel %vm324, %v470, 0.0
  %v721 = vsel %vm325, %v470, 0.0
  %v722 = vsel %vm326, %v474, 0.0
  %v723 = vsel %vm327, %v474, 0.0
  %v724 = vsel %vm328, %v478, 0.0
  %v725 = vsel %vm329, %v478, 0.0
  %v726 = vsel %vm330, %v482, 0.0
  %v727 = vsel %vm331, %v482, 0.0
  %v728 = vsel %vm332, %v486, 0.0
  %v729 = vsel %vm333, %v486, 0.0
  %v730 = vsel %vm334, %v490, 0.0
  %v731 = vsel %vm335, %v490, 0.0
  %v732 = vsel %vm336, %v494, 0.0
  %v733 = vsel %vm337, %v494, 0.0
  %v734 = vsel %vm338, %v498, 0.0
  %v735 = vsel %vm339, %v498, 0.0
  %v736 = vsel %vm340, %v502, 0.0
  %v737 = vsel %vm341, %v502, 0.0
  %v738 = vsel %vm342, %v506, 0.0
  %v739 = vsel %vm343, %v506, 0.0
  %v740 = vsel %vm344, %v513, 0.0
  %v741 = vsel %vm345, %v513, 0.0
  %v742 = vsel %vm346, %v517, 0.0
  %v743 = vsel %vm347, %v517, 0.0
  %v744 = vsel %vm348, %v521, 0.0
  %v745 = vsel %vm349, %v521, 0.0
  %v746 = vsel %vm350, %v525, 0.0
  %v747 = vsel %vm351, %v525, 0.0
  %v748 = vsel %vm352, %v529, 0.0
  %v749 = vsel %vm353, %v529, 0.0
  %v750 = vsel %vm354, %v533, 0.0
  %v751 = vsel %vm355, %v533, 0.0
  %v752 = vsel %vm356, %v537, 0.0
  %v753 = vsel %vm357, %v537, 0.0
  %v754 = vsel %vm358, %v541, 0.0
  %v755 = vsel %vm359, %v541, 0.0
  %v756 = vsel %vm360, %v545, 0.0
  %v757 = vsel %vm361, %v545, 0.0
  %v758 = vsel %vm362, %v549, 0.0
  %v759 = vsel %vm363, %v549, 0.0
  %v760 = vsel %vm364, %v553, 0.0
  %v761 = vsel %vm365, %v553, 0.0
  %v762 = vsel %vm366, %v557, 0.0
  %v763 = vsel %vm367, %v557, 0.0
  %v764 = vsel %vm368, %v561, 0.0
  %v765 = vsel %vm369, %v561, 0.0
  %v766 = vsel %vm370, %v565, 0.0
  %v767 = vsel %vm371, %v565, 0.0
  %v768 = vsel %vm372, %v569, 0.0
  %v769 = vsel %vm373, %v569, 0.0
  %v770 = vsel %vm374, %v573, 0.0
  %v771 = vsel %vm375, %v573, 0.0
  %v772 = vsel %vm376, %v580, 0.0
  %v773 = vsel %vm377, %v580, 0.0
  %v774 = vsel %vm378, %v584, 0.0
  %v775 = vsel %vm379, %v584, 0.0
  %v776 = vsel %vm380, %v588, 0.0
  %v777 = vsel %vm381, %v588, 0.0
  %v778 = vsel %vm382, %v592, 0.0
  %v779 = vsel %vm383, %v592, 0.0
  %v780 = vsel %vm384, %v596, 0.0
  %v781 = vsel %vm385, %v596, 0.0
  %v782 = vsel %vm386, %v600, 0.0
  %v783 = vsel %vm387, %v600, 0.0
  %v784 = vsel %vm388, %v604, 0.0
  %v785 = vsel %vm389, %v604, 0.0
  %v786 = vsel %vm390, %v608, 0.0
  %v787 = vsel %vm391, %v608, 0.0
  %v788 = vsel %vm392, %v612, 0.0
  %v789 = vsel %vm393, %v612, 0.0
  %v790 = vsel %vm394, %v616, 0.0
  %v791 = vsel %vm395, %v616, 0.0
  %v792 = vsel %vm396, %v620, 0.0
  %v793 = vsel %vm397, %v620, 0.0
  %v794 = vsel %vm398, %v624, 0.0
  %v795 = vsel %vm399, %v624, 0.0
  %v796 = vsel %vm400, %v628, 0.0
  %v797 = vsel %vm401, %v628, 0.0
  %v798 = vsel %vm402, %v632, 0.0
  %v799 = vsel %vm403, %v632, 0.0
  %v800 = vsel %vm404, %v636, 0.0
  %v801 = vsel %vm405, %v636, 0.0
  %v802 = vsel %vm406, %v640, 0.0
  %v803 = vsel %vm407, %v640, 0.0
  %v804 = vsel %vm408, %v647, 0.0
  %v805 = vsel %vm409, %v647, 0.0
  %v806 = vsel %vm410, %v651, 0.0
  %v807 = vsel %vm411, %v651, 0.0
  %v808 = vsel %vm412, %v655, 0.0
  %v809 = vsel %vm413, %v655, 0.0
  %v810 = vsel %vm414, %v659, 0.0
  %v811 = vsel %vm415, %v659, 0.0
  %v812 = vsel %vm416, %v663, 0.0
  %v813 = vsel %vm417, %v663, 0.0
  %v814 = vsel %vm418, %v667, 0.0
  %v815 = vsel %vm419, %v667, 0.0
  %v816 = vsel %vm420, %v671, 0.0
  %v817 = vsel %vm421, %v671, 0.0
  %v818 = vsel %vm422, %v675, 0.0
  %v819 = vsel %vm423, %v675, 0.0
  %v820 = vsel %vm424, %v679, 0.0
  %v821 = vsel %vm425, %v679, 0.0
  %v822 = vsel %vm426, %v683, 0.0
  %v823 = vsel %vm427, %v683, 0.0
  %v824 = vsel %vm428, %v687, 0.0
  %v825 = vsel %vm429, %v687, 0.0
  %v826 = vsel %vm430, %v691, 0.0
  %v827 = vsel %vm431, %v691, 0.0
  %v828 = vsel %vm432, %v695, 0.0
  %v829 = vsel %vm433, %v695, 0.0
  %v830 = vsel %vm434, %v699, 0.0
  %v831 = vsel %vm435, %v699, 0.0
  %v832 = vsel %vm436, %v703, 0.0
  %v833 = vsel %vm437, %v703, 0.0
  %v834 = vsel %vm438, %v707, 0.0
  %v835 = vsel %vm439, %v707, 0.0
  %v836 = vlaneseq
  %v837 = vshrl.u32 %v836, 7
  %v838 = vsub.s32 0, %v837
  %v839 = vrot.slane %v31, %v838
  %841 = vbcast.lane.b32.xlu0 %v839, 256
  %v842 = vpop.permute.xlu0 %841
  %s844 = sor.u32 256, 8
  %845 = vbcast.lane.b32.xlu0 %v839, %s844
  %v846 = vpop.permute.xlu0 %845
  %s848 = sor.u32 256, 16
  %849 = vbcast.lane.b32.xlu0 %v839, %s848
  %v850 = vpop.permute.xlu0 %849
  %s852 = sor.u32 256, 24
  %853 = vbcast.lane.b32.xlu0 %v839, %s852
  %v854 = vpop.permute.xlu0 %853
  %s856 = sor.u32 256, 32
  %857 = vbcast.lane.b32.xlu0 %v839, %s856
  %v858 = vpop.permute.xlu0 %857
  %s860 = sor.u32 256, 40
  %861 = vbcast.lane.b32.xlu0 %v839, %s860
  %v862 = vpop.permute.xlu0 %861
  %s864 = sor.u32 256, 48
  %865 = vbcast.lane.b32.xlu0 %v839, %s864
  %v866 = vpop.permute.xlu0 %865
  %s868 = sor.u32 256, 56
  %869 = vbcast.lane.b32.xlu0 %v839, %s868
  %v870 = vpop.permute.xlu0 %869
  %s872 = sor.u32 256, 64
  %873 = vbcast.lane.b32.xlu0 %v839, %s872
  %v874 = vpop.permute.xlu0 %873
  %s876 = sor.u32 256, 72
  %877 = vbcast.lane.b32.xlu0 %v839, %s876
  %v878 = vpop.permute.xlu0 %877
  %s880 = sor.u32 256, 80
  %881 = vbcast.lane.b32.xlu0 %v839, %s880
  %v882 = vpop.permute.xlu0 %881
  %s884 = sor.u32 256, 88
  %885 = vbcast.lane.b32.xlu0 %v839, %s884
  %v886 = vpop.permute.xlu0 %885
  %s888 = sor.u32 256, 96
  %889 = vbcast.lane.b32.xlu0 %v839, %s888
  %v890 = vpop.permute.xlu0 %889
  %s892 = sor.u32 256, 104
  %893 = vbcast.lane.b32.xlu0 %v839, %s892
  %v894 = vpop.permute.xlu0 %893
  %s896 = sor.u32 256, 112
  %897 = vbcast.lane.b32.xlu0 %v839, %s896
  %v898 = vpop.permute.xlu0 %897
  %s900 = sor.u32 256, 120
  %901 = vbcast.lane.b32.xlu0 %v839, %s900
  %v902 = vpop.permute.xlu0 %901
  %v903 = vlaneseq
  %v904 = vshrl.u32 %v903, 7
  %v905 = vsub.s32 1, %v904
  %v906 = vrot.slane %v31, %v905
  %908 = vbcast.lane.b32.xlu0 %v906, 256
  %v909 = vpop.permute.xlu0 %908
  %s911 = sor.u32 256, 8
  %912 = vbcast.lane.b32.xlu0 %v906, %s911
  %v913 = vpop.permute.xlu0 %912
  %s915 = sor.u32 256, 16
  %916 = vbcast.lane.b32.xlu0 %v906, %s915
  %v917 = vpop.permute.xlu0 %916
  %s919 = sor.u32 256, 24
  %920 = vbcast.lane.b32.xlu0 %v906, %s919
  %v921 = vpop.permute.xlu0 %920
  %s923 = sor.u32 256, 32
  %924 = vbcast.lane.b32.xlu0 %v906, %s923
  %v925 = vpop.permute.xlu0 %924
  %s927 = sor.u32 256, 40
  %928 = vbcast.lane.b32.xlu0 %v906, %s927
  %v929 = vpop.permute.xlu0 %928
  %s931 = sor.u32 256, 48
  %932 = vbcast.lane.b32.xlu0 %v906, %s931
  %v933 = vpop.permute.xlu0 %932
  %s935 = sor.u32 256, 56
  %936 = vbcast.lane.b32.xlu0 %v906, %s935
  %v937 = vpop.permute.xlu0 %936
  %s939 = sor.u32 256, 64
  %940 = vbcast.lane.b32.xlu0 %v906, %s939
  %v941 = vpop.permute.xlu0 %940
  %s943 = sor.u32 256, 72
  %944 = vbcast.lane.b32.xlu0 %v906, %s943
  %v945 = vpop.permute.xlu0 %944
  %s947 = sor.u32 256, 80
  %948 = vbcast.lane.b32.xlu0 %v906, %s947
  %v949 = vpop.permute.xlu0 %948
  %s951 = sor.u32 256, 88
  %952 = vbcast.lane.b32.xlu0 %v906, %s951
  %v953 = vpop.permute.xlu0 %952
  %s955 = sor.u32 256, 96
  %956 = vbcast.lane.b32.xlu0 %v906, %s955
  %v957 = vpop.permute.xlu0 %956
  %s959 = sor.u32 256, 104
  %960 = vbcast.lane.b32.xlu0 %v906, %s959
  %v961 = vpop.permute.xlu0 %960
  %s963 = sor.u32 256, 112
  %964 = vbcast.lane.b32.xlu0 %v906, %s963
  %v965 = vpop.permute.xlu0 %964
  %s967 = sor.u32 256, 120
  %968 = vbcast.lane.b32.xlu0 %v906, %s967
  %v969 = vpop.permute.xlu0 %968
  %v970 = vlaneseq
  %v971 = vshrl.u32 %v970, 7
  %v972 = vsub.s32 2, %v971
  %v973 = vrot.slane %v31, %v972
  %975 = vbcast.lane.b32.xlu0 %v973, 256
  %v976 = vpop.permute.xlu0 %975
  %s978 = sor.u32 256, 8
  %979 = vbcast.lane.b32.xlu0 %v973, %s978
  %v980 = vpop.permute.xlu0 %979
  %s982 = sor.u32 256, 16
  %983 = vbcast.lane.b32.xlu0 %v973, %s982
  %v984 = vpop.permute.xlu0 %983
  %s986 = sor.u32 256, 24
  %987 = vbcast.lane.b32.xlu0 %v973, %s986
  %v988 = vpop.permute.xlu0 %987
  %s990 = sor.u32 256, 32
  %991 = vbcast.lane.b32.xlu0 %v973, %s990
  %v992 = vpop.permute.xlu0 %991
  %s994 = sor.u32 256, 40
  %995 = vbcast.lane.b32.xlu0 %v973, %s994
  %v996 = vpop.permute.xlu0 %995
  %s998 = sor.u32 256, 48
  %999 = vbcast.lane.b32.xlu0 %v973, %s998
  %v1000 = vpop.permute.xlu0 %999
  %s1002 = sor.u32 256, 56
  %1003 = vbcast.lane.b32.xlu0 %v973, %s1002
  %v1004 = vpop.permute.xlu0 %1003
  %s1006 = sor.u32 256, 64
  %1007 = vbcast.lane.b32.xlu0 %v973, %s1006
  %v1008 = vpop.permute.xlu0 %1007
  %s1010 = sor.u32 256, 72
  %1011 = vbcast.lane.b32.xlu0 %v973, %s1010
  %v1012 = vpop.permute.xlu0 %1011
  %s1014 = sor.u32 256, 80
  %1015 = vbcast.lane.b32.xlu0 %v973, %s1014
  %v1016 = vpop.permute.xlu0 %1015
  %s1018 = sor.u32 256, 88
  %1019 = vbcast.lane.b32.xlu0 %v973, %s1018
  %v1020 = vpop.permute.xlu0 %1019
  %s1022 = sor.u32 256, 96
  %1023 = vbcast.lane.b32.xlu0 %v973, %s1022
  %v1024 = vpop.permute.xlu0 %1023
  %s1026 = sor.u32 256, 104
  %1027 = vbcast.lane.b32.xlu0 %v973, %s1026
  %v1028 = vpop.permute.xlu0 %1027
  %s1030 = sor.u32 256, 112
  %1031 = vbcast.lane.b32.xlu0 %v973, %s1030
  %v1032 = vpop.permute.xlu0 %1031
  %s1034 = sor.u32 256, 120
  %1035 = vbcast.lane.b32.xlu0 %v973, %s1034
  %v1036 = vpop.permute.xlu0 %1035
  %v1037 = vlaneseq
  %v1038 = vshrl.u32 %v1037, 7
  %v1039 = vsub.s32 3, %v1038
  %v1040 = vrot.slane %v31, %v1039
  %1042 = vbcast.lane.b32.xlu0 %v1040, 256
  %v1043 = vpop.permute.xlu0 %1042
  %s1045 = sor.u32 256, 8
  %1046 = vbcast.lane.b32.xlu0 %v1040, %s1045
  %v1047 = vpop.permute.xlu0 %1046
  %s1049 = sor.u32 256, 16
  %1050 = vbcast.lane.b32.xlu0 %v1040, %s1049
  %v1051 = vpop.permute.xlu0 %1050
  %s1053 = sor.u32 256, 24
  %1054 = vbcast.lane.b32.xlu0 %v1040, %s1053
  %v1055 = vpop.permute.xlu0 %1054
  %s1057 = sor.u32 256, 32
  %1058 = vbcast.lane.b32.xlu0 %v1040, %s1057
  %v1059 = vpop.permute.xlu0 %1058
  %s1061 = sor.u32 256, 40
  %1062 = vbcast.lane.b32.xlu0 %v1040, %s1061
  %v1063 = vpop.permute.xlu0 %1062
  %s1065 = sor.u32 256, 48
  %1066 = vbcast.lane.b32.xlu0 %v1040, %s1065
  %v1067 = vpop.permute.xlu0 %1066
  %s1069 = sor.u32 256, 56
  %1070 = vbcast.lane.b32.xlu0 %v1040, %s1069
  %v1071 = vpop.permute.xlu0 %1070
  %s1073 = sor.u32 256, 64
  %1074 = vbcast.lane.b32.xlu0 %v1040, %s1073
  %v1075 = vpop.permute.xlu0 %1074
  %s1077 = sor.u32 256, 72
  %1078 = vbcast.lane.b32.xlu0 %v1040, %s1077
  %v1079 = vpop.permute.xlu0 %1078
  %s1081 = sor.u32 256, 80
  %1082 = vbcast.lane.b32.xlu0 %v1040, %s1081
  %v1083 = vpop.permute.xlu0 %1082
  %s1085 = sor.u32 256, 88
  %1086 = vbcast.lane.b32.xlu0 %v1040, %s1085
  %v1087 = vpop.permute.xlu0 %1086
  %s1089 = sor.u32 256, 96
  %1090 = vbcast.lane.b32.xlu0 %v1040, %s1089
  %v1091 = vpop.permute.xlu0 %1090
  %s1093 = sor.u32 256, 104
  %1094 = vbcast.lane.b32.xlu0 %v1040, %s1093
  %v1095 = vpop.permute.xlu0 %1094
  %s1097 = sor.u32 256, 112
  %1098 = vbcast.lane.b32.xlu0 %v1040, %s1097
  %v1099 = vpop.permute.xlu0 %1098
  %s1101 = sor.u32 256, 120
  %1102 = vbcast.lane.b32.xlu0 %v1040, %s1101
  %v1103 = vpop.permute.xlu0 %1102
  %vm1104 = vcmp.eq.s32.totalorder %v842, %v42
  %vm1105 = vcmp.eq.s32.totalorder %v842, %v43
  %vm1106 = vcmp.eq.s32.totalorder %v846, %v42
  %vm1107 = vcmp.eq.s32.totalorder %v846, %v43
  %vm1108 = vcmp.eq.s32.totalorder %v850, %v42
  %vm1109 = vcmp.eq.s32.totalorder %v850, %v43
  %vm1110 = vcmp.eq.s32.totalorder %v854, %v42
  %vm1111 = vcmp.eq.s32.totalorder %v854, %v43
  %vm1112 = vcmp.eq.s32.totalorder %v858, %v42
  %vm1113 = vcmp.eq.s32.totalorder %v858, %v43
  %vm1114 = vcmp.eq.s32.totalorder %v862, %v42
  %vm1115 = vcmp.eq.s32.totalorder %v862, %v43
  %vm1116 = vcmp.eq.s32.totalorder %v866, %v42
  %vm1117 = vcmp.eq.s32.totalorder %v866, %v43
  %vm1118 = vcmp.eq.s32.totalorder %v870, %v42
  %vm1119 = vcmp.eq.s32.totalorder %v870, %v43
  %vm1120 = vcmp.eq.s32.totalorder %v874, %v42
  %vm1121 = vcmp.eq.s32.totalorder %v874, %v43
  %vm1122 = vcmp.eq.s32.totalorder %v878, %v42
  %vm1123 = vcmp.eq.s32.totalorder %v878, %v43
  %vm1124 = vcmp.eq.s32.totalorder %v882, %v42
  %vm1125 = vcmp.eq.s32.totalorder %v882, %v43
  %vm1126 = vcmp.eq.s32.totalorder %v886, %v42
  %vm1127 = vcmp.eq.s32.totalorder %v886, %v43
  %vm1128 = vcmp.eq.s32.totalorder %v890, %v42
  %vm1129 = vcmp.eq.s32.totalorder %v890, %v43
  %vm1130 = vcmp.eq.s32.totalorder %v894, %v42
  %vm1131 = vcmp.eq.s32.totalorder %v894, %v43
  %vm1132 = vcmp.eq.s32.totalorder %v898, %v42
  %vm1133 = vcmp.eq.s32.totalorder %v898, %v43
  %vm1134 = vcmp.eq.s32.totalorder %v902, %v42
  %vm1135 = vcmp.eq.s32.totalorder %v902, %v43
  %vm1136 = vcmp.eq.s32.totalorder %v909, %v42
  %vm1137 = vcmp.eq.s32.totalorder %v909, %v43
  %vm1138 = vcmp.eq.s32.totalorder %v913, %v42
  %vm1139 = vcmp.eq.s32.totalorder %v913, %v43
  %vm1140 = vcmp.eq.s32.totalorder %v917, %v42
  %vm1141 = vcmp.eq.s32.totalorder %v917, %v43
  %vm1142 = vcmp.eq.s32.totalorder %v921, %v42
  %vm1143 = vcmp.eq.s32.totalorder %v921, %v43
  %vm1144 = vcmp.eq.s32.totalorder %v925, %v42
  %vm1145 = vcmp.eq.s32.totalorder %v925, %v43
  %vm1146 = vcmp.eq.s32.totalorder %v929, %v42
  %vm1147 = vcmp.eq.s32.totalorder %v929, %v43
  %vm1148 = vcmp.eq.s32.totalorder %v933, %v42
  %vm1149 = vcmp.eq.s32.totalorder %v933, %v43
  %vm1150 = vcmp.eq.s32.totalorder %v937, %v42
  %vm1151 = vcmp.eq.s32.totalorder %v937, %v43
  %vm1152 = vcmp.eq.s32.totalorder %v941, %v42
  %vm1153 = vcmp.eq.s32.totalorder %v941, %v43
  %vm1154 = vcmp.eq.s32.totalorder %v945, %v42
  %vm1155 = vcmp.eq.s32.totalorder %v945, %v43
  %vm1156 = vcmp.eq.s32.totalorder %v949, %v42
  %vm1157 = vcmp.eq.s32.totalorder %v949, %v43
  %vm1158 = vcmp.eq.s32.totalorder %v953, %v42
  %vm1159 = vcmp.eq.s32.totalorder %v953, %v43
  %vm1160 = vcmp.eq.s32.totalorder %v957, %v42
  %vm1161 = vcmp.eq.s32.totalorder %v957, %v43
  %vm1162 = vcmp.eq.s32.totalorder %v961, %v42
  %vm1163 = vcmp.eq.s32.totalorder %v961, %v43
  %vm1164 = vcmp.eq.s32.totalorder %v965, %v42
  %vm1165 = vcmp.eq.s32.totalorder %v965, %v43
  %vm1166 = vcmp.eq.s32.totalorder %v969, %v42
  %vm1167 = vcmp.eq.s32.totalorder %v969, %v43
  %vm1168 = vcmp.eq.s32.totalorder %v976, %v42
  %vm1169 = vcmp.eq.s32.totalorder %v976, %v43
  %vm1170 = vcmp.eq.s32.totalorder %v980, %v42
  %vm1171 = vcmp.eq.s32.totalorder %v980, %v43
  %vm1172 = vcmp.eq.s32.totalorder %v984, %v42
  %vm1173 = vcmp.eq.s32.totalorder %v984, %v43
  %vm1174 = vcmp.eq.s32.totalorder %v988, %v42
  %vm1175 = vcmp.eq.s32.totalorder %v988, %v43
  %vm1176 = vcmp.eq.s32.totalorder %v992, %v42
  %vm1177 = vcmp.eq.s32.totalorder %v992, %v43
  %vm1178 = vcmp.eq.s32.totalorder %v996, %v42
  %vm1179 = vcmp.eq.s32.totalorder %v996, %v43
  %vm1180 = vcmp.eq.s32.totalorder %v1000, %v42
  %vm1181 = vcmp.eq.s32.totalorder %v1000, %v43
  %vm1182 = vcmp.eq.s32.totalorder %v1004, %v42
  %vm1183 = vcmp.eq.s32.totalorder %v1004, %v43
  %vm1184 = vcmp.eq.s32.totalorder %v1008, %v42
  %vm1185 = vcmp.eq.s32.totalorder %v1008, %v43
  %vm1186 = vcmp.eq.s32.totalorder %v1012, %v42
  %vm1187 = vcmp.eq.s32.totalorder %v1012, %v43
  %vm1188 = vcmp.eq.s32.totalorder %v1016, %v42
  %vm1189 = vcmp.eq.s32.totalorder %v1016, %v43
  %vm1190 = vcmp.eq.s32.totalorder %v1020, %v42
  %vm1191 = vcmp.eq.s32.totalorder %v1020, %v43
  %vm1192 = vcmp.eq.s32.totalorder %v1024, %v42
  %vm1193 = vcmp.eq.s32.totalorder %v1024, %v43
  %vm1194 = vcmp.eq.s32.totalorder %v1028, %v42
  %vm1195 = vcmp.eq.s32.totalorder %v1028, %v43
  %vm1196 = vcmp.eq.s32.totalorder %v1032, %v42
  %vm1197 = vcmp.eq.s32.totalorder %v1032, %v43
  %vm1198 = vcmp.eq.s32.totalorder %v1036, %v42
  %vm1199 = vcmp.eq.s32.totalorder %v1036, %v43
  %vm1200 = vcmp.eq.s32.totalorder %v1043, %v42
  %vm1201 = vcmp.eq.s32.totalorder %v1043, %v43
  %vm1202 = vcmp.eq.s32.totalorder %v1047, %v42
  %vm1203 = vcmp.eq.s32.totalorder %v1047, %v43
  %vm1204 = vcmp.eq.s32.totalorder %v1051, %v42
  %vm1205 = vcmp.eq.s32.totalorder %v1051, %v43
  %vm1206 = vcmp.eq.s32.totalorder %v1055, %v42
  %vm1207 = vcmp.eq.s32.totalorder %v1055, %v43
  %vm1208 = vcmp.eq.s32.totalorder %v1059, %v42
  %vm1209 = vcmp.eq.s32.totalorder %v1059, %v43
  %vm1210 = vcmp.eq.s32.totalorder %v1063, %v42
  %vm1211 = vcmp.eq.s32.totalorder %v1063, %v43
  %vm1212 = vcmp.eq.s32.totalorder %v1067, %v42
  %vm1213 = vcmp.eq.s32.totalorder %v1067, %v43
  %vm1214 = vcmp.eq.s32.totalorder %v1071, %v42
  %vm1215 = vcmp.eq.s32.totalorder %v1071, %v43
  %vm1216 = vcmp.eq.s32.totalorder %v1075, %v42
  %vm1217 = vcmp.eq.s32.totalorder %v1075, %v43
  %vm1218 = vcmp.eq.s32.totalorder %v1079, %v42
  %vm1219 = vcmp.eq.s32.totalorder %v1079, %v43
  %vm1220 = vcmp.eq.s32.totalorder %v1083, %v42
  %vm1221 = vcmp.eq.s32.totalorder %v1083, %v43
  %vm1222 = vcmp.eq.s32.totalorder %v1087, %v42
  %vm1223 = vcmp.eq.s32.totalorder %v1087, %v43
  %vm1224 = vcmp.eq.s32.totalorder %v1091, %v42
  %vm1225 = vcmp.eq.s32.totalorder %v1091, %v43
  %vm1226 = vcmp.eq.s32.totalorder %v1095, %v42
  %vm1227 = vcmp.eq.s32.totalorder %v1095, %v43
  %vm1228 = vcmp.eq.s32.totalorder %v1099, %v42
  %vm1229 = vcmp.eq.s32.totalorder %v1099, %v43
  %vm1230 = vcmp.eq.s32.totalorder %v1103, %v42
  %vm1231 = vcmp.eq.s32.totalorder %v1103, %v43
  %v1232 = vlaneseq
  %v1233 = vshrl.u32 %v1232, 7
  %v1234 = vsub.s32 0, %v1233
  %v1235 = vrot.slane %v38, %v1234
  %1237 = vbcast.lane.b32.xlu0 %v1235, 256
  %v1238 = vpop.permute.xlu0 %1237
  %s1240 = sor.u32 256, 8
  %1241 = vbcast.lane.b32.xlu0 %v1235, %s1240
  %v1242 = vpop.permute.xlu0 %1241
  %s1244 = sor.u32 256, 16
  %1245 = vbcast.lane.b32.xlu0 %v1235, %s1244
  %v1246 = vpop.permute.xlu0 %1245
  %s1248 = sor.u32 256, 24
  %1249 = vbcast.lane.b32.xlu0 %v1235, %s1248
  %v1250 = vpop.permute.xlu0 %1249
  %s1252 = sor.u32 256, 32
  %1253 = vbcast.lane.b32.xlu0 %v1235, %s1252
  %v1254 = vpop.permute.xlu0 %1253
  %s1256 = sor.u32 256, 40
  %1257 = vbcast.lane.b32.xlu0 %v1235, %s1256
  %v1258 = vpop.permute.xlu0 %1257
  %s1260 = sor.u32 256, 48
  %1261 = vbcast.lane.b32.xlu0 %v1235, %s1260
  %v1262 = vpop.permute.xlu0 %1261
  %s1264 = sor.u32 256, 56
  %1265 = vbcast.lane.b32.xlu0 %v1235, %s1264
  %v1266 = vpop.permute.xlu0 %1265
  %s1268 = sor.u32 256, 64
  %1269 = vbcast.lane.b32.xlu0 %v1235, %s1268
  %v1270 = vpop.permute.xlu0 %1269
  %s1272 = sor.u32 256, 72
  %1273 = vbcast.lane.b32.xlu0 %v1235, %s1272
  %v1274 = vpop.permute.xlu0 %1273
  %s1276 = sor.u32 256, 80
  %1277 = vbcast.lane.b32.xlu0 %v1235, %s1276
  %v1278 = vpop.permute.xlu0 %1277
  %s1280 = sor.u32 256, 88
  %1281 = vbcast.lane.b32.xlu0 %v1235, %s1280
  %v1282 = vpop.permute.xlu0 %1281
  %s1284 = sor.u32 256, 96
  %1285 = vbcast.lane.b32.xlu0 %v1235, %s1284
  %v1286 = vpop.permute.xlu0 %1285
  %s1288 = sor.u32 256, 104
  %1289 = vbcast.lane.b32.xlu0 %v1235, %s1288
  %v1290 = vpop.permute.xlu0 %1289
  %s1292 = sor.u32 256, 112
  %1293 = vbcast.lane.b32.xlu0 %v1235, %s1292
  %v1294 = vpop.permute.xlu0 %1293
  %s1296 = sor.u32 256, 120
  %1297 = vbcast.lane.b32.xlu0 %v1235, %s1296
  %v1298 = vpop.permute.xlu0 %1297
  %v1299 = vlaneseq
  %v1300 = vshrl.u32 %v1299, 7
  %v1301 = vsub.s32 1, %v1300
  %v1302 = vrot.slane %v38, %v1301
  %1304 = vbcast.lane.b32.xlu0 %v1302, 256
  %v1305 = vpop.permute.xlu0 %1304
  %s1307 = sor.u32 256, 8
  %1308 = vbcast.lane.b32.xlu0 %v1302, %s1307
  %v1309 = vpop.permute.xlu0 %1308
  %s1311 = sor.u32 256, 16
  %1312 = vbcast.lane.b32.xlu0 %v1302, %s1311
  %v1313 = vpop.permute.xlu0 %1312
  %s1315 = sor.u32 256, 24
  %1316 = vbcast.lane.b32.xlu0 %v1302, %s1315
  %v1317 = vpop.permute.xlu0 %1316
  %s1319 = sor.u32 256, 32
  %1320 = vbcast.lane.b32.xlu0 %v1302, %s1319
  %v1321 = vpop.permute.xlu0 %1320
  %s1323 = sor.u32 256, 40
  %1324 = vbcast.lane.b32.xlu0 %v1302, %s1323
  %v1325 = vpop.permute.xlu0 %1324
  %s1327 = sor.u32 256, 48
  %1328 = vbcast.lane.b32.xlu0 %v1302, %s1327
  %v1329 = vpop.permute.xlu0 %1328
  %s1331 = sor.u32 256, 56
  %1332 = vbcast.lane.b32.xlu0 %v1302, %s1331
  %v1333 = vpop.permute.xlu0 %1332
  %s1335 = sor.u32 256, 64
  %1336 = vbcast.lane.b32.xlu0 %v1302, %s1335
  %v1337 = vpop.permute.xlu0 %1336
  %s1339 = sor.u32 256, 72
  %1340 = vbcast.lane.b32.xlu0 %v1302, %s1339
  %v1341 = vpop.permute.xlu0 %1340
  %s1343 = sor.u32 256, 80
  %1344 = vbcast.lane.b32.xlu0 %v1302, %s1343
  %v1345 = vpop.permute.xlu0 %1344
  %s1347 = sor.u32 256, 88
  %1348 = vbcast.lane.b32.xlu0 %v1302, %s1347
  %v1349 = vpop.permute.xlu0 %1348
  %s1351 = sor.u32 256, 96
  %1352 = vbcast.lane.b32.xlu0 %v1302, %s1351
  %v1353 = vpop.permute.xlu0 %1352
  %s1355 = sor.u32 256, 104
  %1356 = vbcast.lane.b32.xlu0 %v1302, %s1355
  %v1357 = vpop.permute.xlu0 %1356
  %s1359 = sor.u32 256, 112
  %1360 = vbcast.lane.b32.xlu0 %v1302, %s1359
  %v1361 = vpop.permute.xlu0 %1360
  %s1363 = sor.u32 256, 120
  %1364 = vbcast.lane.b32.xlu0 %v1302, %s1363
  %v1365 = vpop.permute.xlu0 %1364
  %v1366 = vlaneseq
  %v1367 = vshrl.u32 %v1366, 7
  %v1368 = vsub.s32 2, %v1367
  %v1369 = vrot.slane %v38, %v1368
  %1371 = vbcast.lane.b32.xlu0 %v1369, 256
  %v1372 = vpop.permute.xlu0 %1371
  %s1374 = sor.u32 256, 8
  %1375 = vbcast.lane.b32.xlu0 %v1369, %s1374
  %v1376 = vpop.permute.xlu0 %1375
  %s1378 = sor.u32 256, 16
  %1379 = vbcast.lane.b32.xlu0 %v1369, %s1378
  %v1380 = vpop.permute.xlu0 %1379
  %s1382 = sor.u32 256, 24
  %1383 = vbcast.lane.b32.xlu0 %v1369, %s1382
  %v1384 = vpop.permute.xlu0 %1383
  %s1386 = sor.u32 256, 32
  %1387 = vbcast.lane.b32.xlu0 %v1369, %s1386
  %v1388 = vpop.permute.xlu0 %1387
  %s1390 = sor.u32 256, 40
  %1391 = vbcast.lane.b32.xlu0 %v1369, %s1390
  %v1392 = vpop.permute.xlu0 %1391
  %s1394 = sor.u32 256, 48
  %1395 = vbcast.lane.b32.xlu0 %v1369, %s1394
  %v1396 = vpop.permute.xlu0 %1395
  %s1398 = sor.u32 256, 56
  %1399 = vbcast.lane.b32.xlu0 %v1369, %s1398
  %v1400 = vpop.permute.xlu0 %1399
  %s1402 = sor.u32 256, 64
  %1403 = vbcast.lane.b32.xlu0 %v1369, %s1402
  %v1404 = vpop.permute.xlu0 %1403
  %s1406 = sor.u32 256, 72
  %1407 = vbcast.lane.b32.xlu0 %v1369, %s1406
  %v1408 = vpop.permute.xlu0 %1407
  %s1410 = sor.u32 256, 80
  %1411 = vbcast.lane.b32.xlu0 %v1369, %s1410
  %v1412 = vpop.permute.xlu0 %1411
  %s1414 = sor.u32 256, 88
  %1415 = vbcast.lane.b32.xlu0 %v1369, %s1414
  %v1416 = vpop.permute.xlu0 %1415
  %s1418 = sor.u32 256, 96
  %1419 = vbcast.lane.b32.xlu0 %v1369, %s1418
  %v1420 = vpop.permute.xlu0 %1419
  %s1422 = sor.u32 256, 104
  %1423 = vbcast.lane.b32.xlu0 %v1369, %s1422
  %v1424 = vpop.permute.xlu0 %1423
  %s1426 = sor.u32 256, 112
  %1427 = vbcast.lane.b32.xlu0 %v1369, %s1426
  %v1428 = vpop.permute.xlu0 %1427
  %s1430 = sor.u32 256, 120
  %1431 = vbcast.lane.b32.xlu0 %v1369, %s1430
  %v1432 = vpop.permute.xlu0 %1431
  %v1433 = vlaneseq
  %v1434 = vshrl.u32 %v1433, 7
  %v1435 = vsub.s32 3, %v1434
  %v1436 = vrot.slane %v38, %v1435
  %1438 = vbcast.lane.b32.xlu0 %v1436, 256
  %v1439 = vpop.permute.xlu0 %1438
  %s1441 = sor.u32 256, 8
  %1442 = vbcast.lane.b32.xlu0 %v1436, %s1441
  %v1443 = vpop.permute.xlu0 %1442
  %s1445 = sor.u32 256, 16
  %1446 = vbcast.lane.b32.xlu0 %v1436, %s1445
  %v1447 = vpop.permute.xlu0 %1446
  %s1449 = sor.u32 256, 24
  %1450 = vbcast.lane.b32.xlu0 %v1436, %s1449
  %v1451 = vpop.permute.xlu0 %1450
  %s1453 = sor.u32 256, 32
  %1454 = vbcast.lane.b32.xlu0 %v1436, %s1453
  %v1455 = vpop.permute.xlu0 %1454
  %s1457 = sor.u32 256, 40
  %1458 = vbcast.lane.b32.xlu0 %v1436, %s1457
  %v1459 = vpop.permute.xlu0 %1458
  %s1461 = sor.u32 256, 48
  %1462 = vbcast.lane.b32.xlu0 %v1436, %s1461
  %v1463 = vpop.permute.xlu0 %1462
  %s1465 = sor.u32 256, 56
  %1466 = vbcast.lane.b32.xlu0 %v1436, %s1465
  %v1467 = vpop.permute.xlu0 %1466
  %s1469 = sor.u32 256, 64
  %1470 = vbcast.lane.b32.xlu0 %v1436, %s1469
  %v1471 = vpop.permute.xlu0 %1470
  %s1473 = sor.u32 256, 72
  %1474 = vbcast.lane.b32.xlu0 %v1436, %s1473
  %v1475 = vpop.permute.xlu0 %1474
  %s1477 = sor.u32 256, 80
  %1478 = vbcast.lane.b32.xlu0 %v1436, %s1477
  %v1479 = vpop.permute.xlu0 %1478
  %s1481 = sor.u32 256, 88
  %1482 = vbcast.lane.b32.xlu0 %v1436, %s1481
  %v1483 = vpop.permute.xlu0 %1482
  %s1485 = sor.u32 256, 96
  %1486 = vbcast.lane.b32.xlu0 %v1436, %s1485
  %v1487 = vpop.permute.xlu0 %1486
  %s1489 = sor.u32 256, 104
  %1490 = vbcast.lane.b32.xlu0 %v1436, %s1489
  %v1491 = vpop.permute.xlu0 %1490
  %s1493 = sor.u32 256, 112
  %1494 = vbcast.lane.b32.xlu0 %v1436, %s1493
  %v1495 = vpop.permute.xlu0 %1494
  %s1497 = sor.u32 256, 120
  %1498 = vbcast.lane.b32.xlu0 %v1436, %s1497
  %v1499 = vpop.permute.xlu0 %1498
  %v1500 = vsel %vm1104, %v1238, 0.0
  %v1501 = vsel %vm1105, %v1238, 0.0
  %v1502 = vsel %vm1106, %v1242, 0.0
  %v1503 = vsel %vm1107, %v1242, 0.0
  %v1504 = vsel %vm1108, %v1246, 0.0
  %v1505 = vsel %vm1109, %v1246, 0.0
  %v1506 = vsel %vm1110, %v1250, 0.0
  %v1507 = vsel %vm1111, %v1250, 0.0
  %v1508 = vsel %vm1112, %v1254, 0.0
  %v1509 = vsel %vm1113, %v1254, 0.0
  %v1510 = vsel %vm1114, %v1258, 0.0
  %v1511 = vsel %vm1115, %v1258, 0.0
  %v1512 = vsel %vm1116, %v1262, 0.0
  %v1513 = vsel %vm1117, %v1262, 0.0
  %v1514 = vsel %vm1118, %v1266, 0.0
  %v1515 = vsel %vm1119, %v1266, 0.0
  %v1516 = vsel %vm1120, %v1270, 0.0
  %v1517 = vsel %vm1121, %v1270, 0.0
  %v1518 = vsel %vm1122, %v1274, 0.0
  %v1519 = vsel %vm1123, %v1274, 0.0
  %v1520 = vsel %vm1124, %v1278, 0.0
  %v1521 = vsel %vm1125, %v1278, 0.0
  %v1522 = vsel %vm1126, %v1282, 0.0
  %v1523 = vsel %vm1127, %v1282, 0.0
  %v1524 = vsel %vm1128, %v1286, 0.0
  %v1525 = vsel %vm1129, %v1286, 0.0
  %v1526 = vsel %vm1130, %v1290, 0.0
  %v1527 = vsel %vm1131, %v1290, 0.0
  %v1528 = vsel %vm1132, %v1294, 0.0
  %v1529 = vsel %vm1133, %v1294, 0.0
  %v1530 = vsel %vm1134, %v1298, 0.0
  %v1531 = vsel %vm1135, %v1298, 0.0
  %v1532 = vsel %vm1136, %v1305, 0.0
  %v1533 = vsel %vm1137, %v1305, 0.0
  %v1534 = vsel %vm1138, %v1309, 0.0
  %v1535 = vsel %vm1139, %v1309, 0.0
  %v1536 = vsel %vm1140, %v1313, 0.0
  %v1537 = vsel %vm1141, %v1313, 0.0
  %v1538 = vsel %vm1142, %v1317, 0.0
  %v1539 = vsel %vm1143, %v1317, 0.0
  %v1540 = vsel %vm1144, %v1321, 0.0
  %v1541 = vsel %vm1145, %v1321, 0.0
  %v1542 = vsel %vm1146, %v1325, 0.0
  %v1543 = vsel %vm1147, %v1325, 0.0
  %v1544 = vsel %vm1148, %v1329, 0.0
  %v1545 = vsel %vm1149, %v1329, 0.0
  %v1546 = vsel %vm1150, %v1333, 0.0
  %v1547 = vsel %vm1151, %v1333, 0.0
  %v1548 = vsel %vm1152, %v1337, 0.0
  %v1549 = vsel %vm1153, %v1337, 0.0
  %v1550 = vsel %vm1154, %v1341, 0.0
  %v1551 = vsel %vm1155, %v1341, 0.0
  %v1552 = vsel %vm1156, %v1345, 0.0
  %v1553 = vsel %vm1157, %v1345, 0.0
  %v1554 = vsel %vm1158, %v1349, 0.0
  %v1555 = vsel %vm1159, %v1349, 0.0
  %v1556 = vsel %vm1160, %v1353, 0.0
  %v1557 = vsel %vm1161, %v1353, 0.0
  %v1558 = vsel %vm1162, %v1357, 0.0
  %v1559 = vsel %vm1163, %v1357, 0.0
  %v1560 = vsel %vm1164, %v1361, 0.0
  %v1561 = vsel %vm1165, %v1361, 0.0
  %v1562 = vsel %vm1166, %v1365, 0.0
  %v1563 = vsel %vm1167, %v1365, 0.0
  %v1564 = vsel %vm1168, %v1372, 0.0
  %v1565 = vsel %vm1169, %v1372, 0.0
  %v1566 = vsel %vm1170, %v1376, 0.0
  %v1567 = vsel %vm1171, %v1376, 0.0
  %v1568 = vsel %vm1172, %v1380, 0.0
  %v1569 = vsel %vm1173, %v1380, 0.0
  %v1570 = vsel %vm1174, %v1384, 0.0
  %v1571 = vsel %vm1175, %v1384, 0.0
  %v1572 = vsel %vm1176, %v1388, 0.0
  %v1573 = vsel %vm1177, %v1388, 0.0
  %v1574 = vsel %vm1178, %v1392, 0.0
  %v1575 = vsel %vm1179, %v1392, 0.0
  %v1576 = vsel %vm1180, %v1396, 0.0
  %v1577 = vsel %vm1181, %v1396, 0.0
  %v1578 = vsel %vm1182, %v1400, 0.0
  %v1579 = vsel %vm1183, %v1400, 0.0
  %v1580 = vsel %vm1184, %v1404, 0.0
  %v1581 = vsel %vm1185, %v1404, 0.0
  %v1582 = vsel %vm1186, %v1408, 0.0
  %v1583 = vsel %vm1187, %v1408, 0.0
  %v1584 = vsel %vm1188, %v1412, 0.0
  %v1585 = vsel %vm1189, %v1412, 0.0
  %v1586 = vsel %vm1190, %v1416, 0.0
  %v1587 = vsel %vm1191, %v1416, 0.0
  %v1588 = vsel %vm1192, %v1420, 0.0
  %v1589 = vsel %vm1193, %v1420, 0.0
  %v1590 = vsel %vm1194, %v1424, 0.0
  %v1591 = vsel %vm1195, %v1424, 0.0
  %v1592 = vsel %vm1196, %v1428, 0.0
  %v1593 = vsel %vm1197, %v1428, 0.0
  %v1594 = vsel %vm1198, %v1432, 0.0
  %v1595 = vsel %vm1199, %v1432, 0.0
  %v1596 = vsel %vm1200, %v1439, 0.0
  %v1597 = vsel %vm1201, %v1439, 0.0
  %v1598 = vsel %vm1202, %v1443, 0.0
  %v1599 = vsel %vm1203, %v1443, 0.0
  %v1600 = vsel %vm1204, %v1447, 0.0
  %v1601 = vsel %vm1205, %v1447, 0.0
  %v1602 = vsel %vm1206, %v1451, 0.0
  %v1603 = vsel %vm1207, %v1451, 0.0
  %v1604 = vsel %vm1208, %v1455, 0.0
  %v1605 = vsel %vm1209, %v1455, 0.0
  %v1606 = vsel %vm1210, %v1459, 0.0
  %v1607 = vsel %vm1211, %v1459, 0.0
  %v1608 = vsel %vm1212, %v1463, 0.0
  %v1609 = vsel %vm1213, %v1463, 0.0
  %v1610 = vsel %vm1214, %v1467, 0.0
  %v1611 = vsel %vm1215, %v1467, 0.0
  %v1612 = vsel %vm1216, %v1471, 0.0
  %v1613 = vsel %vm1217, %v1471, 0.0
  %v1614 = vsel %vm1218, %v1475, 0.0
  %v1615 = vsel %vm1219, %v1475, 0.0
  %v1616 = vsel %vm1220, %v1479, 0.0
  %v1617 = vsel %vm1221, %v1479, 0.0
  %v1618 = vsel %vm1222, %v1483, 0.0
  %v1619 = vsel %vm1223, %v1483, 0.0
  %v1620 = vsel %vm1224, %v1487, 0.0
  %v1621 = vsel %vm1225, %v1487, 0.0
  %v1622 = vsel %vm1226, %v1491, 0.0
  %v1623 = vsel %vm1227, %v1491, 0.0
  %v1624 = vsel %vm1228, %v1495, 0.0
  %v1625 = vsel %vm1229, %v1495, 0.0
  %v1626 = vsel %vm1230, %v1499, 0.0
  %v1627 = vsel %vm1231, %v1499, 0.0
  %v1628 = vadd.f32 %v708, %v1500
  %v1629 = vadd.f32 %v709, %v1501
  %v1630 = vadd.f32 %v710, %v1502
  %v1631 = vadd.f32 %v711, %v1503
  %v1632 = vadd.f32 %v712, %v1504
  %v1633 = vadd.f32 %v713, %v1505
  %v1634 = vadd.f32 %v714, %v1506
  %v1635 = vadd.f32 %v715, %v1507
  %v1636 = vadd.f32 %v716, %v1508
  %v1637 = vadd.f32 %v717, %v1509
  %v1638 = vadd.f32 %v718, %v1510
  %v1639 = vadd.f32 %v719, %v1511
  %v1640 = vadd.f32 %v720, %v1512
  %v1641 = vadd.f32 %v721, %v1513
  %v1642 = vadd.f32 %v722, %v1514
  %v1643 = vadd.f32 %v723, %v1515
  %v1644 = vadd.f32 %v724, %v1516
  %v1645 = vadd.f32 %v725, %v1517
  %v1646 = vadd.f32 %v726, %v1518
  %v1647 = vadd.f32 %v727, %v1519
  %v1648 = vadd.f32 %v728, %v1520
  %v1649 = vadd.f32 %v729, %v1521
  %v1650 = vadd.f32 %v730, %v1522
  %v1651 = vadd.f32 %v731, %v1523
  %v1652 = vadd.f32 %v732, %v1524
  %v1653 = vadd.f32 %v733, %v1525
  %v1654 = vadd.f32 %v734, %v1526
  %v1655 = vadd.f32 %v735, %v1527
  %v1656 = vadd.f32 %v736, %v1528
  %v1657 = vadd.f32 %v737, %v1529
  %v1658 = vadd.f32 %v738, %v1530
  %v1659 = vadd.f32 %v739, %v1531
  %v1660 = vadd.f32 %v740, %v1532
  %v1661 = vadd.f32 %v741, %v1533
  %v1662 = vadd.f32 %v742, %v1534
  %v1663 = vadd.f32 %v743, %v1535
  %v1664 = vadd.f32 %v744, %v1536
  %v1665 = vadd.f32 %v745, %v1537
  %v1666 = vadd.f32 %v746, %v1538
  %v1667 = vadd.f32 %v747, %v1539
  %v1668 = vadd.f32 %v748, %v1540
  %v1669 = vadd.f32 %v749, %v1541
  %v1670 = vadd.f32 %v750, %v1542
  %v1671 = vadd.f32 %v751, %v1543
  %v1672 = vadd.f32 %v752, %v1544
  %v1673 = vadd.f32 %v753, %v1545
  %v1674 = vadd.f32 %v754, %v1546
  %v1675 = vadd.f32 %v755, %v1547
  %v1676 = vadd.f32 %v756, %v1548
  %v1677 = vadd.f32 %v757, %v1549
  %v1678 = vadd.f32 %v758, %v1550
  %v1679 = vadd.f32 %v759, %v1551
  %v1680 = vadd.f32 %v760, %v1552
  %v1681 = vadd.f32 %v761, %v1553
  %v1682 = vadd.f32 %v762, %v1554
  %v1683 = vadd.f32 %v763, %v1555
  %v1684 = vadd.f32 %v764, %v1556
  %v1685 = vadd.f32 %v765, %v1557
  %v1686 = vadd.f32 %v766, %v1558
  %v1687 = vadd.f32 %v767, %v1559
  %v1688 = vadd.f32 %v768, %v1560
  %v1689 = vadd.f32 %v769, %v1561
  %v1690 = vadd.f32 %v770, %v1562
  %v1691 = vadd.f32 %v771, %v1563
  %v1692 = vadd.f32 %v772, %v1564
  %v1693 = vadd.f32 %v773, %v1565
  %v1694 = vadd.f32 %v774, %v1566
  %v1695 = vadd.f32 %v775, %v1567
  %v1696 = vadd.f32 %v776, %v1568
  %v1697 = vadd.f32 %v777, %v1569
  %v1698 = vadd.f32 %v778, %v1570
  %v1699 = vadd.f32 %v779, %v1571
  %v1700 = vadd.f32 %v780, %v1572
  %v1701 = vadd.f32 %v781, %v1573
  %v1702 = vadd.f32 %v782, %v1574
  %v1703 = vadd.f32 %v783, %v1575
  %v1704 = vadd.f32 %v784, %v1576
  %v1705 = vadd.f32 %v785, %v1577
  %v1706 = vadd.f32 %v786, %v1578
  %v1707 = vadd.f32 %v787, %v1579
  %v1708 = vadd.f32 %v788, %v1580
  %v1709 = vadd.f32 %v789, %v1581
  %v1710 = vadd.f32 %v790, %v1582
  %v1711 = vadd.f32 %v791, %v1583
  %v1712 = vadd.f32 %v792, %v1584
  %v1713 = vadd.f32 %v793, %v1585
  %v1714 = vadd.f32 %v794, %v1586
  %v1715 = vadd.f32 %v795, %v1587
  %v1716 = vadd.f32 %v796, %v1588
  %v1717 = vadd.f32 %v797, %v1589
  %v1718 = vadd.f32 %v798, %v1590
  %v1719 = vadd.f32 %v799, %v1591
  %v1720 = vadd.f32 %v800, %v1592
  %v1721 = vadd.f32 %v801, %v1593
  %v1722 = vadd.f32 %v802, %v1594
  %v1723 = vadd.f32 %v803, %v1595
  %v1724 = vadd.f32 %v804, %v1596
  %v1725 = vadd.f32 %v805, %v1597
  %v1726 = vadd.f32 %v806, %v1598
  %v1727 = vadd.f32 %v807, %v1599
  %v1728 = vadd.f32 %v808, %v1600
  %v1729 = vadd.f32 %v809, %v1601
  %v1730 = vadd.f32 %v810, %v1602
  %v1731 = vadd.f32 %v811, %v1603
  %v1732 = vadd.f32 %v812, %v1604
  %v1733 = vadd.f32 %v813, %v1605
  %v1734 = vadd.f32 %v814, %v1606
  %v1735 = vadd.f32 %v815, %v1607
  %v1736 = vadd.f32 %v816, %v1608
  %v1737 = vadd.f32 %v817, %v1609
  %v1738 = vadd.f32 %v818, %v1610
  %v1739 = vadd.f32 %v819, %v1611
  %v1740 = vadd.f32 %v820, %v1612
  %v1741 = vadd.f32 %v821, %v1613
  %v1742 = vadd.f32 %v822, %v1614
  %v1743 = vadd.f32 %v823, %v1615
  %v1744 = vadd.f32 %v824, %v1616
  %v1745 = vadd.f32 %v825, %v1617
  %v1746 = vadd.f32 %v826, %v1618
  %v1747 = vadd.f32 %v827, %v1619
  %v1748 = vadd.f32 %v828, %v1620
  %v1749 = vadd.f32 %v829, %v1621
  %v1750 = vadd.f32 %v830, %v1622
  %v1751 = vadd.f32 %v831, %v1623
  %v1752 = vadd.f32 %v832, %v1624
  %v1753 = vadd.f32 %v833, %v1625
  %v1754 = vadd.f32 %v834, %v1626
  %v1755 = vadd.f32 %v835, %v1627
  %v1756 = vlaneseq
  %v1757 = vshrl.u32 %v1756, 7
  %v1758 = vsub.s32 0, %v1757
  %v1759 = vrot.slane %v33, %v1758
  %1761 = vbcast.lane.b32.xlu0 %v1759, 256
  %v1762 = vpop.permute.xlu0 %1761
  %s1764 = sor.u32 256, 8
  %1765 = vbcast.lane.b32.xlu0 %v1759, %s1764
  %v1766 = vpop.permute.xlu0 %1765
  %s1768 = sor.u32 256, 16
  %1769 = vbcast.lane.b32.xlu0 %v1759, %s1768
  %v1770 = vpop.permute.xlu0 %1769
  %s1772 = sor.u32 256, 24
  %1773 = vbcast.lane.b32.xlu0 %v1759, %s1772
  %v1774 = vpop.permute.xlu0 %1773
  %s1776 = sor.u32 256, 32
  %1777 = vbcast.lane.b32.xlu0 %v1759, %s1776
  %v1778 = vpop.permute.xlu0 %1777
  %s1780 = sor.u32 256, 40
  %1781 = vbcast.lane.b32.xlu0 %v1759, %s1780
  %v1782 = vpop.permute.xlu0 %1781
  %s1784 = sor.u32 256, 48
  %1785 = vbcast.lane.b32.xlu0 %v1759, %s1784
  %v1786 = vpop.permute.xlu0 %1785
  %s1788 = sor.u32 256, 56
  %1789 = vbcast.lane.b32.xlu0 %v1759, %s1788
  %v1790 = vpop.permute.xlu0 %1789
  %s1792 = sor.u32 256, 64
  %1793 = vbcast.lane.b32.xlu0 %v1759, %s1792
  %v1794 = vpop.permute.xlu0 %1793
  %s1796 = sor.u32 256, 72
  %1797 = vbcast.lane.b32.xlu0 %v1759, %s1796
  %v1798 = vpop.permute.xlu0 %1797
  %s1800 = sor.u32 256, 80
  %1801 = vbcast.lane.b32.xlu0 %v1759, %s1800
  %v1802 = vpop.permute.xlu0 %1801
  %s1804 = sor.u32 256, 88
  %1805 = vbcast.lane.b32.xlu0 %v1759, %s1804
  %v1806 = vpop.permute.xlu0 %1805
  %s1808 = sor.u32 256, 96
  %1809 = vbcast.lane.b32.xlu0 %v1759, %s1808
  %v1810 = vpop.permute.xlu0 %1809
  %s1812 = sor.u32 256, 104
  %1813 = vbcast.lane.b32.xlu0 %v1759, %s1812
  %v1814 = vpop.permute.xlu0 %1813
  %s1816 = sor.u32 256, 112
  %1817 = vbcast.lane.b32.xlu0 %v1759, %s1816
  %v1818 = vpop.permute.xlu0 %1817
  %s1820 = sor.u32 256, 120
  %1821 = vbcast.lane.b32.xlu0 %v1759, %s1820
  %v1822 = vpop.permute.xlu0 %1821
  %v1823 = vlaneseq
  %v1824 = vshrl.u32 %v1823, 7
  %v1825 = vsub.s32 1, %v1824
  %v1826 = vrot.slane %v33, %v1825
  %1828 = vbcast.lane.b32.xlu0 %v1826, 256
  %v1829 = vpop.permute.xlu0 %1828
  %s1831 = sor.u32 256, 8
  %1832 = vbcast.lane.b32.xlu0 %v1826, %s1831
  %v1833 = vpop.permute.xlu0 %1832
  %s1835 = sor.u32 256, 16
  %1836 = vbcast.lane.b32.xlu0 %v1826, %s1835
  %v1837 = vpop.permute.xlu0 %1836
  %s1839 = sor.u32 256, 24
  %1840 = vbcast.lane.b32.xlu0 %v1826, %s1839
  %v1841 = vpop.permute.xlu0 %1840
  %s1843 = sor.u32 256, 32
  %1844 = vbcast.lane.b32.xlu0 %v1826, %s1843
  %v1845 = vpop.permute.xlu0 %1844
  %s1847 = sor.u32 256, 40
  %1848 = vbcast.lane.b32.xlu0 %v1826, %s1847
  %v1849 = vpop.permute.xlu0 %1848
  %s1851 = sor.u32 256, 48
  %1852 = vbcast.lane.b32.xlu0 %v1826, %s1851
  %v1853 = vpop.permute.xlu0 %1852
  %s1855 = sor.u32 256, 56
  %1856 = vbcast.lane.b32.xlu0 %v1826, %s1855
  %v1857 = vpop.permute.xlu0 %1856
  %s1859 = sor.u32 256, 64
  %1860 = vbcast.lane.b32.xlu0 %v1826, %s1859
  %v1861 = vpop.permute.xlu0 %1860
  %s1863 = sor.u32 256, 72
  %1864 = vbcast.lane.b32.xlu0 %v1826, %s1863
  %v1865 = vpop.permute.xlu0 %1864
  %s1867 = sor.u32 256, 80
  %1868 = vbcast.lane.b32.xlu0 %v1826, %s1867
  %v1869 = vpop.permute.xlu0 %1868
  %s1871 = sor.u32 256, 88
  %1872 = vbcast.lane.b32.xlu0 %v1826, %s1871
  %v1873 = vpop.permute.xlu0 %1872
  %s1875 = sor.u32 256, 96
  %1876 = vbcast.lane.b32.xlu0 %v1826, %s1875
  %v1877 = vpop.permute.xlu0 %1876
  %s1879 = sor.u32 256, 104
  %1880 = vbcast.lane.b32.xlu0 %v1826, %s1879
  %v1881 = vpop.permute.xlu0 %1880
  %s1883 = sor.u32 256, 112
  %1884 = vbcast.lane.b32.xlu0 %v1826, %s1883
  %v1885 = vpop.permute.xlu0 %1884
  %s1887 = sor.u32 256, 120
  %1888 = vbcast.lane.b32.xlu0 %v1826, %s1887
  %v1889 = vpop.permute.xlu0 %1888
  %v1890 = vlaneseq
  %v1891 = vshrl.u32 %v1890, 7
  %v1892 = vsub.s32 2, %v1891
  %v1893 = vrot.slane %v33, %v1892
  %1895 = vbcast.lane.b32.xlu0 %v1893, 256
  %v1896 = vpop.permute.xlu0 %1895
  %s1898 = sor.u32 256, 8
  %1899 = vbcast.lane.b32.xlu0 %v1893, %s1898
  %v1900 = vpop.permute.xlu0 %1899
  %s1902 = sor.u32 256, 16
  %1903 = vbcast.lane.b32.xlu0 %v1893, %s1902
  %v1904 = vpop.permute.xlu0 %1903
  %s1906 = sor.u32 256, 24
  %1907 = vbcast.lane.b32.xlu0 %v1893, %s1906
  %v1908 = vpop.permute.xlu0 %1907
  %s1910 = sor.u32 256, 32
  %1911 = vbcast.lane.b32.xlu0 %v1893, %s1910
  %v1912 = vpop.permute.xlu0 %1911
  %s1914 = sor.u32 256, 40
  %1915 = vbcast.lane.b32.xlu0 %v1893, %s1914
  %v1916 = vpop.permute.xlu0 %1915
  %s1918 = sor.u32 256, 48
  %1919 = vbcast.lane.b32.xlu0 %v1893, %s1918
  %v1920 = vpop.permute.xlu0 %1919
  %s1922 = sor.u32 256, 56
  %1923 = vbcast.lane.b32.xlu0 %v1893, %s1922
  %v1924 = vpop.permute.xlu0 %1923
  %s1926 = sor.u32 256, 64
  %1927 = vbcast.lane.b32.xlu0 %v1893, %s1926
  %v1928 = vpop.permute.xlu0 %1927
  %s1930 = sor.u32 256, 72
  %1931 = vbcast.lane.b32.xlu0 %v1893, %s1930
  %v1932 = vpop.permute.xlu0 %1931
  %s1934 = sor.u32 256, 80
  %1935 = vbcast.lane.b32.xlu0 %v1893, %s1934
  %v1936 = vpop.permute.xlu0 %1935
  %s1938 = sor.u32 256, 88
  %1939 = vbcast.lane.b32.xlu0 %v1893, %s1938
  %v1940 = vpop.permute.xlu0 %1939
  %s1942 = sor.u32 256, 96
  %1943 = vbcast.lane.b32.xlu0 %v1893, %s1942
  %v1944 = vpop.permute.xlu0 %1943
  %s1946 = sor.u32 256, 104
  %1947 = vbcast.lane.b32.xlu0 %v1893, %s1946
  %v1948 = vpop.permute.xlu0 %1947
  %s1950 = sor.u32 256, 112
  %1951 = vbcast.lane.b32.xlu0 %v1893, %s1950
  %v1952 = vpop.permute.xlu0 %1951
  %s1954 = sor.u32 256, 120
  %1955 = vbcast.lane.b32.xlu0 %v1893, %s1954
  %v1956 = vpop.permute.xlu0 %1955
  %v1957 = vlaneseq
  %v1958 = vshrl.u32 %v1957, 7
  %v1959 = vsub.s32 3, %v1958
  %v1960 = vrot.slane %v33, %v1959
  %1962 = vbcast.lane.b32.xlu0 %v1960, 256
  %v1963 = vpop.permute.xlu0 %1962
  %s1965 = sor.u32 256, 8
  %1966 = vbcast.lane.b32.xlu0 %v1960, %s1965
  %v1967 = vpop.permute.xlu0 %1966
  %s1969 = sor.u32 256, 16
  %1970 = vbcast.lane.b32.xlu0 %v1960, %s1969
  %v1971 = vpop.permute.xlu0 %1970
  %s1973 = sor.u32 256, 24
  %1974 = vbcast.lane.b32.xlu0 %v1960, %s1973
  %v1975 = vpop.permute.xlu0 %1974
  %s1977 = sor.u32 256, 32
  %1978 = vbcast.lane.b32.xlu0 %v1960, %s1977
  %v1979 = vpop.permute.xlu0 %1978
  %s1981 = sor.u32 256, 40
  %1982 = vbcast.lane.b32.xlu0 %v1960, %s1981
  %v1983 = vpop.permute.xlu0 %1982
  %s1985 = sor.u32 256, 48
  %1986 = vbcast.lane.b32.xlu0 %v1960, %s1985
  %v1987 = vpop.permute.xlu0 %1986
  %s1989 = sor.u32 256, 56
  %1990 = vbcast.lane.b32.xlu0 %v1960, %s1989
  %v1991 = vpop.permute.xlu0 %1990
  %s1993 = sor.u32 256, 64
  %1994 = vbcast.lane.b32.xlu0 %v1960, %s1993
  %v1995 = vpop.permute.xlu0 %1994
  %s1997 = sor.u32 256, 72
  %1998 = vbcast.lane.b32.xlu0 %v1960, %s1997
  %v1999 = vpop.permute.xlu0 %1998
  %s2001 = sor.u32 256, 80
  %2002 = vbcast.lane.b32.xlu0 %v1960, %s2001
  %v2003 = vpop.permute.xlu0 %2002
  %s2005 = sor.u32 256, 88
  %2006 = vbcast.lane.b32.xlu0 %v1960, %s2005
  %v2007 = vpop.permute.xlu0 %2006
  %s2009 = sor.u32 256, 96
  %2010 = vbcast.lane.b32.xlu0 %v1960, %s2009
  %v2011 = vpop.permute.xlu0 %2010
  %s2013 = sor.u32 256, 104
  %2014 = vbcast.lane.b32.xlu0 %v1960, %s2013
  %v2015 = vpop.permute.xlu0 %2014
  %s2017 = sor.u32 256, 112
  %2018 = vbcast.lane.b32.xlu0 %v1960, %s2017
  %v2019 = vpop.permute.xlu0 %2018
  %s2021 = sor.u32 256, 120
  %2022 = vbcast.lane.b32.xlu0 %v1960, %s2021
  %v2023 = vpop.permute.xlu0 %2022
  %vm2024 = vcmp.eq.s32.totalorder %v1762, %v42
  %vm2025 = vcmp.eq.s32.totalorder %v1762, %v43
  %vm2026 = vcmp.eq.s32.totalorder %v1766, %v42
  %vm2027 = vcmp.eq.s32.totalorder %v1766, %v43
  %vm2028 = vcmp.eq.s32.totalorder %v1770, %v42
  %vm2029 = vcmp.eq.s32.totalorder %v1770, %v43
  %vm2030 = vcmp.eq.s32.totalorder %v1774, %v42
  %vm2031 = vcmp.eq.s32.totalorder %v1774, %v43
  %vm2032 = vcmp.eq.s32.totalorder %v1778, %v42
  %vm2033 = vcmp.eq.s32.totalorder %v1778, %v43
  %vm2034 = vcmp.eq.s32.totalorder %v1782, %v42
  %vm2035 = vcmp.eq.s32.totalorder %v1782, %v43
  %vm2036 = vcmp.eq.s32.totalorder %v1786, %v42
  %vm2037 = vcmp.eq.s32.totalorder %v1786, %v43
  %vm2038 = vcmp.eq.s32.totalorder %v1790, %v42
  %vm2039 = vcmp.eq.s32.totalorder %v1790, %v43
  %vm2040 = vcmp.eq.s32.totalorder %v1794, %v42
  %vm2041 = vcmp.eq.s32.totalorder %v1794, %v43
  %vm2042 = vcmp.eq.s32.totalorder %v1798, %v42
  %vm2043 = vcmp.eq.s32.totalorder %v1798, %v43
  %vm2044 = vcmp.eq.s32.totalorder %v1802, %v42
  %vm2045 = vcmp.eq.s32.totalorder %v1802, %v43
  %vm2046 = vcmp.eq.s32.totalorder %v1806, %v42
  %vm2047 = vcmp.eq.s32.totalorder %v1806, %v43
  %vm2048 = vcmp.eq.s32.totalorder %v1810, %v42
  %vm2049 = vcmp.eq.s32.totalorder %v1810, %v43
  %vm2050 = vcmp.eq.s32.totalorder %v1814, %v42
  %vm2051 = vcmp.eq.s32.totalorder %v1814, %v43
  %vm2052 = vcmp.eq.s32.totalorder %v1818, %v42
  %vm2053 = vcmp.eq.s32.totalorder %v1818, %v43
  %vm2054 = vcmp.eq.s32.totalorder %v1822, %v42
  %vm2055 = vcmp.eq.s32.totalorder %v1822, %v43
  %vm2056 = vcmp.eq.s32.totalorder %v1829, %v42
  %vm2057 = vcmp.eq.s32.totalorder %v1829, %v43
  %vm2058 = vcmp.eq.s32.totalorder %v1833, %v42
  %vm2059 = vcmp.eq.s32.totalorder %v1833, %v43
  %vm2060 = vcmp.eq.s32.totalorder %v1837, %v42
  %vm2061 = vcmp.eq.s32.totalorder %v1837, %v43
  %vm2062 = vcmp.eq.s32.totalorder %v1841, %v42
  %vm2063 = vcmp.eq.s32.totalorder %v1841, %v43
  %vm2064 = vcmp.eq.s32.totalorder %v1845, %v42
  %vm2065 = vcmp.eq.s32.totalorder %v1845, %v43
  %vm2066 = vcmp.eq.s32.totalorder %v1849, %v42
  %vm2067 = vcmp.eq.s32.totalorder %v1849, %v43
  %vm2068 = vcmp.eq.s32.totalorder %v1853, %v42
  %vm2069 = vcmp.eq.s32.totalorder %v1853, %v43
  %vm2070 = vcmp.eq.s32.totalorder %v1857, %v42
  %vm2071 = vcmp.eq.s32.totalorder %v1857, %v43
  %vm2072 = vcmp.eq.s32.totalorder %v1861, %v42
  %vm2073 = vcmp.eq.s32.totalorder %v1861, %v43
  %vm2074 = vcmp.eq.s32.totalorder %v1865, %v42
  %vm2075 = vcmp.eq.s32.totalorder %v1865, %v43
  %vm2076 = vcmp.eq.s32.totalorder %v1869, %v42
  %vm2077 = vcmp.eq.s32.totalorder %v1869, %v43
  %vm2078 = vcmp.eq.s32.totalorder %v1873, %v42
  %vm2079 = vcmp.eq.s32.totalorder %v1873, %v43
  %vm2080 = vcmp.eq.s32.totalorder %v1877, %v42
  %vm2081 = vcmp.eq.s32.totalorder %v1877, %v43
  %vm2082 = vcmp.eq.s32.totalorder %v1881, %v42
  %vm2083 = vcmp.eq.s32.totalorder %v1881, %v43
  %vm2084 = vcmp.eq.s32.totalorder %v1885, %v42
  %vm2085 = vcmp.eq.s32.totalorder %v1885, %v43
  %vm2086 = vcmp.eq.s32.totalorder %v1889, %v42
  %vm2087 = vcmp.eq.s32.totalorder %v1889, %v43
  %vm2088 = vcmp.eq.s32.totalorder %v1896, %v42
  %vm2089 = vcmp.eq.s32.totalorder %v1896, %v43
  %vm2090 = vcmp.eq.s32.totalorder %v1900, %v42
  %vm2091 = vcmp.eq.s32.totalorder %v1900, %v43
  %vm2092 = vcmp.eq.s32.totalorder %v1904, %v42
  %vm2093 = vcmp.eq.s32.totalorder %v1904, %v43
  %vm2094 = vcmp.eq.s32.totalorder %v1908, %v42
  %vm2095 = vcmp.eq.s32.totalorder %v1908, %v43
  %vm2096 = vcmp.eq.s32.totalorder %v1912, %v42
  %vm2097 = vcmp.eq.s32.totalorder %v1912, %v43
  %vm2098 = vcmp.eq.s32.totalorder %v1916, %v42
  %vm2099 = vcmp.eq.s32.totalorder %v1916, %v43
  %vm2100 = vcmp.eq.s32.totalorder %v1920, %v42
  %vm2101 = vcmp.eq.s32.totalorder %v1920, %v43
  %vm2102 = vcmp.eq.s32.totalorder %v1924, %v42
  %vm2103 = vcmp.eq.s32.totalorder %v1924, %v43
  %vm2104 = vcmp.eq.s32.totalorder %v1928, %v42
  %vm2105 = vcmp.eq.s32.totalorder %v1928, %v43
  %vm2106 = vcmp.eq.s32.totalorder %v1932, %v42
  %vm2107 = vcmp.eq.s32.totalorder %v1932, %v43
  %vm2108 = vcmp.eq.s32.totalorder %v1936, %v42
  %vm2109 = vcmp.eq.s32.totalorder %v1936, %v43
  %vm2110 = vcmp.eq.s32.totalorder %v1940, %v42
  %vm2111 = vcmp.eq.s32.totalorder %v1940, %v43
  %vm2112 = vcmp.eq.s32.totalorder %v1944, %v42
  %vm2113 = vcmp.eq.s32.totalorder %v1944, %v43
  %vm2114 = vcmp.eq.s32.totalorder %v1948, %v42
  %vm2115 = vcmp.eq.s32.totalorder %v1948, %v43
  %vm2116 = vcmp.eq.s32.totalorder %v1952, %v42
  %vm2117 = vcmp.eq.s32.totalorder %v1952, %v43
  %vm2118 = vcmp.eq.s32.totalorder %v1956, %v42
  %vm2119 = vcmp.eq.s32.totalorder %v1956, %v43
  %vm2120 = vcmp.eq.s32.totalorder %v1963, %v42
  %vm2121 = vcmp.eq.s32.totalorder %v1963, %v43
  %vm2122 = vcmp.eq.s32.totalorder %v1967, %v42
  %vm2123 = vcmp.eq.s32.totalorder %v1967, %v43
  %vm2124 = vcmp.eq.s32.totalorder %v1971, %v42
  %vm2125 = vcmp.eq.s32.totalorder %v1971, %v43
  %vm2126 = vcmp.eq.s32.totalorder %v1975, %v42
  %vm2127 = vcmp.eq.s32.totalorder %v1975, %v43
  %vm2128 = vcmp.eq.s32.totalorder %v1979, %v42
  %vm2129 = vcmp.eq.s32.totalorder %v1979, %v43
  %vm2130 = vcmp.eq.s32.totalorder %v1983, %v42
  %vm2131 = vcmp.eq.s32.totalorder %v1983, %v43
  %vm2132 = vcmp.eq.s32.totalorder %v1987, %v42
  %vm2133 = vcmp.eq.s32.totalorder %v1987, %v43
  %vm2134 = vcmp.eq.s32.totalorder %v1991, %v42
  %vm2135 = vcmp.eq.s32.totalorder %v1991, %v43
  %vm2136 = vcmp.eq.s32.totalorder %v1995, %v42
  %vm2137 = vcmp.eq.s32.totalorder %v1995, %v43
  %vm2138 = vcmp.eq.s32.totalorder %v1999, %v42
  %vm2139 = vcmp.eq.s32.totalorder %v1999, %v43
  %vm2140 = vcmp.eq.s32.totalorder %v2003, %v42
  %vm2141 = vcmp.eq.s32.totalorder %v2003, %v43
  %vm2142 = vcmp.eq.s32.totalorder %v2007, %v42
  %vm2143 = vcmp.eq.s32.totalorder %v2007, %v43
  %vm2144 = vcmp.eq.s32.totalorder %v2011, %v42
  %vm2145 = vcmp.eq.s32.totalorder %v2011, %v43
  %vm2146 = vcmp.eq.s32.totalorder %v2015, %v42
  %vm2147 = vcmp.eq.s32.totalorder %v2015, %v43
  %vm2148 = vcmp.eq.s32.totalorder %v2019, %v42
  %vm2149 = vcmp.eq.s32.totalorder %v2019, %v43
  %vm2150 = vcmp.eq.s32.totalorder %v2023, %v42
  %vm2151 = vcmp.eq.s32.totalorder %v2023, %v43
  %v2152 = vlaneseq
  %v2153 = vshrl.u32 %v2152, 7
  %v2154 = vsub.s32 0, %v2153
  %v2155 = vrot.slane %v39, %v2154
  %2157 = vbcast.lane.b32.xlu0 %v2155, 256
  %v2158 = vpop.permute.xlu0 %2157
  %s2160 = sor.u32 256, 8
  %2161 = vbcast.lane.b32.xlu0 %v2155, %s2160
  %v2162 = vpop.permute.xlu0 %2161
  %s2164 = sor.u32 256, 16
  %2165 = vbcast.lane.b32.xlu0 %v2155, %s2164
  %v2166 = vpop.permute.xlu0 %2165
  %s2168 = sor.u32 256, 24
  %2169 = vbcast.lane.b32.xlu0 %v2155, %s2168
  %v2170 = vpop.permute.xlu0 %2169
  %s2172 = sor.u32 256, 32
  %2173 = vbcast.lane.b32.xlu0 %v2155, %s2172
  %v2174 = vpop.permute.xlu0 %2173
  %s2176 = sor.u32 256, 40
  %2177 = vbcast.lane.b32.xlu0 %v2155, %s2176
  %v2178 = vpop.permute.xlu0 %2177
  %s2180 = sor.u32 256, 48
  %2181 = vbcast.lane.b32.xlu0 %v2155, %s2180
  %v2182 = vpop.permute.xlu0 %2181
  %s2184 = sor.u32 256, 56
  %2185 = vbcast.lane.b32.xlu0 %v2155, %s2184
  %v2186 = vpop.permute.xlu0 %2185
  %s2188 = sor.u32 256, 64
  %2189 = vbcast.lane.b32.xlu0 %v2155, %s2188
  %v2190 = vpop.permute.xlu0 %2189
  %s2192 = sor.u32 256, 72
  %2193 = vbcast.lane.b32.xlu0 %v2155, %s2192
  %v2194 = vpop.permute.xlu0 %2193
  %s2196 = sor.u32 256, 80
  %2197 = vbcast.lane.b32.xlu0 %v2155, %s2196
  %v2198 = vpop.permute.xlu0 %2197
  %s2200 = sor.u32 256, 88
  %2201 = vbcast.lane.b32.xlu0 %v2155, %s2200
  %v2202 = vpop.permute.xlu0 %2201
  %s2204 = sor.u32 256, 96
  %2205 = vbcast.lane.b32.xlu0 %v2155, %s2204
  %v2206 = vpop.permute.xlu0 %2205
  %s2208 = sor.u32 256, 104
  %2209 = vbcast.lane.b32.xlu0 %v2155, %s2208
  %v2210 = vpop.permute.xlu0 %2209
  %s2212 = sor.u32 256, 112
  %2213 = vbcast.lane.b32.xlu0 %v2155, %s2212
  %v2214 = vpop.permute.xlu0 %2213
  %s2216 = sor.u32 256, 120
  %2217 = vbcast.lane.b32.xlu0 %v2155, %s2216
  %v2218 = vpop.permute.xlu0 %2217
  %v2219 = vlaneseq
  %v2220 = vshrl.u32 %v2219, 7
  %v2221 = vsub.s32 1, %v2220
  %v2222 = vrot.slane %v39, %v2221
  %2224 = vbcast.lane.b32.xlu0 %v2222, 256
  %v2225 = vpop.permute.xlu0 %2224
  %s2227 = sor.u32 256, 8
  %2228 = vbcast.lane.b32.xlu0 %v2222, %s2227
  %v2229 = vpop.permute.xlu0 %2228
  %s2231 = sor.u32 256, 16
  %2232 = vbcast.lane.b32.xlu0 %v2222, %s2231
  %v2233 = vpop.permute.xlu0 %2232
  %s2235 = sor.u32 256, 24
  %2236 = vbcast.lane.b32.xlu0 %v2222, %s2235
  %v2237 = vpop.permute.xlu0 %2236
  %s2239 = sor.u32 256, 32
  %2240 = vbcast.lane.b32.xlu0 %v2222, %s2239
  %v2241 = vpop.permute.xlu0 %2240
  %s2243 = sor.u32 256, 40
  %2244 = vbcast.lane.b32.xlu0 %v2222, %s2243
  %v2245 = vpop.permute.xlu0 %2244
  %s2247 = sor.u32 256, 48
  %2248 = vbcast.lane.b32.xlu0 %v2222, %s2247
  %v2249 = vpop.permute.xlu0 %2248
  %s2251 = sor.u32 256, 56
  %2252 = vbcast.lane.b32.xlu0 %v2222, %s2251
  %v2253 = vpop.permute.xlu0 %2252
  %s2255 = sor.u32 256, 64
  %2256 = vbcast.lane.b32.xlu0 %v2222, %s2255
  %v2257 = vpop.permute.xlu0 %2256
  %s2259 = sor.u32 256, 72
  %2260 = vbcast.lane.b32.xlu0 %v2222, %s2259
  %v2261 = vpop.permute.xlu0 %2260
  %s2263 = sor.u32 256, 80
  %2264 = vbcast.lane.b32.xlu0 %v2222, %s2263
  %v2265 = vpop.permute.xlu0 %2264
  %s2267 = sor.u32 256, 88
  %2268 = vbcast.lane.b32.xlu0 %v2222, %s2267
  %v2269 = vpop.permute.xlu0 %2268
  %s2271 = sor.u32 256, 96
  %2272 = vbcast.lane.b32.xlu0 %v2222, %s2271
  %v2273 = vpop.permute.xlu0 %2272
  %s2275 = sor.u32 256, 104
  %2276 = vbcast.lane.b32.xlu0 %v2222, %s2275
  %v2277 = vpop.permute.xlu0 %2276
  %s2279 = sor.u32 256, 112
  %2280 = vbcast.lane.b32.xlu0 %v2222, %s2279
  %v2281 = vpop.permute.xlu0 %2280
  %s2283 = sor.u32 256, 120
  %2284 = vbcast.lane.b32.xlu0 %v2222, %s2283
  %v2285 = vpop.permute.xlu0 %2284
  %v2286 = vlaneseq
  %v2287 = vshrl.u32 %v2286, 7
  %v2288 = vsub.s32 2, %v2287
  %v2289 = vrot.slane %v39, %v2288
  %2291 = vbcast.lane.b32.xlu0 %v2289, 256
  %v2292 = vpop.permute.xlu0 %2291
  %s2294 = sor.u32 256, 8
  %2295 = vbcast.lane.b32.xlu0 %v2289, %s2294
  %v2296 = vpop.permute.xlu0 %2295
  %s2298 = sor.u32 256, 16
  %2299 = vbcast.lane.b32.xlu0 %v2289, %s2298
  %v2300 = vpop.permute.xlu0 %2299
  %s2302 = sor.u32 256, 24
  %2303 = vbcast.lane.b32.xlu0 %v2289, %s2302
  %v2304 = vpop.permute.xlu0 %2303
  %s2306 = sor.u32 256, 32
  %2307 = vbcast.lane.b32.xlu0 %v2289, %s2306
  %v2308 = vpop.permute.xlu0 %2307
  %s2310 = sor.u32 256, 40
  %2311 = vbcast.lane.b32.xlu0 %v2289, %s2310
  %v2312 = vpop.permute.xlu0 %2311
  %s2314 = sor.u32 256, 48
  %2315 = vbcast.lane.b32.xlu0 %v2289, %s2314
  %v2316 = vpop.permute.xlu0 %2315
  %s2318 = sor.u32 256, 56
  %2319 = vbcast.lane.b32.xlu0 %v2289, %s2318
  %v2320 = vpop.permute.xlu0 %2319
  %s2322 = sor.u32 256, 64
  %2323 = vbcast.lane.b32.xlu0 %v2289, %s2322
  %v2324 = vpop.permute.xlu0 %2323
  %s2326 = sor.u32 256, 72
  %2327 = vbcast.lane.b32.xlu0 %v2289, %s2326
  %v2328 = vpop.permute.xlu0 %2327
  %s2330 = sor.u32 256, 80
  %2331 = vbcast.lane.b32.xlu0 %v2289, %s2330
  %v2332 = vpop.permute.xlu0 %2331
  %s2334 = sor.u32 256, 88
  %2335 = vbcast.lane.b32.xlu0 %v2289, %s2334
  %v2336 = vpop.permute.xlu0 %2335
  %s2338 = sor.u32 256, 96
  %2339 = vbcast.lane.b32.xlu0 %v2289, %s2338
  %v2340 = vpop.permute.xlu0 %2339
  %s2342 = sor.u32 256, 104
  %2343 = vbcast.lane.b32.xlu0 %v2289, %s2342
  %v2344 = vpop.permute.xlu0 %2343
  %s2346 = sor.u32 256, 112
  %2347 = vbcast.lane.b32.xlu0 %v2289, %s2346
  %v2348 = vpop.permute.xlu0 %2347
  %s2350 = sor.u32 256, 120
  %2351 = vbcast.lane.b32.xlu0 %v2289, %s2350
  %v2352 = vpop.permute.xlu0 %2351
  %v2353 = vlaneseq
  %v2354 = vshrl.u32 %v2353, 7
  %v2355 = vsub.s32 3, %v2354
  %v2356 = vrot.slane %v39, %v2355
  %2358 = vbcast.lane.b32.xlu0 %v2356, 256
  %v2359 = vpop.permute.xlu0 %2358
  %s2361 = sor.u32 256, 8
  %2362 = vbcast.lane.b32.xlu0 %v2356, %s2361
  %v2363 = vpop.permute.xlu0 %2362
  %s2365 = sor.u32 256, 16
  %2366 = vbcast.lane.b32.xlu0 %v2356, %s2365
  %v2367 = vpop.permute.xlu0 %2366
  %s2369 = sor.u32 256, 24
  %2370 = vbcast.lane.b32.xlu0 %v2356, %s2369
  %v2371 = vpop.permute.xlu0 %2370
  %s2373 = sor.u32 256, 32
  %2374 = vbcast.lane.b32.xlu0 %v2356, %s2373
  %v2375 = vpop.permute.xlu0 %2374
  %s2377 = sor.u32 256, 40
  %2378 = vbcast.lane.b32.xlu0 %v2356, %s2377
  %v2379 = vpop.permute.xlu0 %2378
  %s2381 = sor.u32 256, 48
  %2382 = vbcast.lane.b32.xlu0 %v2356, %s2381
  %v2383 = vpop.permute.xlu0 %2382
  %s2385 = sor.u32 256, 56
  %2386 = vbcast.lane.b32.xlu0 %v2356, %s2385
  %v2387 = vpop.permute.xlu0 %2386
  %s2389 = sor.u32 256, 64
  %2390 = vbcast.lane.b32.xlu0 %v2356, %s2389
  %v2391 = vpop.permute.xlu0 %2390
  %s2393 = sor.u32 256, 72
  %2394 = vbcast.lane.b32.xlu0 %v2356, %s2393
  %v2395 = vpop.permute.xlu0 %2394
  %s2397 = sor.u32 256, 80
  %2398 = vbcast.lane.b32.xlu0 %v2356, %s2397
  %v2399 = vpop.permute.xlu0 %2398
  %s2401 = sor.u32 256, 88
  %2402 = vbcast.lane.b32.xlu0 %v2356, %s2401
  %v2403 = vpop.permute.xlu0 %2402
  %s2405 = sor.u32 256, 96
  %2406 = vbcast.lane.b32.xlu0 %v2356, %s2405
  %v2407 = vpop.permute.xlu0 %2406
  %s2409 = sor.u32 256, 104
  %2410 = vbcast.lane.b32.xlu0 %v2356, %s2409
  %v2411 = vpop.permute.xlu0 %2410
  %s2413 = sor.u32 256, 112
  %2414 = vbcast.lane.b32.xlu0 %v2356, %s2413
  %v2415 = vpop.permute.xlu0 %2414
  %s2417 = sor.u32 256, 120
  %2418 = vbcast.lane.b32.xlu0 %v2356, %s2417
  %v2419 = vpop.permute.xlu0 %2418
  %v2420 = vsel %vm2024, %v2158, 0.0
  %v2421 = vsel %vm2025, %v2158, 0.0
  %v2422 = vsel %vm2026, %v2162, 0.0
  %v2423 = vsel %vm2027, %v2162, 0.0
  %v2424 = vsel %vm2028, %v2166, 0.0
  %v2425 = vsel %vm2029, %v2166, 0.0
  %v2426 = vsel %vm2030, %v2170, 0.0
  %v2427 = vsel %vm2031, %v2170, 0.0
  %v2428 = vsel %vm2032, %v2174, 0.0
  %v2429 = vsel %vm2033, %v2174, 0.0
  %v2430 = vsel %vm2034, %v2178, 0.0
  %v2431 = vsel %vm2035, %v2178, 0.0
  %v2432 = vsel %vm2036, %v2182, 0.0
  %v2433 = vsel %vm2037, %v2182, 0.0
  %v2434 = vsel %vm2038, %v2186, 0.0
  %v2435 = vsel %vm2039, %v2186, 0.0
  %v2436 = vsel %vm2040, %v2190, 0.0
  %v2437 = vsel %vm2041, %v2190, 0.0
  %v2438 = vsel %vm2042, %v2194, 0.0
  %v2439 = vsel %vm2043, %v2194, 0.0
  %v2440 = vsel %vm2044, %v2198, 0.0
  %v2441 = vsel %vm2045, %v2198, 0.0
  %v2442 = vsel %vm2046, %v2202, 0.0
  %v2443 = vsel %vm2047, %v2202, 0.0
  %v2444 = vsel %vm2048, %v2206, 0.0
  %v2445 = vsel %vm2049, %v2206, 0.0
  %v2446 = vsel %vm2050, %v2210, 0.0
  %v2447 = vsel %vm2051, %v2210, 0.0
  %v2448 = vsel %vm2052, %v2214, 0.0
  %v2449 = vsel %vm2053, %v2214, 0.0
  %v2450 = vsel %vm2054, %v2218, 0.0
  %v2451 = vsel %vm2055, %v2218, 0.0
  %v2452 = vsel %vm2056, %v2225, 0.0
  %v2453 = vsel %vm2057, %v2225, 0.0
  %v2454 = vsel %vm2058, %v2229, 0.0
  %v2455 = vsel %vm2059, %v2229, 0.0
  %v2456 = vsel %vm2060, %v2233, 0.0
  %v2457 = vsel %vm2061, %v2233, 0.0
  %v2458 = vsel %vm2062, %v2237, 0.0
  %v2459 = vsel %vm2063, %v2237, 0.0
  %v2460 = vsel %vm2064, %v2241, 0.0
  %v2461 = vsel %vm2065, %v2241, 0.0
  %v2462 = vsel %vm2066, %v2245, 0.0
  %v2463 = vsel %vm2067, %v2245, 0.0
  %v2464 = vsel %vm2068, %v2249, 0.0
  %v2465 = vsel %vm2069, %v2249, 0.0
  %v2466 = vsel %vm2070, %v2253, 0.0
  %v2467 = vsel %vm2071, %v2253, 0.0
  %v2468 = vsel %vm2072, %v2257, 0.0
  %v2469 = vsel %vm2073, %v2257, 0.0
  %v2470 = vsel %vm2074, %v2261, 0.0
  %v2471 = vsel %vm2075, %v2261, 0.0
  %v2472 = vsel %vm2076, %v2265, 0.0
  %v2473 = vsel %vm2077, %v2265, 0.0
  %v2474 = vsel %vm2078, %v2269, 0.0
  %v2475 = vsel %vm2079, %v2269, 0.0
  %v2476 = vsel %vm2080, %v2273, 0.0
  %v2477 = vsel %vm2081, %v2273, 0.0
  %v2478 = vsel %vm2082, %v2277, 0.0
  %v2479 = vsel %vm2083, %v2277, 0.0
  %v2480 = vsel %vm2084, %v2281, 0.0
  %v2481 = vsel %vm2085, %v2281, 0.0
  %v2482 = vsel %vm2086, %v2285, 0.0
  %v2483 = vsel %vm2087, %v2285, 0.0
  %v2484 = vsel %vm2088, %v2292, 0.0
  %v2485 = vsel %vm2089, %v2292, 0.0
  %v2486 = vsel %vm2090, %v2296, 0.0
  %v2487 = vsel %vm2091, %v2296, 0.0
  %v2488 = vsel %vm2092, %v2300, 0.0
  %v2489 = vsel %vm2093, %v2300, 0.0
  %v2490 = vsel %vm2094, %v2304, 0.0
  %v2491 = vsel %vm2095, %v2304, 0.0
  %v2492 = vsel %vm2096, %v2308, 0.0
  %v2493 = vsel %vm2097, %v2308, 0.0
  %v2494 = vsel %vm2098, %v2312, 0.0
  %v2495 = vsel %vm2099, %v2312, 0.0
  %v2496 = vsel %vm2100, %v2316, 0.0
  %v2497 = vsel %vm2101, %v2316, 0.0
  %v2498 = vsel %vm2102, %v2320, 0.0
  %v2499 = vsel %vm2103, %v2320, 0.0
  %v2500 = vsel %vm2104, %v2324, 0.0
  %v2501 = vsel %vm2105, %v2324, 0.0
  %v2502 = vsel %vm2106, %v2328, 0.0
  %v2503 = vsel %vm2107, %v2328, 0.0
  %v2504 = vsel %vm2108, %v2332, 0.0
  %v2505 = vsel %vm2109, %v2332, 0.0
  %v2506 = vsel %vm2110, %v2336, 0.0
  %v2507 = vsel %vm2111, %v2336, 0.0
  %v2508 = vsel %vm2112, %v2340, 0.0
  %v2509 = vsel %vm2113, %v2340, 0.0
  %v2510 = vsel %vm2114, %v2344, 0.0
  %v2511 = vsel %vm2115, %v2344, 0.0
  %v2512 = vsel %vm2116, %v2348, 0.0
  %v2513 = vsel %vm2117, %v2348, 0.0
  %v2514 = vsel %vm2118, %v2352, 0.0
  %v2515 = vsel %vm2119, %v2352, 0.0
  %v2516 = vsel %vm2120, %v2359, 0.0
  %v2517 = vsel %vm2121, %v2359, 0.0
  %v2518 = vsel %vm2122, %v2363, 0.0
  %v2519 = vsel %vm2123, %v2363, 0.0
  %v2520 = vsel %vm2124, %v2367, 0.0
  %v2521 = vsel %vm2125, %v2367, 0.0
  %v2522 = vsel %vm2126, %v2371, 0.0
  %v2523 = vsel %vm2127, %v2371, 0.0
  %v2524 = vsel %vm2128, %v2375, 0.0
  %v2525 = vsel %vm2129, %v2375, 0.0
  %v2526 = vsel %vm2130, %v2379, 0.0
  %v2527 = vsel %vm2131, %v2379, 0.0
  %v2528 = vsel %vm2132, %v2383, 0.0
  %v2529 = vsel %vm2133, %v2383, 0.0
  %v2530 = vsel %vm2134, %v2387, 0.0
  %v2531 = vsel %vm2135, %v2387, 0.0
  %v2532 = vsel %vm2136, %v2391, 0.0
  %v2533 = vsel %vm2137, %v2391, 0.0
  %v2534 = vsel %vm2138, %v2395, 0.0
  %v2535 = vsel %vm2139, %v2395, 0.0
  %v2536 = vsel %vm2140, %v2399, 0.0
  %v2537 = vsel %vm2141, %v2399, 0.0
  %v2538 = vsel %vm2142, %v2403, 0.0
  %v2539 = vsel %vm2143, %v2403, 0.0
  %v2540 = vsel %vm2144, %v2407, 0.0
  %v2541 = vsel %vm2145, %v2407, 0.0
  %v2542 = vsel %vm2146, %v2411, 0.0
  %v2543 = vsel %vm2147, %v2411, 0.0
  %v2544 = vsel %vm2148, %v2415, 0.0
  %v2545 = vsel %vm2149, %v2415, 0.0
  %v2546 = vsel %vm2150, %v2419, 0.0
  %v2547 = vsel %vm2151, %v2419, 0.0
  %v2548 = vadd.f32 %v1628, %v2420
  %v2549 = vadd.f32 %v1629, %v2421
  %v2550 = vadd.f32 %v1630, %v2422
  %v2551 = vadd.f32 %v1631, %v2423
  %v2552 = vadd.f32 %v1632, %v2424
  %v2553 = vadd.f32 %v1633, %v2425
  %v2554 = vadd.f32 %v1634, %v2426
  %v2555 = vadd.f32 %v1635, %v2427
  %v2556 = vadd.f32 %v1636, %v2428
  %v2557 = vadd.f32 %v1637, %v2429
  %v2558 = vadd.f32 %v1638, %v2430
  %v2559 = vadd.f32 %v1639, %v2431
  %v2560 = vadd.f32 %v1640, %v2432
  %v2561 = vadd.f32 %v1641, %v2433
  %v2562 = vadd.f32 %v1642, %v2434
  %v2563 = vadd.f32 %v1643, %v2435
  %v2564 = vadd.f32 %v1644, %v2436
  %v2565 = vadd.f32 %v1645, %v2437
  %v2566 = vadd.f32 %v1646, %v2438
  %v2567 = vadd.f32 %v1647, %v2439
  %v2568 = vadd.f32 %v1648, %v2440
  %v2569 = vadd.f32 %v1649, %v2441
  %v2570 = vadd.f32 %v1650, %v2442
  %v2571 = vadd.f32 %v1651, %v2443
  %v2572 = vadd.f32 %v1652, %v2444
  %v2573 = vadd.f32 %v1653, %v2445
  %v2574 = vadd.f32 %v1654, %v2446
  %v2575 = vadd.f32 %v1655, %v2447
  %v2576 = vadd.f32 %v1656, %v2448
  %v2577 = vadd.f32 %v1657, %v2449
  %v2578 = vadd.f32 %v1658, %v2450
  %v2579 = vadd.f32 %v1659, %v2451
  %v2580 = vadd.f32 %v1660, %v2452
  %v2581 = vadd.f32 %v1661, %v2453
  %v2582 = vadd.f32 %v1662, %v2454
  %v2583 = vadd.f32 %v1663, %v2455
  %v2584 = vadd.f32 %v1664, %v2456
  %v2585 = vadd.f32 %v1665, %v2457
  %v2586 = vadd.f32 %v1666, %v2458
  %v2587 = vadd.f32 %v1667, %v2459
  %v2588 = vadd.f32 %v1668, %v2460
  %v2589 = vadd.f32 %v1669, %v2461
  %v2590 = vadd.f32 %v1670, %v2462
  %v2591 = vadd.f32 %v1671, %v2463
  %v2592 = vadd.f32 %v1672, %v2464
  %v2593 = vadd.f32 %v1673, %v2465
  %v2594 = vadd.f32 %v1674, %v2466
  %v2595 = vadd.f32 %v1675, %v2467
  %v2596 = vadd.f32 %v1676, %v2468
  %v2597 = vadd.f32 %v1677, %v2469
  %v2598 = vadd.f32 %v1678, %v2470
  %v2599 = vadd.f32 %v1679, %v2471
  %v2600 = vadd.f32 %v1680, %v2472
  %v2601 = vadd.f32 %v1681, %v2473
  %v2602 = vadd.f32 %v1682, %v2474
  %v2603 = vadd.f32 %v1683, %v2475
  %v2604 = vadd.f32 %v1684, %v2476
  %v2605 = vadd.f32 %v1685, %v2477
  %v2606 = vadd.f32 %v1686, %v2478
  %v2607 = vadd.f32 %v1687, %v2479
  %v2608 = vadd.f32 %v1688, %v2480
  %v2609 = vadd.f32 %v1689, %v2481
  %v2610 = vadd.f32 %v1690, %v2482
  %v2611 = vadd.f32 %v1691, %v2483
  %v2612 = vadd.f32 %v1692, %v2484
  %v2613 = vadd.f32 %v1693, %v2485
  %v2614 = vadd.f32 %v1694, %v2486
  %v2615 = vadd.f32 %v1695, %v2487
  %v2616 = vadd.f32 %v1696, %v2488
  %v2617 = vadd.f32 %v1697, %v2489
  %v2618 = vadd.f32 %v1698, %v2490
  %v2619 = vadd.f32 %v1699, %v2491
  %v2620 = vadd.f32 %v1700, %v2492
  %v2621 = vadd.f32 %v1701, %v2493
  %v2622 = vadd.f32 %v1702, %v2494
  %v2623 = vadd.f32 %v1703, %v2495
  %v2624 = vadd.f32 %v1704, %v2496
  %v2625 = vadd.f32 %v1705, %v2497
  %v2626 = vadd.f32 %v1706, %v2498
  %v2627 = vadd.f32 %v1707, %v2499
  %v2628 = vadd.f32 %v1708, %v2500
  %v2629 = vadd.f32 %v1709, %v2501
  %v2630 = vadd.f32 %v1710, %v2502
  %v2631 = vadd.f32 %v1711, %v2503
  %v2632 = vadd.f32 %v1712, %v2504
  %v2633 = vadd.f32 %v1713, %v2505
  %v2634 = vadd.f32 %v1714, %v2506
  %v2635 = vadd.f32 %v1715, %v2507
  %v2636 = vadd.f32 %v1716, %v2508
  %v2637 = vadd.f32 %v1717, %v2509
  %v2638 = vadd.f32 %v1718, %v2510
  %v2639 = vadd.f32 %v1719, %v2511
  %v2640 = vadd.f32 %v1720, %v2512
  %v2641 = vadd.f32 %v1721, %v2513
  %v2642 = vadd.f32 %v1722, %v2514
  %v2643 = vadd.f32 %v1723, %v2515
  %v2644 = vadd.f32 %v1724, %v2516
  %v2645 = vadd.f32 %v1725, %v2517
  %v2646 = vadd.f32 %v1726, %v2518
  %v2647 = vadd.f32 %v1727, %v2519
  %v2648 = vadd.f32 %v1728, %v2520
  %v2649 = vadd.f32 %v1729, %v2521
  %v2650 = vadd.f32 %v1730, %v2522
  %v2651 = vadd.f32 %v1731, %v2523
  %v2652 = vadd.f32 %v1732, %v2524
  %v2653 = vadd.f32 %v1733, %v2525
  %v2654 = vadd.f32 %v1734, %v2526
  %v2655 = vadd.f32 %v1735, %v2527
  %v2656 = vadd.f32 %v1736, %v2528
  %v2657 = vadd.f32 %v1737, %v2529
  %v2658 = vadd.f32 %v1738, %v2530
  %v2659 = vadd.f32 %v1739, %v2531
  %v2660 = vadd.f32 %v1740, %v2532
  %v2661 = vadd.f32 %v1741, %v2533
  %v2662 = vadd.f32 %v1742, %v2534
  %v2663 = vadd.f32 %v1743, %v2535
  %v2664 = vadd.f32 %v1744, %v2536
  %v2665 = vadd.f32 %v1745, %v2537
  %v2666 = vadd.f32 %v1746, %v2538
  %v2667 = vadd.f32 %v1747, %v2539
  %v2668 = vadd.f32 %v1748, %v2540
  %v2669 = vadd.f32 %v1749, %v2541
  %v2670 = vadd.f32 %v1750, %v2542
  %v2671 = vadd.f32 %v1751, %v2543
  %v2672 = vadd.f32 %v1752, %v2544
  %v2673 = vadd.f32 %v1753, %v2545
  %v2674 = vadd.f32 %v1754, %v2546
  %v2675 = vadd.f32 %v1755, %v2547
  %v2676 = vlaneseq
  %v2677 = vshrl.u32 %v2676, 7
  %v2678 = vsub.s32 0, %v2677
  %v2679 = vrot.slane %v34, %v2678
  %2681 = vbcast.lane.b32.xlu0 %v2679, 256
  %v2682 = vpop.permute.xlu0 %2681
  %s2684 = sor.u32 256, 8
  %2685 = vbcast.lane.b32.xlu0 %v2679, %s2684
  %v2686 = vpop.permute.xlu0 %2685
  %s2688 = sor.u32 256, 16
  %2689 = vbcast.lane.b32.xlu0 %v2679, %s2688
  %v2690 = vpop.permute.xlu0 %2689
  %s2692 = sor.u32 256, 24
  %2693 = vbcast.lane.b32.xlu0 %v2679, %s2692
  %v2694 = vpop.permute.xlu0 %2693
  %s2696 = sor.u32 256, 32
  %2697 = vbcast.lane.b32.xlu0 %v2679, %s2696
  %v2698 = vpop.permute.xlu0 %2697
  %s2700 = sor.u32 256, 40
  %2701 = vbcast.lane.b32.xlu0 %v2679, %s2700
  %v2702 = vpop.permute.xlu0 %2701
  %s2704 = sor.u32 256, 48
  %2705 = vbcast.lane.b32.xlu0 %v2679, %s2704
  %v2706 = vpop.permute.xlu0 %2705
  %s2708 = sor.u32 256, 56
  %2709 = vbcast.lane.b32.xlu0 %v2679, %s2708
  %v2710 = vpop.permute.xlu0 %2709
  %s2712 = sor.u32 256, 64
  %2713 = vbcast.lane.b32.xlu0 %v2679, %s2712
  %v2714 = vpop.permute.xlu0 %2713
  %s2716 = sor.u32 256, 72
  %2717 = vbcast.lane.b32.xlu0 %v2679, %s2716
  %v2718 = vpop.permute.xlu0 %2717
  %s2720 = sor.u32 256, 80
  %2721 = vbcast.lane.b32.xlu0 %v2679, %s2720
  %v2722 = vpop.permute.xlu0 %2721
  %s2724 = sor.u32 256, 88
  %2725 = vbcast.lane.b32.xlu0 %v2679, %s2724
  %v2726 = vpop.permute.xlu0 %2725
  %s2728 = sor.u32 256, 96
  %2729 = vbcast.lane.b32.xlu0 %v2679, %s2728
  %v2730 = vpop.permute.xlu0 %2729
  %s2732 = sor.u32 256, 104
  %2733 = vbcast.lane.b32.xlu0 %v2679, %s2732
  %v2734 = vpop.permute.xlu0 %2733
  %s2736 = sor.u32 256, 112
  %2737 = vbcast.lane.b32.xlu0 %v2679, %s2736
  %v2738 = vpop.permute.xlu0 %2737
  %s2740 = sor.u32 256, 120
  %2741 = vbcast.lane.b32.xlu0 %v2679, %s2740
  %v2742 = vpop.permute.xlu0 %2741
  %v2743 = vlaneseq
  %v2744 = vshrl.u32 %v2743, 7
  %v2745 = vsub.s32 1, %v2744
  %v2746 = vrot.slane %v34, %v2745
  %2748 = vbcast.lane.b32.xlu0 %v2746, 256
  %v2749 = vpop.permute.xlu0 %2748
  %s2751 = sor.u32 256, 8
  %2752 = vbcast.lane.b32.xlu0 %v2746, %s2751
  %v2753 = vpop.permute.xlu0 %2752
  %s2755 = sor.u32 256, 16
  %2756 = vbcast.lane.b32.xlu0 %v2746, %s2755
  %v2757 = vpop.permute.xlu0 %2756
  %s2759 = sor.u32 256, 24
  %2760 = vbcast.lane.b32.xlu0 %v2746, %s2759
  %v2761 = vpop.permute.xlu0 %2760
  %s2763 = sor.u32 256, 32
  %2764 = vbcast.lane.b32.xlu0 %v2746, %s2763
  %v2765 = vpop.permute.xlu0 %2764
  %s2767 = sor.u32 256, 40
  %2768 = vbcast.lane.b32.xlu0 %v2746, %s2767
  %v2769 = vpop.permute.xlu0 %2768
  %s2771 = sor.u32 256, 48
  %2772 = vbcast.lane.b32.xlu0 %v2746, %s2771
  %v2773 = vpop.permute.xlu0 %2772
  %s2775 = sor.u32 256, 56
  %2776 = vbcast.lane.b32.xlu0 %v2746, %s2775
  %v2777 = vpop.permute.xlu0 %2776
  %s2779 = sor.u32 256, 64
  %2780 = vbcast.lane.b32.xlu0 %v2746, %s2779
  %v2781 = vpop.permute.xlu0 %2780
  %s2783 = sor.u32 256, 72
  %2784 = vbcast.lane.b32.xlu0 %v2746, %s2783
  %v2785 = vpop.permute.xlu0 %2784
  %s2787 = sor.u32 256, 80
  %2788 = vbcast.lane.b32.xlu0 %v2746, %s2787
  %v2789 = vpop.permute.xlu0 %2788
  %s2791 = sor.u32 256, 88
  %2792 = vbcast.lane.b32.xlu0 %v2746, %s2791
  %v2793 = vpop.permute.xlu0 %2792
  %s2795 = sor.u32 256, 96
  %2796 = vbcast.lane.b32.xlu0 %v2746, %s2795
  %v2797 = vpop.permute.xlu0 %2796
  %s2799 = sor.u32 256, 104
  %2800 = vbcast.lane.b32.xlu0 %v2746, %s2799
  %v2801 = vpop.permute.xlu0 %2800
  %s2803 = sor.u32 256, 112
  %2804 = vbcast.lane.b32.xlu0 %v2746, %s2803
  %v2805 = vpop.permute.xlu0 %2804
  %s2807 = sor.u32 256, 120
  %2808 = vbcast.lane.b32.xlu0 %v2746, %s2807
  %v2809 = vpop.permute.xlu0 %2808
  %v2810 = vlaneseq
  %v2811 = vshrl.u32 %v2810, 7
  %v2812 = vsub.s32 2, %v2811
  %v2813 = vrot.slane %v34, %v2812
  %2815 = vbcast.lane.b32.xlu0 %v2813, 256
  %v2816 = vpop.permute.xlu0 %2815
  %s2818 = sor.u32 256, 8
  %2819 = vbcast.lane.b32.xlu0 %v2813, %s2818
  %v2820 = vpop.permute.xlu0 %2819
  %s2822 = sor.u32 256, 16
  %2823 = vbcast.lane.b32.xlu0 %v2813, %s2822
  %v2824 = vpop.permute.xlu0 %2823
  %s2826 = sor.u32 256, 24
  %2827 = vbcast.lane.b32.xlu0 %v2813, %s2826
  %v2828 = vpop.permute.xlu0 %2827
  %s2830 = sor.u32 256, 32
  %2831 = vbcast.lane.b32.xlu0 %v2813, %s2830
  %v2832 = vpop.permute.xlu0 %2831
  %s2834 = sor.u32 256, 40
  %2835 = vbcast.lane.b32.xlu0 %v2813, %s2834
  %v2836 = vpop.permute.xlu0 %2835
  %s2838 = sor.u32 256, 48
  %2839 = vbcast.lane.b32.xlu0 %v2813, %s2838
  %v2840 = vpop.permute.xlu0 %2839
  %s2842 = sor.u32 256, 56
  %2843 = vbcast.lane.b32.xlu0 %v2813, %s2842
  %v2844 = vpop.permute.xlu0 %2843
  %s2846 = sor.u32 256, 64
  %2847 = vbcast.lane.b32.xlu0 %v2813, %s2846
  %v2848 = vpop.permute.xlu0 %2847
  %s2850 = sor.u32 256, 72
  %2851 = vbcast.lane.b32.xlu0 %v2813, %s2850
  %v2852 = vpop.permute.xlu0 %2851
  %s2854 = sor.u32 256, 80
  %2855 = vbcast.lane.b32.xlu0 %v2813, %s2854
  %v2856 = vpop.permute.xlu0 %2855
  %s2858 = sor.u32 256, 88
  %2859 = vbcast.lane.b32.xlu0 %v2813, %s2858
  %v2860 = vpop.permute.xlu0 %2859
  %s2862 = sor.u32 256, 96
  %2863 = vbcast.lane.b32.xlu0 %v2813, %s2862
  %v2864 = vpop.permute.xlu0 %2863
  %s2866 = sor.u32 256, 104
  %2867 = vbcast.lane.b32.xlu0 %v2813, %s2866
  %v2868 = vpop.permute.xlu0 %2867
  %s2870 = sor.u32 256, 112
  %2871 = vbcast.lane.b32.xlu0 %v2813, %s2870
  %v2872 = vpop.permute.xlu0 %2871
  %s2874 = sor.u32 256, 120
  %2875 = vbcast.lane.b32.xlu0 %v2813, %s2874
  %v2876 = vpop.permute.xlu0 %2875
  %v2877 = vlaneseq
  %v2878 = vshrl.u32 %v2877, 7
  %v2879 = vsub.s32 3, %v2878
  %v2880 = vrot.slane %v34, %v2879
  %2882 = vbcast.lane.b32.xlu0 %v2880, 256
  %v2883 = vpop.permute.xlu0 %2882
  %s2885 = sor.u32 256, 8
  %2886 = vbcast.lane.b32.xlu0 %v2880, %s2885
  %v2887 = vpop.permute.xlu0 %2886
  %s2889 = sor.u32 256, 16
  %2890 = vbcast.lane.b32.xlu0 %v2880, %s2889
  %v2891 = vpop.permute.xlu0 %2890
  %s2893 = sor.u32 256, 24
  %2894 = vbcast.lane.b32.xlu0 %v2880, %s2893
  %v2895 = vpop.permute.xlu0 %2894
  %s2897 = sor.u32 256, 32
  %2898 = vbcast.lane.b32.xlu0 %v2880, %s2897
  %v2899 = vpop.permute.xlu0 %2898
  %s2901 = sor.u32 256, 40
  %2902 = vbcast.lane.b32.xlu0 %v2880, %s2901
  %v2903 = vpop.permute.xlu0 %2902
  %s2905 = sor.u32 256, 48
  %2906 = vbcast.lane.b32.xlu0 %v2880, %s2905
  %v2907 = vpop.permute.xlu0 %2906
  %s2909 = sor.u32 256, 56
  %2910 = vbcast.lane.b32.xlu0 %v2880, %s2909
  %v2911 = vpop.permute.xlu0 %2910
  %s2913 = sor.u32 256, 64
  %2914 = vbcast.lane.b32.xlu0 %v2880, %s2913
  %v2915 = vpop.permute.xlu0 %2914
  %s2917 = sor.u32 256, 72
  %2918 = vbcast.lane.b32.xlu0 %v2880, %s2917
  %v2919 = vpop.permute.xlu0 %2918
  %s2921 = sor.u32 256, 80
  %2922 = vbcast.lane.b32.xlu0 %v2880, %s2921
  %v2923 = vpop.permute.xlu0 %2922
  %s2925 = sor.u32 256, 88
  %2926 = vbcast.lane.b32.xlu0 %v2880, %s2925
  %v2927 = vpop.permute.xlu0 %2926
  %s2929 = sor.u32 256, 96
  %2930 = vbcast.lane.b32.xlu0 %v2880, %s2929
  %v2931 = vpop.permute.xlu0 %2930
  %s2933 = sor.u32 256, 104
  %2934 = vbcast.lane.b32.xlu0 %v2880, %s2933
  %v2935 = vpop.permute.xlu0 %2934
  %s2937 = sor.u32 256, 112
  %2938 = vbcast.lane.b32.xlu0 %v2880, %s2937
  %v2939 = vpop.permute.xlu0 %2938
  %s2941 = sor.u32 256, 120
  %2942 = vbcast.lane.b32.xlu0 %v2880, %s2941
  %v2943 = vpop.permute.xlu0 %2942
  %vm2944 = vcmp.eq.s32.totalorder %v2682, %v42
  %vm2945 = vcmp.eq.s32.totalorder %v2682, %v43
  %vm2946 = vcmp.eq.s32.totalorder %v2686, %v42
  %vm2947 = vcmp.eq.s32.totalorder %v2686, %v43
  %vm2948 = vcmp.eq.s32.totalorder %v2690, %v42
  %vm2949 = vcmp.eq.s32.totalorder %v2690, %v43
  %vm2950 = vcmp.eq.s32.totalorder %v2694, %v42
  %vm2951 = vcmp.eq.s32.totalorder %v2694, %v43
  %vm2952 = vcmp.eq.s32.totalorder %v2698, %v42
  %vm2953 = vcmp.eq.s32.totalorder %v2698, %v43
  %vm2954 = vcmp.eq.s32.totalorder %v2702, %v42
  %vm2955 = vcmp.eq.s32.totalorder %v2702, %v43
  %vm2956 = vcmp.eq.s32.totalorder %v2706, %v42
  %vm2957 = vcmp.eq.s32.totalorder %v2706, %v43
  %vm2958 = vcmp.eq.s32.totalorder %v2710, %v42
  %vm2959 = vcmp.eq.s32.totalorder %v2710, %v43
  %vm2960 = vcmp.eq.s32.totalorder %v2714, %v42
  %vm2961 = vcmp.eq.s32.totalorder %v2714, %v43
  %vm2962 = vcmp.eq.s32.totalorder %v2718, %v42
  %vm2963 = vcmp.eq.s32.totalorder %v2718, %v43
  %vm2964 = vcmp.eq.s32.totalorder %v2722, %v42
  %vm2965 = vcmp.eq.s32.totalorder %v2722, %v43
  %vm2966 = vcmp.eq.s32.totalorder %v2726, %v42
  %vm2967 = vcmp.eq.s32.totalorder %v2726, %v43
  %vm2968 = vcmp.eq.s32.totalorder %v2730, %v42
  %vm2969 = vcmp.eq.s32.totalorder %v2730, %v43
  %vm2970 = vcmp.eq.s32.totalorder %v2734, %v42
  %vm2971 = vcmp.eq.s32.totalorder %v2734, %v43
  %vm2972 = vcmp.eq.s32.totalorder %v2738, %v42
  %vm2973 = vcmp.eq.s32.totalorder %v2738, %v43
  %vm2974 = vcmp.eq.s32.totalorder %v2742, %v42
  %vm2975 = vcmp.eq.s32.totalorder %v2742, %v43
  %vm2976 = vcmp.eq.s32.totalorder %v2749, %v42
  %vm2977 = vcmp.eq.s32.totalorder %v2749, %v43
  %vm2978 = vcmp.eq.s32.totalorder %v2753, %v42
  %vm2979 = vcmp.eq.s32.totalorder %v2753, %v43
  %vm2980 = vcmp.eq.s32.totalorder %v2757, %v42
  %vm2981 = vcmp.eq.s32.totalorder %v2757, %v43
  %vm2982 = vcmp.eq.s32.totalorder %v2761, %v42
  %vm2983 = vcmp.eq.s32.totalorder %v2761, %v43
  %vm2984 = vcmp.eq.s32.totalorder %v2765, %v42
  %vm2985 = vcmp.eq.s32.totalorder %v2765, %v43
  %vm2986 = vcmp.eq.s32.totalorder %v2769, %v42
  %vm2987 = vcmp.eq.s32.totalorder %v2769, %v43
  %vm2988 = vcmp.eq.s32.totalorder %v2773, %v42
  %vm2989 = vcmp.eq.s32.totalorder %v2773, %v43
  %vm2990 = vcmp.eq.s32.totalorder %v2777, %v42
  %vm2991 = vcmp.eq.s32.totalorder %v2777, %v43
  %vm2992 = vcmp.eq.s32.totalorder %v2781, %v42
  %vm2993 = vcmp.eq.s32.totalorder %v2781, %v43
  %vm2994 = vcmp.eq.s32.totalorder %v2785, %v42
  %vm2995 = vcmp.eq.s32.totalorder %v2785, %v43
  %vm2996 = vcmp.eq.s32.totalorder %v2789, %v42
  %vm2997 = vcmp.eq.s32.totalorder %v2789, %v43
  %vm2998 = vcmp.eq.s32.totalorder %v2793, %v42
  %vm2999 = vcmp.eq.s32.totalorder %v2793, %v43
  %vm3000 = vcmp.eq.s32.totalorder %v2797, %v42
  %vm3001 = vcmp.eq.s32.totalorder %v2797, %v43
  %vm3002 = vcmp.eq.s32.totalorder %v2801, %v42
  %vm3003 = vcmp.eq.s32.totalorder %v2801, %v43
  %vm3004 = vcmp.eq.s32.totalorder %v2805, %v42
  %vm3005 = vcmp.eq.s32.totalorder %v2805, %v43
  %vm3006 = vcmp.eq.s32.totalorder %v2809, %v42
  %vm3007 = vcmp.eq.s32.totalorder %v2809, %v43
  %vm3008 = vcmp.eq.s32.totalorder %v2816, %v42
  %vm3009 = vcmp.eq.s32.totalorder %v2816, %v43
  %vm3010 = vcmp.eq.s32.totalorder %v2820, %v42
  %vm3011 = vcmp.eq.s32.totalorder %v2820, %v43
  %vm3012 = vcmp.eq.s32.totalorder %v2824, %v42
  %vm3013 = vcmp.eq.s32.totalorder %v2824, %v43
  %vm3014 = vcmp.eq.s32.totalorder %v2828, %v42
  %vm3015 = vcmp.eq.s32.totalorder %v2828, %v43
  %vm3016 = vcmp.eq.s32.totalorder %v2832, %v42
  %vm3017 = vcmp.eq.s32.totalorder %v2832, %v43
  %vm3018 = vcmp.eq.s32.totalorder %v2836, %v42
  %vm3019 = vcmp.eq.s32.totalorder %v2836, %v43
  %vm3020 = vcmp.eq.s32.totalorder %v2840, %v42
  %vm3021 = vcmp.eq.s32.totalorder %v2840, %v43
  %vm3022 = vcmp.eq.s32.totalorder %v2844, %v42
  %vm3023 = vcmp.eq.s32.totalorder %v2844, %v43
  %vm3024 = vcmp.eq.s32.totalorder %v2848, %v42
  %vm3025 = vcmp.eq.s32.totalorder %v2848, %v43
  %vm3026 = vcmp.eq.s32.totalorder %v2852, %v42
  %vm3027 = vcmp.eq.s32.totalorder %v2852, %v43
  %vm3028 = vcmp.eq.s32.totalorder %v2856, %v42
  %vm3029 = vcmp.eq.s32.totalorder %v2856, %v43
  %vm3030 = vcmp.eq.s32.totalorder %v2860, %v42
  %vm3031 = vcmp.eq.s32.totalorder %v2860, %v43
  %vm3032 = vcmp.eq.s32.totalorder %v2864, %v42
  %vm3033 = vcmp.eq.s32.totalorder %v2864, %v43
  %vm3034 = vcmp.eq.s32.totalorder %v2868, %v42
  %vm3035 = vcmp.eq.s32.totalorder %v2868, %v43
  %vm3036 = vcmp.eq.s32.totalorder %v2872, %v42
  %vm3037 = vcmp.eq.s32.totalorder %v2872, %v43
  %vm3038 = vcmp.eq.s32.totalorder %v2876, %v42
  %vm3039 = vcmp.eq.s32.totalorder %v2876, %v43
  %vm3040 = vcmp.eq.s32.totalorder %v2883, %v42
  %vm3041 = vcmp.eq.s32.totalorder %v2883, %v43
  %vm3042 = vcmp.eq.s32.totalorder %v2887, %v42
  %vm3043 = vcmp.eq.s32.totalorder %v2887, %v43
  %vm3044 = vcmp.eq.s32.totalorder %v2891, %v42
  %vm3045 = vcmp.eq.s32.totalorder %v2891, %v43
  %vm3046 = vcmp.eq.s32.totalorder %v2895, %v42
  %vm3047 = vcmp.eq.s32.totalorder %v2895, %v43
  %vm3048 = vcmp.eq.s32.totalorder %v2899, %v42
  %vm3049 = vcmp.eq.s32.totalorder %v2899, %v43
  %vm3050 = vcmp.eq.s32.totalorder %v2903, %v42
  %vm3051 = vcmp.eq.s32.totalorder %v2903, %v43
  %vm3052 = vcmp.eq.s32.totalorder %v2907, %v42
  %vm3053 = vcmp.eq.s32.totalorder %v2907, %v43
  %vm3054 = vcmp.eq.s32.totalorder %v2911, %v42
  %vm3055 = vcmp.eq.s32.totalorder %v2911, %v43
  %vm3056 = vcmp.eq.s32.totalorder %v2915, %v42
  %vm3057 = vcmp.eq.s32.totalorder %v2915, %v43
  %vm3058 = vcmp.eq.s32.totalorder %v2919, %v42
  %vm3059 = vcmp.eq.s32.totalorder %v2919, %v43
  %vm3060 = vcmp.eq.s32.totalorder %v2923, %v42
  %vm3061 = vcmp.eq.s32.totalorder %v2923, %v43
  %vm3062 = vcmp.eq.s32.totalorder %v2927, %v42
  %vm3063 = vcmp.eq.s32.totalorder %v2927, %v43
  %vm3064 = vcmp.eq.s32.totalorder %v2931, %v42
  %vm3065 = vcmp.eq.s32.totalorder %v2931, %v43
  %vm3066 = vcmp.eq.s32.totalorder %v2935, %v42
  %vm3067 = vcmp.eq.s32.totalorder %v2935, %v43
  %vm3068 = vcmp.eq.s32.totalorder %v2939, %v42
  %vm3069 = vcmp.eq.s32.totalorder %v2939, %v43
  %vm3070 = vcmp.eq.s32.totalorder %v2943, %v42
  %vm3071 = vcmp.eq.s32.totalorder %v2943, %v43
  %v3072 = vlaneseq
  %v3073 = vshrl.u32 %v3072, 7
  %v3074 = vsub.s32 0, %v3073
  %v3075 = vrot.slane %v40, %v3074
  %3077 = vbcast.lane.b32.xlu0 %v3075, 256
  %v3078 = vpop.permute.xlu0 %3077
  %s3080 = sor.u32 256, 8
  %3081 = vbcast.lane.b32.xlu0 %v3075, %s3080
  %v3082 = vpop.permute.xlu0 %3081
  %s3084 = sor.u32 256, 16
  %3085 = vbcast.lane.b32.xlu0 %v3075, %s3084
  %v3086 = vpop.permute.xlu0 %3085
  %s3088 = sor.u32 256, 24
  %3089 = vbcast.lane.b32.xlu0 %v3075, %s3088
  %v3090 = vpop.permute.xlu0 %3089
  %s3092 = sor.u32 256, 32
  %3093 = vbcast.lane.b32.xlu0 %v3075, %s3092
  %v3094 = vpop.permute.xlu0 %3093
  %s3096 = sor.u32 256, 40
  %3097 = vbcast.lane.b32.xlu0 %v3075, %s3096
  %v3098 = vpop.permute.xlu0 %3097
  %s3100 = sor.u32 256, 48
  %3101 = vbcast.lane.b32.xlu0 %v3075, %s3100
  %v3102 = vpop.permute.xlu0 %3101
  %s3104 = sor.u32 256, 56
  %3105 = vbcast.lane.b32.xlu0 %v3075, %s3104
  %v3106 = vpop.permute.xlu0 %3105
  %s3108 = sor.u32 256, 64
  %3109 = vbcast.lane.b32.xlu0 %v3075, %s3108
  %v3110 = vpop.permute.xlu0 %3109
  %s3112 = sor.u32 256, 72
  %3113 = vbcast.lane.b32.xlu0 %v3075, %s3112
  %v3114 = vpop.permute.xlu0 %3113
  %s3116 = sor.u32 256, 80
  %3117 = vbcast.lane.b32.xlu0 %v3075, %s3116
  %v3118 = vpop.permute.xlu0 %3117
  %s3120 = sor.u32 256, 88
  %3121 = vbcast.lane.b32.xlu0 %v3075, %s3120
  %v3122 = vpop.permute.xlu0 %3121
  %s3124 = sor.u32 256, 96
  %3125 = vbcast.lane.b32.xlu0 %v3075, %s3124
  %v3126 = vpop.permute.xlu0 %3125
  %s3128 = sor.u32 256, 104
  %3129 = vbcast.lane.b32.xlu0 %v3075, %s3128
  %v3130 = vpop.permute.xlu0 %3129
  %s3132 = sor.u32 256, 112
  %3133 = vbcast.lane.b32.xlu0 %v3075, %s3132
  %v3134 = vpop.permute.xlu0 %3133
  %s3136 = sor.u32 256, 120
  %3137 = vbcast.lane.b32.xlu0 %v3075, %s3136
  %v3138 = vpop.permute.xlu0 %3137
  %v3139 = vlaneseq
  %v3140 = vshrl.u32 %v3139, 7
  %v3141 = vsub.s32 1, %v3140
  %v3142 = vrot.slane %v40, %v3141
  %3144 = vbcast.lane.b32.xlu0 %v3142, 256
  %v3145 = vpop.permute.xlu0 %3144
  %s3147 = sor.u32 256, 8
  %3148 = vbcast.lane.b32.xlu0 %v3142, %s3147
  %v3149 = vpop.permute.xlu0 %3148
  %s3151 = sor.u32 256, 16
  %3152 = vbcast.lane.b32.xlu0 %v3142, %s3151
  %v3153 = vpop.permute.xlu0 %3152
  %s3155 = sor.u32 256, 24
  %3156 = vbcast.lane.b32.xlu0 %v3142, %s3155
  %v3157 = vpop.permute.xlu0 %3156
  %s3159 = sor.u32 256, 32
  %3160 = vbcast.lane.b32.xlu0 %v3142, %s3159
  %v3161 = vpop.permute.xlu0 %3160
  %s3163 = sor.u32 256, 40
  %3164 = vbcast.lane.b32.xlu0 %v3142, %s3163
  %v3165 = vpop.permute.xlu0 %3164
  %s3167 = sor.u32 256, 48
  %3168 = vbcast.lane.b32.xlu0 %v3142, %s3167
  %v3169 = vpop.permute.xlu0 %3168
  %s3171 = sor.u32 256, 56
  %3172 = vbcast.lane.b32.xlu0 %v3142, %s3171
  %v3173 = vpop.permute.xlu0 %3172
  %s3175 = sor.u32 256, 64
  %3176 = vbcast.lane.b32.xlu0 %v3142, %s3175
  %v3177 = vpop.permute.xlu0 %3176
  %s3179 = sor.u32 256, 72
  %3180 = vbcast.lane.b32.xlu0 %v3142, %s3179
  %v3181 = vpop.permute.xlu0 %3180
  %s3183 = sor.u32 256, 80
  %3184 = vbcast.lane.b32.xlu0 %v3142, %s3183
  %v3185 = vpop.permute.xlu0 %3184
  %s3187 = sor.u32 256, 88
  %3188 = vbcast.lane.b32.xlu0 %v3142, %s3187
  %v3189 = vpop.permute.xlu0 %3188
  %s3191 = sor.u32 256, 96
  %3192 = vbcast.lane.b32.xlu0 %v3142, %s3191
  %v3193 = vpop.permute.xlu0 %3192
  %s3195 = sor.u32 256, 104
  %3196 = vbcast.lane.b32.xlu0 %v3142, %s3195
  %v3197 = vpop.permute.xlu0 %3196
  %s3199 = sor.u32 256, 112
  %3200 = vbcast.lane.b32.xlu0 %v3142, %s3199
  %v3201 = vpop.permute.xlu0 %3200
  %s3203 = sor.u32 256, 120
  %3204 = vbcast.lane.b32.xlu0 %v3142, %s3203
  %v3205 = vpop.permute.xlu0 %3204
  %v3206 = vlaneseq
  %v3207 = vshrl.u32 %v3206, 7
  %v3208 = vsub.s32 2, %v3207
  %v3209 = vrot.slane %v40, %v3208
  %3211 = vbcast.lane.b32.xlu0 %v3209, 256
  %v3212 = vpop.permute.xlu0 %3211
  %s3214 = sor.u32 256, 8
  %3215 = vbcast.lane.b32.xlu0 %v3209, %s3214
  %v3216 = vpop.permute.xlu0 %3215
  %s3218 = sor.u32 256, 16
  %3219 = vbcast.lane.b32.xlu0 %v3209, %s3218
  %v3220 = vpop.permute.xlu0 %3219
  %s3222 = sor.u32 256, 24
  %3223 = vbcast.lane.b32.xlu0 %v3209, %s3222
  %v3224 = vpop.permute.xlu0 %3223
  %s3226 = sor.u32 256, 32
  %3227 = vbcast.lane.b32.xlu0 %v3209, %s3226
  %v3228 = vpop.permute.xlu0 %3227
  %s3230 = sor.u32 256, 40
  %3231 = vbcast.lane.b32.xlu0 %v3209, %s3230
  %v3232 = vpop.permute.xlu0 %3231
  %s3234 = sor.u32 256, 48
  %3235 = vbcast.lane.b32.xlu0 %v3209, %s3234
  %v3236 = vpop.permute.xlu0 %3235
  %s3238 = sor.u32 256, 56
  %3239 = vbcast.lane.b32.xlu0 %v3209, %s3238
  %v3240 = vpop.permute.xlu0 %3239
  %s3242 = sor.u32 256, 64
  %3243 = vbcast.lane.b32.xlu0 %v3209, %s3242
  %v3244 = vpop.permute.xlu0 %3243
  %s3246 = sor.u32 256, 72
  %3247 = vbcast.lane.b32.xlu0 %v3209, %s3246
  %v3248 = vpop.permute.xlu0 %3247
  %s3250 = sor.u32 256, 80
  %3251 = vbcast.lane.b32.xlu0 %v3209, %s3250
  %v3252 = vpop.permute.xlu0 %3251
  %s3254 = sor.u32 256, 88
  %3255 = vbcast.lane.b32.xlu0 %v3209, %s3254
  %v3256 = vpop.permute.xlu0 %3255
  %s3258 = sor.u32 256, 96
  %3259 = vbcast.lane.b32.xlu0 %v3209, %s3258
  %v3260 = vpop.permute.xlu0 %3259
  %s3262 = sor.u32 256, 104
  %3263 = vbcast.lane.b32.xlu0 %v3209, %s3262
  %v3264 = vpop.permute.xlu0 %3263
  %s3266 = sor.u32 256, 112
  %3267 = vbcast.lane.b32.xlu0 %v3209, %s3266
  %v3268 = vpop.permute.xlu0 %3267
  %s3270 = sor.u32 256, 120
  %3271 = vbcast.lane.b32.xlu0 %v3209, %s3270
  %v3272 = vpop.permute.xlu0 %3271
  %v3273 = vlaneseq
  %v3274 = vshrl.u32 %v3273, 7
  %v3275 = vsub.s32 3, %v3274
  %v3276 = vrot.slane %v40, %v3275
  %3278 = vbcast.lane.b32.xlu0 %v3276, 256
  %v3279 = vpop.permute.xlu0 %3278
  %s3281 = sor.u32 256, 8
  %3282 = vbcast.lane.b32.xlu0 %v3276, %s3281
  %v3283 = vpop.permute.xlu0 %3282
  %s3285 = sor.u32 256, 16
  %3286 = vbcast.lane.b32.xlu0 %v3276, %s3285
  %v3287 = vpop.permute.xlu0 %3286
  %s3289 = sor.u32 256, 24
  %3290 = vbcast.lane.b32.xlu0 %v3276, %s3289
  %v3291 = vpop.permute.xlu0 %3290
  %s3293 = sor.u32 256, 32
  %3294 = vbcast.lane.b32.xlu0 %v3276, %s3293
  %v3295 = vpop.permute.xlu0 %3294
  %s3297 = sor.u32 256, 40
  %3298 = vbcast.lane.b32.xlu0 %v3276, %s3297
  %v3299 = vpop.permute.xlu0 %3298
  %s3301 = sor.u32 256, 48
  %3302 = vbcast.lane.b32.xlu0 %v3276, %s3301
  %v3303 = vpop.permute.xlu0 %3302
  %s3305 = sor.u32 256, 56
  %3306 = vbcast.lane.b32.xlu0 %v3276, %s3305
  %v3307 = vpop.permute.xlu0 %3306
  %s3309 = sor.u32 256, 64
  %3310 = vbcast.lane.b32.xlu0 %v3276, %s3309
  %v3311 = vpop.permute.xlu0 %3310
  %s3313 = sor.u32 256, 72
  %3314 = vbcast.lane.b32.xlu0 %v3276, %s3313
  %v3315 = vpop.permute.xlu0 %3314
  %s3317 = sor.u32 256, 80
  %3318 = vbcast.lane.b32.xlu0 %v3276, %s3317
  %v3319 = vpop.permute.xlu0 %3318
  %s3321 = sor.u32 256, 88
  %3322 = vbcast.lane.b32.xlu0 %v3276, %s3321
  %v3323 = vpop.permute.xlu0 %3322
  %s3325 = sor.u32 256, 96
  %3326 = vbcast.lane.b32.xlu0 %v3276, %s3325
  %v3327 = vpop.permute.xlu0 %3326
  %s3329 = sor.u32 256, 104
  %3330 = vbcast.lane.b32.xlu0 %v3276, %s3329
  %v3331 = vpop.permute.xlu0 %3330
  %s3333 = sor.u32 256, 112
  %3334 = vbcast.lane.b32.xlu0 %v3276, %s3333
  %v3335 = vpop.permute.xlu0 %3334
  %s3337 = sor.u32 256, 120
  %3338 = vbcast.lane.b32.xlu0 %v3276, %s3337
  %v3339 = vpop.permute.xlu0 %3338
  %v3340 = vsel %vm2944, %v3078, 0.0
  %v3341 = vsel %vm2945, %v3078, 0.0
  %v3342 = vsel %vm2946, %v3082, 0.0
  %v3343 = vsel %vm2947, %v3082, 0.0
  %v3344 = vsel %vm2948, %v3086, 0.0
  %v3345 = vsel %vm2949, %v3086, 0.0
  %v3346 = vsel %vm2950, %v3090, 0.0
  %v3347 = vsel %vm2951, %v3090, 0.0
  %v3348 = vsel %vm2952, %v3094, 0.0
  %v3349 = vsel %vm2953, %v3094, 0.0
  %v3350 = vsel %vm2954, %v3098, 0.0
  %v3351 = vsel %vm2955, %v3098, 0.0
  %v3352 = vsel %vm2956, %v3102, 0.0
  %v3353 = vsel %vm2957, %v3102, 0.0
  %v3354 = vsel %vm2958, %v3106, 0.0
  %v3355 = vsel %vm2959, %v3106, 0.0
  %v3356 = vsel %vm2960, %v3110, 0.0
  %v3357 = vsel %vm2961, %v3110, 0.0
  %v3358 = vsel %vm2962, %v3114, 0.0
  %v3359 = vsel %vm2963, %v3114, 0.0
  %v3360 = vsel %vm2964, %v3118, 0.0
  %v3361 = vsel %vm2965, %v3118, 0.0
  %v3362 = vsel %vm2966, %v3122, 0.0
  %v3363 = vsel %vm2967, %v3122, 0.0
  %v3364 = vsel %vm2968, %v3126, 0.0
  %v3365 = vsel %vm2969, %v3126, 0.0
  %v3366 = vsel %vm2970, %v3130, 0.0
  %v3367 = vsel %vm2971, %v3130, 0.0
  %v3368 = vsel %vm2972, %v3134, 0.0
  %v3369 = vsel %vm2973, %v3134, 0.0
  %v3370 = vsel %vm2974, %v3138, 0.0
  %v3371 = vsel %vm2975, %v3138, 0.0
  %v3372 = vsel %vm2976, %v3145, 0.0
  %v3373 = vsel %vm2977, %v3145, 0.0
  %v3374 = vsel %vm2978, %v3149, 0.0
  %v3375 = vsel %vm2979, %v3149, 0.0
  %v3376 = vsel %vm2980, %v3153, 0.0
  %v3377 = vsel %vm2981, %v3153, 0.0
  %v3378 = vsel %vm2982, %v3157, 0.0
  %v3379 = vsel %vm2983, %v3157, 0.0
  %v3380 = vsel %vm2984, %v3161, 0.0
  %v3381 = vsel %vm2985, %v3161, 0.0
  %v3382 = vsel %vm2986, %v3165, 0.0
  %v3383 = vsel %vm2987, %v3165, 0.0
  %v3384 = vsel %vm2988, %v3169, 0.0
  %v3385 = vsel %vm2989, %v3169, 0.0
  %v3386 = vsel %vm2990, %v3173, 0.0
  %v3387 = vsel %vm2991, %v3173, 0.0
  %v3388 = vsel %vm2992, %v3177, 0.0
  %v3389 = vsel %vm2993, %v3177, 0.0
  %v3390 = vsel %vm2994, %v3181, 0.0
  %v3391 = vsel %vm2995, %v3181, 0.0
  %v3392 = vsel %vm2996, %v3185, 0.0
  %v3393 = vsel %vm2997, %v3185, 0.0
  %v3394 = vsel %vm2998, %v3189, 0.0
  %v3395 = vsel %vm2999, %v3189, 0.0
  %v3396 = vsel %vm3000, %v3193, 0.0
  %v3397 = vsel %vm3001, %v3193, 0.0
  %v3398 = vsel %vm3002, %v3197, 0.0
  %v3399 = vsel %vm3003, %v3197, 0.0
  %v3400 = vsel %vm3004, %v3201, 0.0
  %v3401 = vsel %vm3005, %v3201, 0.0
  %v3402 = vsel %vm3006, %v3205, 0.0
  %v3403 = vsel %vm3007, %v3205, 0.0
  %v3404 = vsel %vm3008, %v3212, 0.0
  %v3405 = vsel %vm3009, %v3212, 0.0
  %v3406 = vsel %vm3010, %v3216, 0.0
  %v3407 = vsel %vm3011, %v3216, 0.0
  %v3408 = vsel %vm3012, %v3220, 0.0
  %v3409 = vsel %vm3013, %v3220, 0.0
  %v3410 = vsel %vm3014, %v3224, 0.0
  %v3411 = vsel %vm3015, %v3224, 0.0
  %v3412 = vsel %vm3016, %v3228, 0.0
  %v3413 = vsel %vm3017, %v3228, 0.0
  %v3414 = vsel %vm3018, %v3232, 0.0
  %v3415 = vsel %vm3019, %v3232, 0.0
  %v3416 = vsel %vm3020, %v3236, 0.0
  %v3417 = vsel %vm3021, %v3236, 0.0
  %v3418 = vsel %vm3022, %v3240, 0.0
  %v3419 = vsel %vm3023, %v3240, 0.0
  %v3420 = vsel %vm3024, %v3244, 0.0
  %v3421 = vsel %vm3025, %v3244, 0.0
  %v3422 = vsel %vm3026, %v3248, 0.0
  %v3423 = vsel %vm3027, %v3248, 0.0
  %v3424 = vsel %vm3028, %v3252, 0.0
  %v3425 = vsel %vm3029, %v3252, 0.0
  %v3426 = vsel %vm3030, %v3256, 0.0
  %v3427 = vsel %vm3031, %v3256, 0.0
  %v3428 = vsel %vm3032, %v3260, 0.0
  %v3429 = vsel %vm3033, %v3260, 0.0
  %v3430 = vsel %vm3034, %v3264, 0.0
  %v3431 = vsel %vm3035, %v3264, 0.0
  %v3432 = vsel %vm3036, %v3268, 0.0
  %v3433 = vsel %vm3037, %v3268, 0.0
  %v3434 = vsel %vm3038, %v3272, 0.0
  %v3435 = vsel %vm3039, %v3272, 0.0
  %v3436 = vsel %vm3040, %v3279, 0.0
  %v3437 = vsel %vm3041, %v3279, 0.0
  %v3438 = vsel %vm3042, %v3283, 0.0
  %v3439 = vsel %vm3043, %v3283, 0.0
  %v3440 = vsel %vm3044, %v3287, 0.0
  %v3441 = vsel %vm3045, %v3287, 0.0
  %v3442 = vsel %vm3046, %v3291, 0.0
  %v3443 = vsel %vm3047, %v3291, 0.0
  %v3444 = vsel %vm3048, %v3295, 0.0
  %v3445 = vsel %vm3049, %v3295, 0.0
  %v3446 = vsel %vm3050, %v3299, 0.0
  %v3447 = vsel %vm3051, %v3299, 0.0
  %v3448 = vsel %vm3052, %v3303, 0.0
  %v3449 = vsel %vm3053, %v3303, 0.0
  %v3450 = vsel %vm3054, %v3307, 0.0
  %v3451 = vsel %vm3055, %v3307, 0.0
  %v3452 = vsel %vm3056, %v3311, 0.0
  %v3453 = vsel %vm3057, %v3311, 0.0
  %v3454 = vsel %vm3058, %v3315, 0.0
  %v3455 = vsel %vm3059, %v3315, 0.0
  %v3456 = vsel %vm3060, %v3319, 0.0
  %v3457 = vsel %vm3061, %v3319, 0.0
  %v3458 = vsel %vm3062, %v3323, 0.0
  %v3459 = vsel %vm3063, %v3323, 0.0
  %v3460 = vsel %vm3064, %v3327, 0.0
  %v3461 = vsel %vm3065, %v3327, 0.0
  %v3462 = vsel %vm3066, %v3331, 0.0
  %v3463 = vsel %vm3067, %v3331, 0.0
  %v3464 = vsel %vm3068, %v3335, 0.0
  %v3465 = vsel %vm3069, %v3335, 0.0
  %v3466 = vsel %vm3070, %v3339, 0.0
  %v3467 = vsel %vm3071, %v3339, 0.0
  %v3468 = vadd.f32 %v2548, %v3340
  %v3469 = vadd.f32 %v2549, %v3341
  %v3470 = vadd.f32 %v2550, %v3342
  %v3471 = vadd.f32 %v2551, %v3343
  %v3472 = vadd.f32 %v2552, %v3344
  %v3473 = vadd.f32 %v2553, %v3345
  %v3474 = vadd.f32 %v2554, %v3346
  %v3475 = vadd.f32 %v2555, %v3347
  %v3476 = vadd.f32 %v2556, %v3348
  %v3477 = vadd.f32 %v2557, %v3349
  %v3478 = vadd.f32 %v2558, %v3350
  %v3479 = vadd.f32 %v2559, %v3351
  %v3480 = vadd.f32 %v2560, %v3352
  %v3481 = vadd.f32 %v2561, %v3353
  %v3482 = vadd.f32 %v2562, %v3354
  %v3483 = vadd.f32 %v2563, %v3355
  %v3484 = vadd.f32 %v2564, %v3356
  %v3485 = vadd.f32 %v2565, %v3357
  %v3486 = vadd.f32 %v2566, %v3358
  %v3487 = vadd.f32 %v2567, %v3359
  %v3488 = vadd.f32 %v2568, %v3360
  %v3489 = vadd.f32 %v2569, %v3361
  %v3490 = vadd.f32 %v2570, %v3362
  %v3491 = vadd.f32 %v2571, %v3363
  %v3492 = vadd.f32 %v2572, %v3364
  %v3493 = vadd.f32 %v2573, %v3365
  %v3494 = vadd.f32 %v2574, %v3366
  %v3495 = vadd.f32 %v2575, %v3367
  %v3496 = vadd.f32 %v2576, %v3368
  %v3497 = vadd.f32 %v2577, %v3369
  %v3498 = vadd.f32 %v2578, %v3370
  %v3499 = vadd.f32 %v2579, %v3371
  %v3500 = vadd.f32 %v2580, %v3372
  %v3501 = vadd.f32 %v2581, %v3373
  %v3502 = vadd.f32 %v2582, %v3374
  %v3503 = vadd.f32 %v2583, %v3375
  %v3504 = vadd.f32 %v2584, %v3376
  %v3505 = vadd.f32 %v2585, %v3377
  %v3506 = vadd.f32 %v2586, %v3378
  %v3507 = vadd.f32 %v2587, %v3379
  %v3508 = vadd.f32 %v2588, %v3380
  %v3509 = vadd.f32 %v2589, %v3381
  %v3510 = vadd.f32 %v2590, %v3382
  %v3511 = vadd.f32 %v2591, %v3383
  %v3512 = vadd.f32 %v2592, %v3384
  %v3513 = vadd.f32 %v2593, %v3385
  %v3514 = vadd.f32 %v2594, %v3386
  %v3515 = vadd.f32 %v2595, %v3387
  %v3516 = vadd.f32 %v2596, %v3388
  %v3517 = vadd.f32 %v2597, %v3389
  %v3518 = vadd.f32 %v2598, %v3390
  %v3519 = vadd.f32 %v2599, %v3391
  %v3520 = vadd.f32 %v2600, %v3392
  %v3521 = vadd.f32 %v2601, %v3393
  %v3522 = vadd.f32 %v2602, %v3394
  %v3523 = vadd.f32 %v2603, %v3395
  %v3524 = vadd.f32 %v2604, %v3396
  %v3525 = vadd.f32 %v2605, %v3397
  %v3526 = vadd.f32 %v2606, %v3398
  %v3527 = vadd.f32 %v2607, %v3399
  %v3528 = vadd.f32 %v2608, %v3400
  %v3529 = vadd.f32 %v2609, %v3401
  %v3530 = vadd.f32 %v2610, %v3402
  %v3531 = vadd.f32 %v2611, %v3403
  %v3532 = vadd.f32 %v2612, %v3404
  %v3533 = vadd.f32 %v2613, %v3405
  %v3534 = vadd.f32 %v2614, %v3406
  %v3535 = vadd.f32 %v2615, %v3407
  %v3536 = vadd.f32 %v2616, %v3408
  %v3537 = vadd.f32 %v2617, %v3409
  %v3538 = vadd.f32 %v2618, %v3410
  %v3539 = vadd.f32 %v2619, %v3411
  %v3540 = vadd.f32 %v2620, %v3412
  %v3541 = vadd.f32 %v2621, %v3413
  %v3542 = vadd.f32 %v2622, %v3414
  %v3543 = vadd.f32 %v2623, %v3415
  %v3544 = vadd.f32 %v2624, %v3416
  %v3545 = vadd.f32 %v2625, %v3417
  %v3546 = vadd.f32 %v2626, %v3418
  %v3547 = vadd.f32 %v2627, %v3419
  %v3548 = vadd.f32 %v2628, %v3420
  %v3549 = vadd.f32 %v2629, %v3421
  %v3550 = vadd.f32 %v2630, %v3422
  %v3551 = vadd.f32 %v2631, %v3423
  %v3552 = vadd.f32 %v2632, %v3424
  %v3553 = vadd.f32 %v2633, %v3425
  %v3554 = vadd.f32 %v2634, %v3426
  %v3555 = vadd.f32 %v2635, %v3427
  %v3556 = vadd.f32 %v2636, %v3428
  %v3557 = vadd.f32 %v2637, %v3429
  %v3558 = vadd.f32 %v2638, %v3430
  %v3559 = vadd.f32 %v2639, %v3431
  %v3560 = vadd.f32 %v2640, %v3432
  %v3561 = vadd.f32 %v2641, %v3433
  %v3562 = vadd.f32 %v2642, %v3434
  %v3563 = vadd.f32 %v2643, %v3435
  %v3564 = vadd.f32 %v2644, %v3436
  %v3565 = vadd.f32 %v2645, %v3437
  %v3566 = vadd.f32 %v2646, %v3438
  %v3567 = vadd.f32 %v2647, %v3439
  %v3568 = vadd.f32 %v2648, %v3440
  %v3569 = vadd.f32 %v2649, %v3441
  %v3570 = vadd.f32 %v2650, %v3442
  %v3571 = vadd.f32 %v2651, %v3443
  %v3572 = vadd.f32 %v2652, %v3444
  %v3573 = vadd.f32 %v2653, %v3445
  %v3574 = vadd.f32 %v2654, %v3446
  %v3575 = vadd.f32 %v2655, %v3447
  %v3576 = vadd.f32 %v2656, %v3448
  %v3577 = vadd.f32 %v2657, %v3449
  %v3578 = vadd.f32 %v2658, %v3450
  %v3579 = vadd.f32 %v2659, %v3451
  %v3580 = vadd.f32 %v2660, %v3452
  %v3581 = vadd.f32 %v2661, %v3453
  %v3582 = vadd.f32 %v2662, %v3454
  %v3583 = vadd.f32 %v2663, %v3455
  %v3584 = vadd.f32 %v2664, %v3456
  %v3585 = vadd.f32 %v2665, %v3457
  %v3586 = vadd.f32 %v2666, %v3458
  %v3587 = vadd.f32 %v2667, %v3459
  %v3588 = vadd.f32 %v2668, %v3460
  %v3589 = vadd.f32 %v2669, %v3461
  %v3590 = vadd.f32 %v2670, %v3462
  %v3591 = vadd.f32 %v2671, %v3463
  %v3592 = vadd.f32 %v2672, %v3464
  %v3593 = vadd.f32 %v2673, %v3465
  %v3594 = vadd.f32 %v2674, %v3466
  %v3595 = vadd.f32 %v2675, %v3467
  %v3598 = vunpack.c.l.s4 1966171168
  %v3599 = vunpack.c.0.s8 %v3598
  %v3600 = vlaneseq
  %v3601 = vshrl.u32 %v3600, 7
  %v3602 = vsub.s32 %v3599, %v3601
  %v3603 = vrot.slane %v11, %v3602
  %v3604 = vcombine.high %v3603, %v3603
  %v3606 = vunpack.c.l.s4 1966171168
  %v3607 = vunpack.c.0.s8 %v3606
  %v3608 = vlaneseq
  %v3609 = vshrl.u32 %v3608, 7
  %v3610 = vsub.s32 %v3607, %v3609
  %v3611 = vrot.slane %v3603, %v3610
  %v3613 = vunpack.c.l.s4 1966171168
  %v3614 = vunpack.c.0.s8 %v3613
  %v3615 = vlaneseq
  %v3616 = vshrl.u32 %v3615, 7
  %v3617 = vsub.s32 %v3614, %v3616
  %v3618 = vrot.slane %v3604, %v3617
  %v3619 = vcombine.high %v3611, %v3611
  %v3620 = vcombine.high %v3618, %v3618
  %v3621 = vlaneseq
  %v3622 = vshrl.u32 %v3621, 7
  %v3623 = vsub.s32 0, %v3622
  %v3624 = vrot.slane %v3611, %v3623
  %v3625 = vlaneseq
  %v3626 = vshrl.u32 %v3625, 7
  %v3627 = vsub.s32 1, %v3626
  %v3628 = vrot.slane %v3611, %v3627
  %v3629 = vlaneseq
  %v3630 = vshrl.u32 %v3629, 7
  %v3631 = vsub.s32 0, %v3630
  %v3632 = vrot.slane %v3618, %v3631
  %v3633 = vlaneseq
  %v3634 = vshrl.u32 %v3633, 7
  %v3635 = vsub.s32 1, %v3634
  %v3636 = vrot.slane %v3618, %v3635
  %v3637 = vlaneseq
  %v3638 = vshrl.u32 %v3637, 7
  %v3639 = vsub.s32 0, %v3638
  %v3640 = vrot.slane %v3619, %v3639
  %v3641 = vlaneseq
  %v3642 = vshrl.u32 %v3641, 7
  %v3643 = vsub.s32 1, %v3642
  %v3644 = vrot.slane %v3619, %v3643
  %v3645 = vlaneseq
  %v3646 = vshrl.u32 %v3645, 7
  %v3647 = vsub.s32 0, %v3646
  %v3648 = vrot.slane %v3620, %v3647
  %v3649 = vlaneseq
  %v3650 = vshrl.u32 %v3649, 7
  %v3651 = vsub.s32 1, %v3650
  %v3652 = vrot.slane %v3620, %v3651
  %v3661 = vmul.f32 %v3468, %v3624
  %v3662 = vmul.f32 %v3469, %v3628
  %v3663 = vmul.f32 %v3470, %v3624
  %v3664 = vmul.f32 %v3471, %v3628
  %v3665 = vmul.f32 %v3472, %v3624
  %v3666 = vmul.f32 %v3473, %v3628
  %v3667 = vmul.f32 %v3474, %v3624
  %v3668 = vmul.f32 %v3475, %v3628
  %v3669 = vmul.f32 %v3476, %v3624
  %v3670 = vmul.f32 %v3477, %v3628
  %v3671 = vmul.f32 %v3478, %v3624
  %v3672 = vmul.f32 %v3479, %v3628
  %v3673 = vmul.f32 %v3480, %v3624
  %v3674 = vmul.f32 %v3481, %v3628
  %v3675 = vmul.f32 %v3482, %v3624
  %v3676 = vmul.f32 %v3483, %v3628
  %v3677 = vmul.f32 %v3484, %v3624
  %v3678 = vmul.f32 %v3485, %v3628
  %v3679 = vmul.f32 %v3486, %v3624
  %v3680 = vmul.f32 %v3487, %v3628
  %v3681 = vmul.f32 %v3488, %v3624
  %v3682 = vmul.f32 %v3489, %v3628
  %v3683 = vmul.f32 %v3490, %v3624
  %v3684 = vmul.f32 %v3491, %v3628
  %v3685 = vmul.f32 %v3492, %v3624
  %v3686 = vmul.f32 %v3493, %v3628
  %v3687 = vmul.f32 %v3494, %v3624
  %v3688 = vmul.f32 %v3495, %v3628
  %v3689 = vmul.f32 %v3496, %v3624
  %v3690 = vmul.f32 %v3497, %v3628
  %v3691 = vmul.f32 %v3498, %v3624
  %v3692 = vmul.f32 %v3499, %v3628
  %v3693 = vmul.f32 %v3500, %v3632
  %v3694 = vmul.f32 %v3501, %v3636
  %v3695 = vmul.f32 %v3502, %v3632
  %v3696 = vmul.f32 %v3503, %v3636
  %v3697 = vmul.f32 %v3504, %v3632
  %v3698 = vmul.f32 %v3505, %v3636
  %v3699 = vmul.f32 %v3506, %v3632
  %v3700 = vmul.f32 %v3507, %v3636
  %v3701 = vmul.f32 %v3508, %v3632
  %v3702 = vmul.f32 %v3509, %v3636
  %v3703 = vmul.f32 %v3510, %v3632
  %v3704 = vmul.f32 %v3511, %v3636
  %v3705 = vmul.f32 %v3512, %v3632
  %v3706 = vmul.f32 %v3513, %v3636
  %v3707 = vmul.f32 %v3514, %v3632
  %v3708 = vmul.f32 %v3515, %v3636
  %v3709 = vmul.f32 %v3516, %v3632
  %v3710 = vmul.f32 %v3517, %v3636
  %v3711 = vmul.f32 %v3518, %v3632
  %v3712 = vmul.f32 %v3519, %v3636
  %v3713 = vmul.f32 %v3520, %v3632
  %v3714 = vmul.f32 %v3521, %v3636
  %v3715 = vmul.f32 %v3522, %v3632
  %v3716 = vmul.f32 %v3523, %v3636
  %v3717 = vmul.f32 %v3524, %v3632
  %v3718 = vmul.f32 %v3525, %v3636
  %v3719 = vmul.f32 %v3526, %v3632
  %v3720 = vmul.f32 %v3527, %v3636
  %v3721 = vmul.f32 %v3528, %v3632
  %v3722 = vmul.f32 %v3529, %v3636
  %v3723 = vmul.f32 %v3530, %v3632
  %v3724 = vmul.f32 %v3531, %v3636
  %v3725 = vmul.f32 %v3532, %v3640
  %v3726 = vmul.f32 %v3533, %v3644
  %v3727 = vmul.f32 %v3534, %v3640
  %v3728 = vmul.f32 %v3535, %v3644
  %v3729 = vmul.f32 %v3536, %v3640
  %v3730 = vmul.f32 %v3537, %v3644
  %v3731 = vmul.f32 %v3538, %v3640
  %v3732 = vmul.f32 %v3539, %v3644
  %v3733 = vmul.f32 %v3540, %v3640
  %v3734 = vmul.f32 %v3541, %v3644
  %v3735 = vmul.f32 %v3542, %v3640
  %v3736 = vmul.f32 %v3543, %v3644
  %v3737 = vmul.f32 %v3544, %v3640
  %v3738 = vmul.f32 %v3545, %v3644
  %v3739 = vmul.f32 %v3546, %v3640
  %v3740 = vmul.f32 %v3547, %v3644
  %v3741 = vmul.f32 %v3548, %v3640
  %v3742 = vmul.f32 %v3549, %v3644
  %v3743 = vmul.f32 %v3550, %v3640
  %v3744 = vmul.f32 %v3551, %v3644
  %v3745 = vmul.f32 %v3552, %v3640
  %v3746 = vmul.f32 %v3553, %v3644
  %v3747 = vmul.f32 %v3554, %v3640
  %v3748 = vmul.f32 %v3555, %v3644
  %v3749 = vmul.f32 %v3556, %v3640
  %v3750 = vmul.f32 %v3557, %v3644
  %v3751 = vmul.f32 %v3558, %v3640
  %v3752 = vmul.f32 %v3559, %v3644
  %v3753 = vmul.f32 %v3560, %v3640
  %v3754 = vmul.f32 %v3561, %v3644
  %v3755 = vmul.f32 %v3562, %v3640
  %v3756 = vmul.f32 %v3563, %v3644
  %v3757 = vmul.f32 %v3564, %v3648
  %v3758 = vmul.f32 %v3565, %v3652
  %v3759 = vmul.f32 %v3566, %v3648
  %v3760 = vmul.f32 %v3567, %v3652
  %v3761 = vmul.f32 %v3568, %v3648
  %v3762 = vmul.f32 %v3569, %v3652
  %v3763 = vmul.f32 %v3570, %v3648
  %v3764 = vmul.f32 %v3571, %v3652
  %v3765 = vmul.f32 %v3572, %v3648
  %v3766 = vmul.f32 %v3573, %v3652
  %v3767 = vmul.f32 %v3574, %v3648
  %v3768 = vmul.f32 %v3575, %v3652
  %v3769 = vmul.f32 %v3576, %v3648
  %v3770 = vmul.f32 %v3577, %v3652
  %v3771 = vmul.f32 %v3578, %v3648
  %v3772 = vmul.f32 %v3579, %v3652
  %v3773 = vmul.f32 %v3580, %v3648
  %v3774 = vmul.f32 %v3581, %v3652
  %v3775 = vmul.f32 %v3582, %v3648
  %v3776 = vmul.f32 %v3583, %v3652
  %v3777 = vmul.f32 %v3584, %v3648
  %v3778 = vmul.f32 %v3585, %v3652
  %v3779 = vmul.f32 %v3586, %v3648
  %v3780 = vmul.f32 %v3587, %v3652
  %v3781 = vmul.f32 %v3588, %v3648
  %v3782 = vmul.f32 %v3589, %v3652
  %v3783 = vmul.f32 %v3590, %v3648
  %v3784 = vmul.f32 %v3591, %v3652
  %v3785 = vmul.f32 %v3592, %v3648
  %v3786 = vmul.f32 %v3593, %v3652
  %v3787 = vmul.f32 %v3594, %v3648
  %v3788 = vmul.f32 %v3595, %v3652
  %v3789 = vadd.f32 %v3661, %v3662
  %3790 = vadd.xlane.f32.xlu0 %v3789
  %v3791 = vpop.xlane.xlu0 %3790
  %v3792 = vadd.f32 %v3663, %v3664
  %3793 = vadd.xlane.f32.xlu0 %v3792
  %v3794 = vpop.xlane.xlu0 %3793
  %v3795 = vadd.f32 %v3665, %v3666
  %3796 = vadd.xlane.f32.xlu0 %v3795
  %v3797 = vpop.xlane.xlu0 %3796
  %v3798 = vadd.f32 %v3667, %v3668
  %3799 = vadd.xlane.f32.xlu0 %v3798
  %v3800 = vpop.xlane.xlu0 %3799
  %v3801 = vadd.f32 %v3669, %v3670
  %3802 = vadd.xlane.f32.xlu0 %v3801
  %v3803 = vpop.xlane.xlu0 %3802
  %v3804 = vadd.f32 %v3671, %v3672
  %3805 = vadd.xlane.f32.xlu0 %v3804
  %v3806 = vpop.xlane.xlu0 %3805
  %v3807 = vadd.f32 %v3673, %v3674
  %3808 = vadd.xlane.f32.xlu0 %v3807
  %v3809 = vpop.xlane.xlu0 %3808
  %v3810 = vadd.f32 %v3675, %v3676
  %3811 = vadd.xlane.f32.xlu0 %v3810
  %v3812 = vpop.xlane.xlu0 %3811
  %v3813 = vadd.f32 %v3677, %v3678
  %3814 = vadd.xlane.f32.xlu0 %v3813
  %v3815 = vpop.xlane.xlu0 %3814
  %v3816 = vadd.f32 %v3679, %v3680
  %3817 = vadd.xlane.f32.xlu0 %v3816
  %v3818 = vpop.xlane.xlu0 %3817
  %v3819 = vadd.f32 %v3681, %v3682
  %3820 = vadd.xlane.f32.xlu0 %v3819
  %v3821 = vpop.xlane.xlu0 %3820
  %v3822 = vadd.f32 %v3683, %v3684
  %3823 = vadd.xlane.f32.xlu0 %v3822
  %v3824 = vpop.xlane.xlu0 %3823
  %v3825 = vadd.f32 %v3685, %v3686
  %3826 = vadd.xlane.f32.xlu0 %v3825
  %v3827 = vpop.xlane.xlu0 %3826
  %v3828 = vadd.f32 %v3687, %v3688
  %3829 = vadd.xlane.f32.xlu0 %v3828
  %v3830 = vpop.xlane.xlu0 %3829
  %v3831 = vadd.f32 %v3689, %v3690
  %3832 = vadd.xlane.f32.xlu0 %v3831
  %v3833 = vpop.xlane.xlu0 %3832
  %v3834 = vadd.f32 %v3691, %v3692
  %3835 = vadd.xlane.f32.xlu0 %v3834
  %v3836 = vpop.xlane.xlu0 %3835
  %v3837 = vadd.f32 %v3693, %v3694
  %3838 = vadd.xlane.f32.xlu0 %v3837
  %v3839 = vpop.xlane.xlu0 %3838
  %v3840 = vadd.f32 %v3695, %v3696
  %3841 = vadd.xlane.f32.xlu0 %v3840
  %v3842 = vpop.xlane.xlu0 %3841
  %v3843 = vadd.f32 %v3697, %v3698
  %3844 = vadd.xlane.f32.xlu0 %v3843
  %v3845 = vpop.xlane.xlu0 %3844
  %v3846 = vadd.f32 %v3699, %v3700
  %3847 = vadd.xlane.f32.xlu0 %v3846
  %v3848 = vpop.xlane.xlu0 %3847
  %v3849 = vadd.f32 %v3701, %v3702
  %3850 = vadd.xlane.f32.xlu0 %v3849
  %v3851 = vpop.xlane.xlu0 %3850
  %v3852 = vadd.f32 %v3703, %v3704
  %3853 = vadd.xlane.f32.xlu0 %v3852
  %v3854 = vpop.xlane.xlu0 %3853
  %v3855 = vadd.f32 %v3705, %v3706
  %3856 = vadd.xlane.f32.xlu0 %v3855
  %v3857 = vpop.xlane.xlu0 %3856
  %v3858 = vadd.f32 %v3707, %v3708
  %3859 = vadd.xlane.f32.xlu0 %v3858
  %v3860 = vpop.xlane.xlu0 %3859
  %v3861 = vadd.f32 %v3709, %v3710
  %3862 = vadd.xlane.f32.xlu0 %v3861
  %v3863 = vpop.xlane.xlu0 %3862
  %v3864 = vadd.f32 %v3711, %v3712
  %3865 = vadd.xlane.f32.xlu0 %v3864
  %v3866 = vpop.xlane.xlu0 %3865
  %v3867 = vadd.f32 %v3713, %v3714
  %3868 = vadd.xlane.f32.xlu0 %v3867
  %v3869 = vpop.xlane.xlu0 %3868
  %v3870 = vadd.f32 %v3715, %v3716
  %3871 = vadd.xlane.f32.xlu0 %v3870
  %v3872 = vpop.xlane.xlu0 %3871
  %v3873 = vadd.f32 %v3717, %v3718
  %3874 = vadd.xlane.f32.xlu0 %v3873
  %v3875 = vpop.xlane.xlu0 %3874
  %v3876 = vadd.f32 %v3719, %v3720
  %3877 = vadd.xlane.f32.xlu0 %v3876
  %v3878 = vpop.xlane.xlu0 %3877
  %v3879 = vadd.f32 %v3721, %v3722
  %3880 = vadd.xlane.f32.xlu0 %v3879
  %v3881 = vpop.xlane.xlu0 %3880
  %v3882 = vadd.f32 %v3723, %v3724
  %3883 = vadd.xlane.f32.xlu0 %v3882
  %v3884 = vpop.xlane.xlu0 %3883
  %v3885 = vadd.f32 %v3725, %v3726
  %3886 = vadd.xlane.f32.xlu0 %v3885
  %v3887 = vpop.xlane.xlu0 %3886
  %v3888 = vadd.f32 %v3727, %v3728
  %3889 = vadd.xlane.f32.xlu0 %v3888
  %v3890 = vpop.xlane.xlu0 %3889
  %v3891 = vadd.f32 %v3729, %v3730
  %3892 = vadd.xlane.f32.xlu0 %v3891
  %v3893 = vpop.xlane.xlu0 %3892
  %v3894 = vadd.f32 %v3731, %v3732
  %3895 = vadd.xlane.f32.xlu0 %v3894
  %v3896 = vpop.xlane.xlu0 %3895
  %v3897 = vadd.f32 %v3733, %v3734
  %3898 = vadd.xlane.f32.xlu0 %v3897
  %v3899 = vpop.xlane.xlu0 %3898
  %v3900 = vadd.f32 %v3735, %v3736
  %3901 = vadd.xlane.f32.xlu0 %v3900
  %v3902 = vpop.xlane.xlu0 %3901
  %v3903 = vadd.f32 %v3737, %v3738
  %3904 = vadd.xlane.f32.xlu0 %v3903
  %v3905 = vpop.xlane.xlu0 %3904
  %v3906 = vadd.f32 %v3739, %v3740
  %3907 = vadd.xlane.f32.xlu0 %v3906
  %v3908 = vpop.xlane.xlu0 %3907
  %v3909 = vadd.f32 %v3741, %v3742
  %3910 = vadd.xlane.f32.xlu0 %v3909
  %v3911 = vpop.xlane.xlu0 %3910
  %v3912 = vadd.f32 %v3743, %v3744
  %3913 = vadd.xlane.f32.xlu0 %v3912
  %v3914 = vpop.xlane.xlu0 %3913
  %v3915 = vadd.f32 %v3745, %v3746
  %3916 = vadd.xlane.f32.xlu0 %v3915
  %v3917 = vpop.xlane.xlu0 %3916
  %v3918 = vadd.f32 %v3747, %v3748
  %3919 = vadd.xlane.f32.xlu0 %v3918
  %v3920 = vpop.xlane.xlu0 %3919
  %v3921 = vadd.f32 %v3749, %v3750
  %3922 = vadd.xlane.f32.xlu0 %v3921
  %v3923 = vpop.xlane.xlu0 %3922
  %v3924 = vadd.f32 %v3751, %v3752
  %3925 = vadd.xlane.f32.xlu0 %v3924
  %v3926 = vpop.xlane.xlu0 %3925
  %v3927 = vadd.f32 %v3753, %v3754
  %3928 = vadd.xlane.f32.xlu0 %v3927
  %v3929 = vpop.xlane.xlu0 %3928
  %v3930 = vadd.f32 %v3755, %v3756
  %3931 = vadd.xlane.f32.xlu0 %v3930
  %v3932 = vpop.xlane.xlu0 %3931
  %v3933 = vadd.f32 %v3757, %v3758
  %3934 = vadd.xlane.f32.xlu0 %v3933
  %v3935 = vpop.xlane.xlu0 %3934
  %v3936 = vadd.f32 %v3759, %v3760
  %3937 = vadd.xlane.f32.xlu0 %v3936
  %v3938 = vpop.xlane.xlu0 %3937
  %v3939 = vadd.f32 %v3761, %v3762
  %3940 = vadd.xlane.f32.xlu0 %v3939
  %v3941 = vpop.xlane.xlu0 %3940
  %v3942 = vadd.f32 %v3763, %v3764
  %3943 = vadd.xlane.f32.xlu0 %v3942
  %v3944 = vpop.xlane.xlu0 %3943
  %v3945 = vadd.f32 %v3765, %v3766
  %3946 = vadd.xlane.f32.xlu0 %v3945
  %v3947 = vpop.xlane.xlu0 %3946
  %v3948 = vadd.f32 %v3767, %v3768
  %3949 = vadd.xlane.f32.xlu0 %v3948
  %v3950 = vpop.xlane.xlu0 %3949
  %v3951 = vadd.f32 %v3769, %v3770
  %3952 = vadd.xlane.f32.xlu0 %v3951
  %v3953 = vpop.xlane.xlu0 %3952
  %v3954 = vadd.f32 %v3771, %v3772
  %3955 = vadd.xlane.f32.xlu0 %v3954
  %v3956 = vpop.xlane.xlu0 %3955
  %v3957 = vadd.f32 %v3773, %v3774
  %3958 = vadd.xlane.f32.xlu0 %v3957
  %v3959 = vpop.xlane.xlu0 %3958
  %v3960 = vadd.f32 %v3775, %v3776
  %3961 = vadd.xlane.f32.xlu0 %v3960
  %v3962 = vpop.xlane.xlu0 %3961
  %v3963 = vadd.f32 %v3777, %v3778
  %3964 = vadd.xlane.f32.xlu0 %v3963
  %v3965 = vpop.xlane.xlu0 %3964
  %v3966 = vadd.f32 %v3779, %v3780
  %3967 = vadd.xlane.f32.xlu0 %v3966
  %v3968 = vpop.xlane.xlu0 %3967
  %v3969 = vadd.f32 %v3781, %v3782
  %3970 = vadd.xlane.f32.xlu0 %v3969
  %v3971 = vpop.xlane.xlu0 %3970
  %v3972 = vadd.f32 %v3783, %v3784
  %3973 = vadd.xlane.f32.xlu0 %v3972
  %v3974 = vpop.xlane.xlu0 %3973
  %v3975 = vadd.f32 %v3785, %v3786
  %3976 = vadd.xlane.f32.xlu0 %v3975
  %v3977 = vpop.xlane.xlu0 %3976
  %v3978 = vadd.f32 %v3787, %v3788
  %3979 = vadd.xlane.f32.xlu0 %v3978
  %v3980 = vpop.xlane.xlu0 %3979
  %v4045 = vlaneseq
  %v4046 = vshrl.u32 %v4045, 7
  %v4047 = vsub.s32 %v42, %v4046
  %v4048 = vrot.slane %v3791, %v4047
  %v4049 = vadd.s32 %v42, 4294967288
  %v4050 = vlaneseq
  %v4051 = vshrl.u32 %v4050, 7
  %v4052 = vsub.s32 %v4049, %v4051
  %v4053 = vrot.slane %v3794, %v4052
  %vm4054 = vcmask 130112
  %v4055 = vsel %vm4054, %v4053, %v4048
  %v4056 = vadd.s32 %v42, 4294967280
  %v4057 = vlaneseq
  %v4058 = vshrl.u32 %v4057, 7
  %v4059 = vsub.s32 %v4056, %v4058
  %v4060 = vrot.slane %v3797, %v4059
  %vm4061 = vcmask 195712
  %v4062 = vsel %vm4061, %v4060, %v4055
  %v4063 = vadd.s32 %v42, 4294967272
  %v4064 = vlaneseq
  %v4065 = vshrl.u32 %v4064, 7
  %v4066 = vsub.s32 %v4063, %v4065
  %v4067 = vrot.slane %v3800, %v4066
  %vm4068 = vcmask 261312
  %v4069 = vsel %vm4068, %v4067, %v4062
  %v4070 = vadd.s32 %v42, 4294967264
  %v4071 = vlaneseq
  %v4072 = vshrl.u32 %v4071, 7
  %v4073 = vsub.s32 %v4070, %v4072
  %v4074 = vrot.slane %v3803, %v4073
  %vm4075 = vcmask 326912
  %v4076 = vsel %vm4075, %v4074, %v4069
  %v4077 = vadd.s32 %v42, 4294967256
  %v4078 = vlaneseq
  %v4079 = vshrl.u32 %v4078, 7
  %v4080 = vsub.s32 %v4077, %v4079
  %v4081 = vrot.slane %v3806, %v4080
  %vm4082 = vcmask 392512
  %v4083 = vsel %vm4082, %v4081, %v4076
  %v4084 = vadd.s32 %v42, 4294967248
  %v4085 = vlaneseq
  %v4086 = vshrl.u32 %v4085, 7
  %v4087 = vsub.s32 %v4084, %v4086
  %v4088 = vrot.slane %v3809, %v4087
  %vm4089 = vcmask 458112
  %v4090 = vsel %vm4089, %v4088, %v4083
  %v4091 = vadd.s32 %v42, 4294967240
  %v4092 = vlaneseq
  %v4093 = vshrl.u32 %v4092, 7
  %v4094 = vsub.s32 %v4091, %v4093
  %v4095 = vrot.slane %v3812, %v4094
  %vm4096 = vcmask 523712
  %v4097 = vsel %vm4096, %v4095, %v4090
  %v4098 = vadd.s32 %v42, 4294967232
  %v4099 = vlaneseq
  %v4100 = vshrl.u32 %v4099, 7
  %v4101 = vsub.s32 %v4098, %v4100
  %v4102 = vrot.slane %v3815, %v4101
  %vm4103 = vcmask 589312
  %v4104 = vsel %vm4103, %v4102, %v4097
  %v4105 = vadd.s32 %v42, 4294967224
  %v4106 = vlaneseq
  %v4107 = vshrl.u32 %v4106, 7
  %v4108 = vsub.s32 %v4105, %v4107
  %v4109 = vrot.slane %v3818, %v4108
  %vm4110 = vcmask 654912
  %v4111 = vsel %vm4110, %v4109, %v4104
  %v4112 = vadd.s32 %v42, 4294967216
  %v4113 = vlaneseq
  %v4114 = vshrl.u32 %v4113, 7
  %v4115 = vsub.s32 %v4112, %v4114
  %v4116 = vrot.slane %v3821, %v4115
  %vm4117 = vcmask 720512
  %v4118 = vsel %vm4117, %v4116, %v4111
  %v4119 = vadd.s32 %v42, 4294967208
  %v4120 = vlaneseq
  %v4121 = vshrl.u32 %v4120, 7
  %v4122 = vsub.s32 %v4119, %v4121
  %v4123 = vrot.slane %v3824, %v4122
  %vm4124 = vcmask 786112
  %v4125 = vsel %vm4124, %v4123, %v4118
  %v4126 = vadd.s32 %v42, 4294967200
  %v4127 = vlaneseq
  %v4128 = vshrl.u32 %v4127, 7
  %v4129 = vsub.s32 %v4126, %v4128
  %v4130 = vrot.slane %v3827, %v4129
  %vm4131 = vcmask 851712
  %v4132 = vsel %vm4131, %v4130, %v4125
  %v4133 = vadd.s32 %v42, 4294967192
  %v4134 = vlaneseq
  %v4135 = vshrl.u32 %v4134, 7
  %v4136 = vsub.s32 %v4133, %v4135
  %v4137 = vrot.slane %v3830, %v4136
  %vm4138 = vcmask 917312
  %v4139 = vsel %vm4138, %v4137, %v4132
  %v4140 = vadd.s32 %v42, 4294967184
  %v4141 = vlaneseq
  %v4142 = vshrl.u32 %v4141, 7
  %v4143 = vsub.s32 %v4140, %v4142
  %v4144 = vrot.slane %v3833, %v4143
  %vm4145 = vcmask 982912
  %v4146 = vsel %vm4145, %v4144, %v4139
  %v4147 = vadd.s32 %v42, 4294967176
  %v4148 = vlaneseq
  %v4149 = vshrl.u32 %v4148, 7
  %v4150 = vsub.s32 %v4147, %v4149
  %v4151 = vrot.slane %v3836, %v4150
  %vm4152 = vcmask 1048512
  %v4153 = vsel %vm4152, %v4151, %v4146
  %v4154 = vlaneseq
  %v4155 = vshrl.u32 %v4154, 7
  %v4156 = vsub.s32 %v42, %v4155
  %v4157 = vrot.slane %v3839, %v4156
  %v4158 = vlaneseq
  %v4159 = vshrl.u32 %v4158, 7
  %v4160 = vsub.s32 %v4049, %v4159
  %v4161 = vrot.slane %v3842, %v4160
  %v4162 = vsel %vm4054, %v4161, %v4157
  %v4163 = vlaneseq
  %v4164 = vshrl.u32 %v4163, 7
  %v4165 = vsub.s32 %v4056, %v4164
  %v4166 = vrot.slane %v3845, %v4165
  %v4167 = vsel %vm4061, %v4166, %v4162
  %v4168 = vlaneseq
  %v4169 = vshrl.u32 %v4168, 7
  %v4170 = vsub.s32 %v4063, %v4169
  %v4171 = vrot.slane %v3848, %v4170
  %v4172 = vsel %vm4068, %v4171, %v4167
  %v4173 = vlaneseq
  %v4174 = vshrl.u32 %v4173, 7
  %v4175 = vsub.s32 %v4070, %v4174
  %v4176 = vrot.slane %v3851, %v4175
  %v4177 = vsel %vm4075, %v4176, %v4172
  %v4178 = vlaneseq
  %v4179 = vshrl.u32 %v4178, 7
  %v4180 = vsub.s32 %v4077, %v4179
  %v4181 = vrot.slane %v3854, %v4180
  %v4182 = vsel %vm4082, %v4181, %v4177
  %v4183 = vlaneseq
  %v4184 = vshrl.u32 %v4183, 7
  %v4185 = vsub.s32 %v4084, %v4184
  %v4186 = vrot.slane %v3857, %v4185
  %v4187 = vsel %vm4089, %v4186, %v4182
  %v4188 = vlaneseq
  %v4189 = vshrl.u32 %v4188, 7
  %v4190 = vsub.s32 %v4091, %v4189
  %v4191 = vrot.slane %v3860, %v4190
  %v4192 = vsel %vm4096, %v4191, %v4187
  %v4193 = vlaneseq
  %v4194 = vshrl.u32 %v4193, 7
  %v4195 = vsub.s32 %v4098, %v4194
  %v4196 = vrot.slane %v3863, %v4195
  %v4197 = vsel %vm4103, %v4196, %v4192
  %v4198 = vlaneseq
  %v4199 = vshrl.u32 %v4198, 7
  %v4200 = vsub.s32 %v4105, %v4199
  %v4201 = vrot.slane %v3866, %v4200
  %v4202 = vsel %vm4110, %v4201, %v4197
  %v4203 = vlaneseq
  %v4204 = vshrl.u32 %v4203, 7
  %v4205 = vsub.s32 %v4112, %v4204
  %v4206 = vrot.slane %v3869, %v4205
  %v4207 = vsel %vm4117, %v4206, %v4202
  %v4208 = vlaneseq
  %v4209 = vshrl.u32 %v4208, 7
  %v4210 = vsub.s32 %v4119, %v4209
  %v4211 = vrot.slane %v3872, %v4210
  %v4212 = vsel %vm4124, %v4211, %v4207
  %v4213 = vlaneseq
  %v4214 = vshrl.u32 %v4213, 7
  %v4215 = vsub.s32 %v4126, %v4214
  %v4216 = vrot.slane %v3875, %v4215
  %v4217 = vsel %vm4131, %v4216, %v4212
  %v4218 = vlaneseq
  %v4219 = vshrl.u32 %v4218, 7
  %v4220 = vsub.s32 %v4133, %v4219
  %v4221 = vrot.slane %v3878, %v4220
  %v4222 = vsel %vm4138, %v4221, %v4217
  %v4223 = vlaneseq
  %v4224 = vshrl.u32 %v4223, 7
  %v4225 = vsub.s32 %v4140, %v4224
  %v4226 = vrot.slane %v3881, %v4225
  %v4227 = vsel %vm4145, %v4226, %v4222
  %v4228 = vlaneseq
  %v4229 = vshrl.u32 %v4228, 7
  %v4230 = vsub.s32 %v4147, %v4229
  %v4231 = vrot.slane %v3884, %v4230
  %v4232 = vsel %vm4152, %v4231, %v4227
  %v4233 = vlaneseq
  %v4234 = vshrl.u32 %v4233, 7
  %v4235 = vsub.s32 %v42, %v4234
  %v4236 = vrot.slane %v3887, %v4235
  %v4237 = vlaneseq
  %v4238 = vshrl.u32 %v4237, 7
  %v4239 = vsub.s32 %v4049, %v4238
  %v4240 = vrot.slane %v3890, %v4239
  %v4241 = vsel %vm4054, %v4240, %v4236
  %v4242 = vlaneseq
  %v4243 = vshrl.u32 %v4242, 7
  %v4244 = vsub.s32 %v4056, %v4243
  %v4245 = vrot.slane %v3893, %v4244
  %v4246 = vsel %vm4061, %v4245, %v4241
  %v4247 = vlaneseq
  %v4248 = vshrl.u32 %v4247, 7
  %v4249 = vsub.s32 %v4063, %v4248
  %v4250 = vrot.slane %v3896, %v4249
  %v4251 = vsel %vm4068, %v4250, %v4246
  %v4252 = vlaneseq
  %v4253 = vshrl.u32 %v4252, 7
  %v4254 = vsub.s32 %v4070, %v4253
  %v4255 = vrot.slane %v3899, %v4254
  %v4256 = vsel %vm4075, %v4255, %v4251
  %v4257 = vlaneseq
  %v4258 = vshrl.u32 %v4257, 7
  %v4259 = vsub.s32 %v4077, %v4258
  %v4260 = vrot.slane %v3902, %v4259
  %v4261 = vsel %vm4082, %v4260, %v4256
  %v4262 = vlaneseq
  %v4263 = vshrl.u32 %v4262, 7
  %v4264 = vsub.s32 %v4084, %v4263
  %v4265 = vrot.slane %v3905, %v4264
  %v4266 = vsel %vm4089, %v4265, %v4261
  %v4267 = vlaneseq
  %v4268 = vshrl.u32 %v4267, 7
  %v4269 = vsub.s32 %v4091, %v4268
  %v4270 = vrot.slane %v3908, %v4269
  %v4271 = vsel %vm4096, %v4270, %v4266
  %v4272 = vlaneseq
  %v4273 = vshrl.u32 %v4272, 7
  %v4274 = vsub.s32 %v4098, %v4273
  %v4275 = vrot.slane %v3911, %v4274
  %v4276 = vsel %vm4103, %v4275, %v4271
  %v4277 = vlaneseq
  %v4278 = vshrl.u32 %v4277, 7
  %v4279 = vsub.s32 %v4105, %v4278
  %v4280 = vrot.slane %v3914, %v4279
  %v4281 = vsel %vm4110, %v4280, %v4276
  %v4282 = vlaneseq
  %v4283 = vshrl.u32 %v4282, 7
  %v4284 = vsub.s32 %v4112, %v4283
  %v4285 = vrot.slane %v3917, %v4284
  %v4286 = vsel %vm4117, %v4285, %v4281
  %v4287 = vlaneseq
  %v4288 = vshrl.u32 %v4287, 7
  %v4289 = vsub.s32 %v4119, %v4288
  %v4290 = vrot.slane %v3920, %v4289
  %v4291 = vsel %vm4124, %v4290, %v4286
  %v4292 = vlaneseq
  %v4293 = vshrl.u32 %v4292, 7
  %v4294 = vsub.s32 %v4126, %v4293
  %v4295 = vrot.slane %v3923, %v4294
  %v4296 = vsel %vm4131, %v4295, %v4291
  %v4297 = vlaneseq
  %v4298 = vshrl.u32 %v4297, 7
  %v4299 = vsub.s32 %v4133, %v4298
  %v4300 = vrot.slane %v3926, %v4299
  %v4301 = vsel %vm4138, %v4300, %v4296
  %v4302 = vlaneseq
  %v4303 = vshrl.u32 %v4302, 7
  %v4304 = vsub.s32 %v4140, %v4303
  %v4305 = vrot.slane %v3929, %v4304
  %v4306 = vsel %vm4145, %v4305, %v4301
  %v4307 = vlaneseq
  %v4308 = vshrl.u32 %v4307, 7
  %v4309 = vsub.s32 %v4147, %v4308
  %v4310 = vrot.slane %v3932, %v4309
  %v4311 = vsel %vm4152, %v4310, %v4306
  %v4312 = vlaneseq
  %v4313 = vshrl.u32 %v4312, 7
  %v4314 = vsub.s32 %v42, %v4313
  %v4315 = vrot.slane %v3935, %v4314
  %v4316 = vlaneseq
  %v4317 = vshrl.u32 %v4316, 7
  %v4318 = vsub.s32 %v4049, %v4317
  %v4319 = vrot.slane %v3938, %v4318
  %v4320 = vsel %vm4054, %v4319, %v4315
  %v4321 = vlaneseq
  %v4322 = vshrl.u32 %v4321, 7
  %v4323 = vsub.s32 %v4056, %v4322
  %v4324 = vrot.slane %v3941, %v4323
  %v4325 = vsel %vm4061, %v4324, %v4320
  %v4326 = vlaneseq
  %v4327 = vshrl.u32 %v4326, 7
  %v4328 = vsub.s32 %v4063, %v4327
  %v4329 = vrot.slane %v3944, %v4328
  %v4330 = vsel %vm4068, %v4329, %v4325
  %v4331 = vlaneseq
  %v4332 = vshrl.u32 %v4331, 7
  %v4333 = vsub.s32 %v4070, %v4332
  %v4334 = vrot.slane %v3947, %v4333
  %v4335 = vsel %vm4075, %v4334, %v4330
  %v4336 = vlaneseq
  %v4337 = vshrl.u32 %v4336, 7
  %v4338 = vsub.s32 %v4077, %v4337
  %v4339 = vrot.slane %v3950, %v4338
  %v4340 = vsel %vm4082, %v4339, %v4335
  %v4341 = vlaneseq
  %v4342 = vshrl.u32 %v4341, 7
  %v4343 = vsub.s32 %v4084, %v4342
  %v4344 = vrot.slane %v3953, %v4343
  %v4345 = vsel %vm4089, %v4344, %v4340
  %v4346 = vlaneseq
  %v4347 = vshrl.u32 %v4346, 7
  %v4348 = vsub.s32 %v4091, %v4347
  %v4349 = vrot.slane %v3956, %v4348
  %v4350 = vsel %vm4096, %v4349, %v4345
  %v4351 = vlaneseq
  %v4352 = vshrl.u32 %v4351, 7
  %v4353 = vsub.s32 %v4098, %v4352
  %v4354 = vrot.slane %v3959, %v4353
  %v4355 = vsel %vm4103, %v4354, %v4350
  %v4356 = vlaneseq
  %v4357 = vshrl.u32 %v4356, 7
  %v4358 = vsub.s32 %v4105, %v4357
  %v4359 = vrot.slane %v3962, %v4358
  %v4360 = vsel %vm4110, %v4359, %v4355
  %v4361 = vlaneseq
  %v4362 = vshrl.u32 %v4361, 7
  %v4363 = vsub.s32 %v4112, %v4362
  %v4364 = vrot.slane %v3965, %v4363
  %v4365 = vsel %vm4117, %v4364, %v4360
  %v4366 = vlaneseq
  %v4367 = vshrl.u32 %v4366, 7
  %v4368 = vsub.s32 %v4119, %v4367
  %v4369 = vrot.slane %v3968, %v4368
  %v4370 = vsel %vm4124, %v4369, %v4365
  %v4371 = vlaneseq
  %v4372 = vshrl.u32 %v4371, 7
  %v4373 = vsub.s32 %v4126, %v4372
  %v4374 = vrot.slane %v3971, %v4373
  %v4375 = vsel %vm4131, %v4374, %v4370
  %v4376 = vlaneseq
  %v4377 = vshrl.u32 %v4376, 7
  %v4378 = vsub.s32 %v4133, %v4377
  %v4379 = vrot.slane %v3974, %v4378
  %v4380 = vsel %vm4138, %v4379, %v4375
  %v4381 = vlaneseq
  %v4382 = vshrl.u32 %v4381, 7
  %v4383 = vsub.s32 %v4140, %v4382
  %v4384 = vrot.slane %v3977, %v4383
  %v4385 = vsel %vm4145, %v4384, %v4380
  %v4386 = vlaneseq
  %v4387 = vshrl.u32 %v4386, 7
  %v4388 = vsub.s32 %v4147, %v4387
  %v4389 = vrot.slane %v3980, %v4388
  %v4390 = vsel %vm4152, %v4389, %v4385
  %vm4391 = vcmask 1041409
  %v4392 = vsel %vm4391, %v4232, %v4153
  %vm4393 = vcmask 1042434
  %v4394 = vsel %vm4393, %v4311, %v4392
  %vm4395 = vcmask 1043459
  %v4396 = vsel %vm4395, %v4390, %v4394
  %4398 = vst [vmem:[%s2] sm:$0xf] %v4396
  // Predicated region
  $region10: #{_noise_forward_impl.1} parent=0 // pred_check
    _
  $region11: #{_noise_forward_impl.1} parent=0 // pred_check_branch
    %4400 = sbr.rel (0) target = $region13
  $region12: #{_noise_forward_impl.1} parent=0 // pred_region
    _
  $region13: #{_noise_forward_impl.1} parent=0 // pred_fallthru
    _
  // Predicated region
  $region14: #{_noise_forward_impl.1} parent=0 // pred_check
    _
  $region15: #{_noise_forward_impl.1} parent=0 // pred_check_branch
    %4402 = sbr.rel (0) target = $region17
  $region16: #{_noise_forward_impl.1} parent=0 // pred_region
    _
  $region17: #{_noise_forward_impl.1} parent=0 // pred_fallthru
    _

</llo_original>
